<compile_context>
chip_gen: v6e
topology: v6e:2x2x1
jax: 0.10.0
libtpu: 0.0.40
codegen_flags: <defaults>
</compile_context>

<pallas_src>
import functools

import jax
import jax.numpy as jnp
import numpy as np
from jax.experimental import pallas as pl
from jax.experimental.pallas import tpu as pltpu


# --------------------------------------------------------------------------
# Bilinear 2x upsample (align_corners=True) as a constant matmul matrix.
# For x laid out (C, H*W): upsample(x) == x @ M with M = kron(M_H, M_W).
# Every column of M sums to 1, so a 1x1 conv (per-pixel affine) commutes with
# the upsample exactly -> convs run at the low resolution.
# --------------------------------------------------------------------------
def _bilinear_matrix_1d(n_in):
    n_out = 2 * n_in
    m = np.zeros((n_in, n_out), np.float32)
    if n_in == 1:
        m[0, :] = 1.0
        return m
    src = np.arange(n_out, dtype=np.float64) * (n_in - 1) / (n_out - 1)
    i0 = np.clip(np.floor(src).astype(np.int64), 0, n_in - 2)
    w = (src - i0).astype(np.float32)
    cols = np.arange(n_out)
    m[i0, cols] += 1.0 - w
    m[i0 + 1, cols] += w
    return m


def _bilinear_matrix_2d(h, w):
    return jnp.asarray(np.kron(_bilinear_matrix_1d(h), _bilinear_matrix_1d(w)))


# --------------------------------------------------------------------------
# Parameter construction (random, deterministic).  Weights stored (Cout, Cin)
# for the (C, H*W) compute layout; BN scale folded into the conv weight.
# --------------------------------------------------------------------------
def _basic_conv(key, cin, cout):
    """Conv2d(1x1, bias=False) + BatchNorm2d (eval), BN folded into W / shift."""
    ks = jax.random.split(key, 5)
    w = jax.random.normal(ks[0], (cout, cin), jnp.float32) / np.sqrt(cin)
    gamma = 1.0 + 0.1 * jax.random.normal(ks[1], (cout,), jnp.float32)
    beta = 0.1 * jax.random.normal(ks[2], (cout,), jnp.float32)
    rmean = 0.1 * jax.random.normal(ks[3], (cout,), jnp.float32)
    rvar = jnp.abs(jax.random.normal(ks[4], (cout,), jnp.float32)) + 0.5
    scale = gamma / jnp.sqrt(rvar + 1e-5)
    shift = beta - rmean * scale
    return {"w": w * scale[:, None], "b": shift[:, None]}


def _plain_conv(key, cin, cout):
    ks = jax.random.split(key, 2)
    w = jax.random.normal(ks[0], (cout, cin), jnp.float32) / np.sqrt(cin)
    b = 0.1 * jax.random.normal(ks[1], (cout,), jnp.float32)
    return {"w": w, "b": b[:, None]}


def _attention(key, c, r=4):
    cr = max(c // r, 1)
    ks = jax.random.split(key, 4)
    return {
        "w1": jax.random.normal(ks[0], (cr, c), jnp.float32) / np.sqrt(c),
        "b1": 0.1 * jax.random.normal(ks[1], (cr, 1), jnp.float32),
        "w2": jax.random.normal(ks[2], (c, cr), jnp.float32) / np.sqrt(cr),
        "b2": 0.1 * jax.random.normal(ks[3], (c, 1), jnp.float32),
    }


def _split_cat(p, csplit):
    # conv(cat([a, b], channel)) == wa @ a + wb @ b + shift  (no concat needed)
    return {"wa": p["w"][:, :csplit], "wb": p["w"][:, csplit:], "b": p["b"]}


def init_dcr_params(key, channel):
    c2, c4 = 2 * channel, 4 * channel
    keys = iter(jax.random.split(key, 16))
    return {
        "cu": [_basic_conv(next(keys), c2, c2) for _ in range(4)],
        "cf": [
            _split_cat(_basic_conv(next(keys), c4, c2), c2),
            _split_cat(_basic_conv(next(keys), c4, c2), c2),
            _split_cat(_basic_conv(next(keys), c4, c4), c2),
        ],
        "co": [
            _basic_conv(next(keys), c4, c4),
            _plain_conv(next(keys), c4, channel),
            _plain_conv(next(keys), channel, 1),
        ],
        "att": [_attention(next(keys), c2) for _ in range(5)],
    }


# --------------------------------------------------------------------------
# Host-side packing: ~49 tiny parameter tensors -> 4 slabs (+3 upsample mats).
# All block row-offsets are multiples of 16 so in-kernel slices stay aligned.
# --------------------------------------------------------------------------
def _round_up(x, m):
    return ((x + m - 1) // m) * m


def _pack_dcr_params(params, channel):
    C, c2, c4 = channel, 2 * channel, 4 * channel
    cr = max(c2 // 4, 1)
    crp = _round_up(cr, 16)
    assert c2 % 16 == 0, "packed layout assumes (2*channel) % 16 == 0"

    # -- weight slab: every matmul weight with Cin == 2*channel ---------------
    wblocks, woffs = [], {}

    def addw(name, w):
        woffs[name] = (sum(b.shape[0] for b in wblocks), w.shape[0])
        wblocks.append(w.astype(jnp.float32))

    for i in range(4):
        addw(f"cu{i}", params["cu"][i]["w"])
    for i in range(3):
        addw(f"cf{i}a", params["cf"][i]["wa"])
        addw(f"cf{i}b", params["cf"][i]["wb"])
    for i in range(5):
        w1 = jnp.zeros((crp, c2), jnp.float32).at[:cr].set(params["att"][i]["w1"])
        addw(f"att{i}w1", w1)
    w16 = jnp.concatenate(wblocks, axis=0)

    # -- attention second FC slab (Cin zero-padded to crp) --------------------
    wa2 = jnp.concatenate(
        [jnp.zeros((c2, crp), jnp.float32).at[:, :cr].set(params["att"][i]["w2"])
         for i in range(5)], axis=0)

    # -- fold the chained output convs co2(co1(co0(.))) into one affine map ---
    hi = functools.partial(jnp.dot, precision="highest")
    w0, b0 = params["co"][0]["w"], params["co"][0]["b"]
    w1, b1 = params["co"][1]["w"], params["co"][1]["b"]
    w2, b2 = params["co"][2]["w"], params["co"][2]["b"]
    wo1 = hi(w1, w0)
    bo1 = hi(w1, b0) + b1
    wo2 = hi(w2, wo1)
    bo2 = hi(w2, bo1) + b2
    wout = jnp.concatenate([wo1, wo2], axis=0).astype(jnp.float32)   # (C+1, 4C)
    bout = jnp.concatenate([bo1, bo2], axis=0)                       # (C+1, 1)

    # -- bias slab -------------------------------------------------------------
    bblocks, boffs = [], {}

    def addb(name, b, pad_to):
        boffs[name] = sum(x.shape[0] for x in bblocks)
        bblocks.append(jnp.zeros((pad_to, 1), jnp.float32).at[:b.shape[0]].set(b))

    for i in range(4):
        addb(f"cu{i}", params["cu"][i]["b"], c2)
    for i in range(3):
        addb(f"cf{i}", params["cf"][i]["b"], params["cf"][i]["b"].shape[0])
    for i in range(5):
        addb(f"att{i}b1", params["att"][i]["b1"], crp)
    for i in range(5):
        addb(f"att{i}b2", params["att"][i]["b2"], c2)
    addb("out", bout, _round_up(C + 1, 8))
    bias = jnp.concatenate(bblocks, axis=0)

    return dict(w16=w16, wa2=wa2, wout=wout, bias=bias,
                woffs=woffs, boffs=boffs, crp=crp)


# --------------------------------------------------------------------------
# Fused DCR forward: one pallas_call, grid over batch only.
# --------------------------------------------------------------------------
def dcr_forward(params, x1, x2, x3, x4):
    """Inputs NCHW (like PyTorch); returns (out1, out2) in NCHW."""
    B, C, H1, W1 = x1.shape
    H2, W2 = x2.shape[2:]
    H3, W3 = x3.shape[2:]
    H4, W4 = x4.shape[2:]
    n1, n2, n3, n4 = H1 * W1, H2 * W2, H3 * W3, H4 * W4
    c2, c4 = 2 * C, 4 * C

    # NCHW -> (B, C, H*W): channels on sublanes, spatial on lanes. No transpose.
    xs = [t.reshape(B, t.shape[1], -1).astype(jnp.float32)
          for t in (x1, x2, x3, x4)]

    pk = _pack_dcr_params(params, C)
    woffs, boffs, crp = pk["woffs"], pk["boffs"], pk["crp"]

    # Upsample matrices in bf16 (bulk of MXU FLOPs / weight bytes); columns are
    # convex (<=4 non-zeros summing to 1) so bf16 rounding stays ~1 ulp.
    up4 = _bilinear_matrix_2d(H4, W4).astype(jnp.bfloat16)   # (n4, n3)
    up3 = _bilinear_matrix_2d(H3, W3).astype(jnp.bfloat16)   # (n3, n2)
    up2 = _bilinear_matrix_2d(H2, W2).astype(jnp.bfloat16)   # (n2, n1)

    def kernel(x1r, x2r, x3r, x4r, w16r, wa2r, woutr, br, up4r, up3r, up2r,
               out1r, out2r):
        def wslab(name):                       # static, tile-aligned row slice
            off, rows = woffs[name]
            return w16r[off:off + rows, :]

        def bslab(name, rows):
            off = boffs[name]
            return br[off:off + rows, :]

        def mmf(a, b):                         # small f32 dot (latency-bound)
            return jnp.dot(a, b, preferred_element_type=jnp.float32)

        def upsample(a, up):                   # dominant-FLOP matmul: bf16 MXU
            return jnp.dot(a.astype(jnp.bfloat16), up,
                           preferred_element_type=jnp.float32)

        def conv(name, t):                     # 1x1 conv (+ folded BN)
            return mmf(wslab(name), t) + bslab(name, c2)

        def fusion(i, ta, tb, rows):           # conv over channel-concat(ta, tb)
            return (mmf(wslab(f"cf{i}a"), ta) + mmf(wslab(f"cf{i}b"), tb)
                    + bslab(f"cf{i}", rows))

        def attn(i, t):                        # SE channel attention, in-kernel
            pooled = jnp.mean(t, axis=1, keepdims=True)               # (c2, 1)
            h = jnp.maximum(mmf(wslab(f"att{i}w1"), pooled)
                            + bslab(f"att{i}b1", crp), 0.0)
            z = mmf(wa2r[i * c2:(i + 1) * c2, :], h) + bslab(f"att{i}b2", c2)
            gate = pl.reciprocal(1.0 + jnp.exp(-z), approx=True)      # sigmoid
            return t * gate

        xx1, xx2, xx3, xx4 = x1r[0], x2r[0], x3r[0], x4r[0]
        x1d = jnp.concatenate([xx1, xx1], axis=0)         # torch.cat((x, x), 1)
        x2d = jnp.concatenate([xx2, xx2], axis=0)
        x3d = jnp.concatenate([xx3, xx3], axis=0)
        x4d = jnp.concatenate([xx4, xx4], axis=0)

        # conv_upsample[i](upsample(t)) == upsample(conv_upsample[i](t)):
        # the 1x1 conv is per-pixel affine and the bilinear columns sum to 1,
        # so every conv runs at low resolution and each pyramid level is
        # upsampled with a single stacked matmul.
        x4_1 = attn(0, x4d)                                           # (c2, n4)
        u_a = upsample(conv("cu0", x4_1), up4r[...])                  # (c2, n3)
        x3_1 = attn(1, u_a + x3d)
        x3_2 = attn(4, fusion(0, x3_1, u_a, c2))

        s3 = jnp.concatenate(
            [conv("cu1", x3_1), conv("cu2", x3d), conv("cu1", x3_2)], axis=0)
        u3 = upsample(s3, up3r[...])                                  # (3c2, n2)
        u_p1, u_p2, u_p3 = u3[:c2], u3[c2:2 * c2], u3[2 * c2:]

        x2_1 = attn(2, u_p1 * u_p2 + x2d)
        x2_2 = attn(4, fusion(1, x2_1, u_p3, c2))

        s2 = jnp.concatenate(
            [conv("cu3", x2_1), conv("cu3", x2d), conv("cu2", x2_2)], axis=0)
        u2 = upsample(s2, up2r[...])                                  # (3c2, n1)
        u_q1, u_q2, u_q3 = u2[:c2], u2[c2:2 * c2], u2[2 * c2:]

        x1_1 = attn(3, u_q1 * u_q2 + x1d)
        x1_2 = fusion(2, x1_1, u_q3, c4)                              # (c4, n1)

        # co2(co1(co0(.))) pre-folded into one (C+1, c4) affine map.
        outs = mmf(woutr[...], x1_2) + bslab("out", C + 1)            # (C+1, n1)
        out1r[0] = outs[:C]
        out2r[0] = outs[C:C + 1]

    weights = [pk["w16"], pk["wa2"], pk["wout"], pk["bias"], up4, up3, up2]

    def w_spec(arr):
        return pl.BlockSpec(arr.shape, lambda b: (0, 0))

    out1, out2 = pl.pallas_call(
        kernel,
        out_shape=(jax.ShapeDtypeStruct((B, C, n1), jnp.float32),
                   jax.ShapeDtypeStruct((B, 1, n1), jnp.float32)),
        grid=(B,),
        in_specs=([pl.BlockSpec((1, C, n), lambda b: (b, 0, 0))
                   for n in (n1, n2, n3, n4)]
                  + [w_spec(w) for w in weights]),
        out_specs=(pl.BlockSpec((1, C, n1), lambda b: (b, 0, 0)),
                   pl.BlockSpec((1, 1, n1), lambda b: (b, 0, 0))),
        compiler_params=pltpu.CompilerParams(
            dimension_semantics=("parallel",)),
    )(*xs, *weights)

    return out1.reshape(B, C, H1, W1), out2.reshape(B, 1, H1, W1)


# --------------------------------------------------------------------------
# Pure-JAX reference (follows the PyTorch graph literally) for a sanity check.
# --------------------------------------------------------------------------
def _upsample2x_ref(x):
    B, C, H, W = x.shape

    def coords(n_in):
        n_out = 2 * n_in
        if n_in == 1:
            z = jnp.zeros((n_out,), jnp.int32)
            return z, z, jnp.zeros((n_out,), jnp.float32)
        src = jnp.arange(n_out, dtype=jnp.float32) * (n_in - 1) / (n_out - 1)
        i0 = jnp.clip(jnp.floor(src).astype(jnp.int32), 0, n_in - 2)
        return i0, i0 + 1, src - i0.astype(jnp.float32)

    r0, r1, rw = coords(H)
    c0, c1, cw = coords(W)
    xr = (x[:, :, r0, :] * (1.0 - rw)[None, None, :, None]
          + x[:, :, r1, :] * rw[None, None, :, None])
    return (xr[:, :, :, c0] * (1.0 - cw)[None, None, None, :]
            + xr[:, :, :, c1] * cw[None, None, None, :])


def _conv_ref(p, x):
    y = jnp.einsum("oi,bihw->bohw", p["w"], x, precision="highest")
    return y + p["b"][:, 0][None, :, None, None]


def _fusion_conv_ref(p, x):
    w = jnp.concatenate([p["wa"], p["wb"]], axis=1)
    y = jnp.einsum("oi,bihw->bohw", w, x, precision="highest")
    return y + p["b"][:, 0][None, :, None, None]


def _attn_ref(p, x):
    pooled = jnp.mean(x, axis=(2, 3))
    h = jnp.maximum(jnp.dot(pooled, p["w1"].T, precision="highest")
                    + p["b1"][:, 0], 0.0)
    z = jnp.dot(h, p["w2"].T, precision="highest") + p["b2"][:, 0]
    g = jax.nn.sigmoid(z)
    return x * g[:, :, None, None]


def dcr_reference(params, x1, x2, x3, x4):
    cu, cf, co, att = params["cu"], params["cf"], params["co"], params["att"]
    up = _upsample2x_ref
    cat = lambda a, b: jnp.concatenate([a, b], axis=1)
    x4_1 = _attn_ref(att[0], cat(x4, x4))
    x3_1 = _attn_ref(att[1], _conv_ref(cu[0], up(x4_1)) + cat(x3, x3))
    x2_1 = _attn_ref(att[2], _conv_ref(cu[1], up(x3_1))
                     * _conv_ref(cu[2], up(cat(x3, x3))) + cat(x2, x2))
    x1_1 = _attn_ref(att[3], _conv_ref(cu[3], up(x2_1))
                     * _conv_ref(cu[3], up(cat(x2, x2))) + cat(x1, x1))
    x3_2 = _attn_ref(att[4], _fusion_conv_ref(cf[0], cat(x3_1, _conv_ref(cu[0], up(x4_1)))))
    x2_2 = _attn_ref(att[4], _fusion_conv_ref(cf[1], cat(x2_1, _conv_ref(cu[1], up(x3_2)))))
    x1_2 = _fusion_conv_ref(cf[2], cat(x1_1, _conv_ref(cu[2], up(x2_2))))
    out = _conv_ref(co[0], x1_2)
    out1 = _conv_ref(co[1], out)
    out2 = _conv_ref(co[2], out1)
    return out1, out2


# --------------------------------------------------------------------------
# main
# --------------------------------------------------------------------------
if __name__ == "__main__":
    channel = 8
    B = 2
    key = jax.random.PRNGKey(0)
    kp, k1, k2, k3, k4 = jax.random.split(key, 5)

    params = init_dcr_params(kp, channel)

    # Pyramid inputs (NCHW), each with `channel` channels; x4 is the coarsest.
    x1 = jax.random.normal(k1, (B, channel, 32, 32), jnp.float32)
    x2 = jax.random.normal(k2, (B, channel, 16, 16), jnp.float32)
    x3 = jax.random.normal(k3, (B, channel, 8, 8), jnp.float32)
    x4 = jax.random.normal(k4, (B, channel, 4, 4), jnp.float32)

    out1, out2 = dcr_forward(params, x1, x2, x3, x4)
    jax.block_until_ready(out1)
    jax.block_until_ready(out2)

    assert out1.shape == (B, channel, 32, 32), out1.shape
    assert out2.shape == (B, 1, 32, 32), out2.shape

    # Sanity check against a pure-JAX implementation of the original graph.
    # Tolerance is 1e-2: the kernel runs the upsample matmuls with bf16 MXU
    # operands (f32 accumulation) per the perf review; the reference is all-f32.
    ref1, ref2 = dcr_reference(params, x1, x2, x3, x4)
    np.testing.assert_allclose(np.asarray(out1), np.asarray(ref1),
                               rtol=1e-2, atol=1e-2)
    np.testing.assert_allclose(np.asarray(out2), np.asarray(ref2),
                               rtol=1e-2, atol=1e-2)

    print("KERNEL_OK")
</pallas_src>

<mosaic_0001>
module attributes {stable_mosaic.version = 11 : i64} {
  func.func @kernel(%arg0: i32, %arg1: memref<1x8x1024xf32, #tpu.memory_space<vmem>>, %arg2: memref<1x8x256xf32, #tpu.memory_space<vmem>>, %arg3: memref<1x8x64xf32, #tpu.memory_space<vmem>>, %arg4: memref<1x8x16xf32, #tpu.memory_space<vmem>>, %arg5: memref<272x16xf32, #tpu.memory_space<vmem>>, %arg6: memref<80x16xf32, #tpu.memory_space<vmem>>, %arg7: memref<9x32xf32, #tpu.memory_space<vmem>>, %arg8: memref<304x1xf32, #tpu.memory_space<vmem>>, %arg9: memref<16x64xbf16, #tpu.memory_space<vmem>>, %arg10: memref<64x256xbf16, #tpu.memory_space<vmem>>, %arg11: memref<256x1024xbf16, #tpu.memory_space<vmem>>, %arg12: memref<1x8x1024xf32, #tpu.memory_space<vmem>>, %arg13: memref<1x1x1024xf32, #tpu.memory_space<vmem>>) attributes {dimension_semantics = [#tpu.dimension_semantics<parallel>], iteration_bounds = array<i64: 2>, scalar_prefetch = 0 : i64, scratch_operands = 0 : i64, tpu.core_type = #tpu.core_type<tc>, window_params = [{transform_indices = @transform_0, window_bounds = array<i64: 1, 8, 1024>}, {transform_indices = @transform_1, window_bounds = array<i64: 1, 8, 256>}, {transform_indices = @transform_2, window_bounds = array<i64: 1, 8, 64>}, {transform_indices = @transform_3, window_bounds = array<i64: 1, 8, 16>}, {pipeline_mode = #tpu.pipeline_mode<synchronous>, transform_indices = @transform_4, window_bounds = array<i64: 272, 16>}, {pipeline_mode = #tpu.pipeline_mode<synchronous>, transform_indices = @transform_5, window_bounds = array<i64: 80, 16>}, {pipeline_mode = #tpu.pipeline_mode<synchronous>, transform_indices = @transform_6, window_bounds = array<i64: 9, 32>}, {pipeline_mode = #tpu.pipeline_mode<synchronous>, transform_indices = @transform_7, window_bounds = array<i64: 304, 1>}, {pipeline_mode = #tpu.pipeline_mode<synchronous>, transform_indices = @transform_8, window_bounds = array<i64: 16, 64>}, {pipeline_mode = #tpu.pipeline_mode<synchronous>, transform_indices = @transform_9, window_bounds = array<i64: 64, 256>}, {pipeline_mode = #tpu.pipeline_mode<synchronous>, transform_indices = @transform_10, window_bounds = array<i64: 256, 1024>}, {transform_indices = @transform_11, window_bounds = array<i64: 1, 8, 1024>}, {transform_indices = @transform_12, window_bounds = array<i64: 1, 1, 1024>}]} {
    %c0 = arith.constant 0 : index
    %c0_0 = arith.constant 0 : index
    %c0_1 = arith.constant 0 : index
    %0 = vector.load %arg1[%c0, %c0_0, %c0_1] : memref<1x8x1024xf32, #tpu.memory_space<vmem>>, vector<1x8x1024xf32>
    %1 = vector.shape_cast %0 : vector<1x8x1024xf32> to vector<8x1024xf32>
    %c0_2 = arith.constant 0 : index
    %c0_3 = arith.constant 0 : index
    %c0_4 = arith.constant 0 : index
    %2 = vector.load %arg2[%c0_2, %c0_3, %c0_4] : memref<1x8x256xf32, #tpu.memory_space<vmem>>, vector<1x8x256xf32>
    %3 = vector.shape_cast %2 : vector<1x8x256xf32> to vector<8x256xf32>
    %c0_5 = arith.constant 0 : index
    %c0_6 = arith.constant 0 : index
    %c0_7 = arith.constant 0 : index
    %4 = vector.load %arg3[%c0_5, %c0_6, %c0_7] : memref<1x8x64xf32, #tpu.memory_space<vmem>>, vector<1x8x64xf32>
    %5 = vector.shape_cast %4 : vector<1x8x64xf32> to vector<8x64xf32>
    %c0_8 = arith.constant 0 : index
    %c0_9 = arith.constant 0 : index
    %c0_10 = arith.constant 0 : index
    %6 = vector.load %arg4[%c0_8, %c0_9, %c0_10] : memref<1x8x16xf32, #tpu.memory_space<vmem>>, vector<1x8x16xf32>
    %7 = vector.shape_cast %6 : vector<1x8x16xf32> to vector<8x16xf32>
    %8 = tpu.concatenate %1, %1 in 0 : vector<8x1024xf32>, vector<8x1024xf32> -> vector<16x1024xf32>
    %9 = tpu.concatenate %3, %3 in 0 : vector<8x256xf32>, vector<8x256xf32> -> vector<16x256xf32>
    %10 = tpu.concatenate %5, %5 in 0 : vector<8x64xf32>, vector<8x64xf32> -> vector<16x64xf32>
    %11 = tpu.concatenate %7, %7 in 0 : vector<8x16xf32>, vector<8x16xf32> -> vector<16x16xf32>
    %cst = arith.constant dense<0.000000e+00> : vector<16xf32>
    %12 = vector.multi_reduction <add>, %11, %cst [1] : vector<16x16xf32> to vector<16xf32>
    %13 = vector.shape_cast %12 : vector<16xf32> to vector<16x1xf32>
    %cst_11 = arith.constant 1.600000e+01 : f32
    %14 = vector.broadcast %cst_11 : f32 to vector<16x1xf32>
    %15 = arith.divf %13, %14 : vector<16x1xf32>
    %c192 = arith.constant 192 : index
    %c0_12 = arith.constant 0 : index
    %16 = vector.load %arg5[%c192, %c0_12] : memref<272x16xf32, #tpu.memory_space<vmem>>, vector<16x16xf32>
    %cst_13 = arith.constant dense<0.000000e+00> : vector<16x1xf32>
    %17 = tpu.matmul %16, %15, %cst_13 {dimension_numbers = #tpu.dot_dimension_numbers<[1], [0], [0], [1], [0, 0, 1, 1], [], []>} : vector<16x16xf32>, vector<16x1xf32>, vector<16x1xf32> -> vector<16x1xf32>
    %c128 = arith.constant 128 : index
    %c0_14 = arith.constant 0 : index
    %18 = vector.load %arg8[%c128, %c0_14] : memref<304x1xf32, #tpu.memory_space<vmem>>, vector<16x1xf32>
    %19 = arith.addf %17, %18 : vector<16x1xf32>
    %cst_15 = arith.constant 0.000000e+00 : f32
    %20 = vector.broadcast %cst_15 : f32 to vector<16x1xf32>
    %21 = arith.maximumf %19, %20 : vector<16x1xf32>
    %c0_16 = arith.constant 0 : index
    %c0_17 = arith.constant 0 : index
    %22 = vector.load %arg6[%c0_16, %c0_17] : memref<80x16xf32, #tpu.memory_space<vmem>>, vector<16x16xf32>
    %cst_18 = arith.constant dense<0.000000e+00> : vector<16x1xf32>
    %23 = tpu.matmul %22, %21, %cst_18 {dimension_numbers = #tpu.dot_dimension_numbers<[1], [0], [0], [1], [0, 0, 1, 1], [], []>} : vector<16x16xf32>, vector<16x1xf32>, vector<16x1xf32> -> vector<16x1xf32>
    %c208 = arith.constant 208 : index
    %c0_19 = arith.constant 0 : index
    %24 = vector.load %arg8[%c208, %c0_19] : memref<304x1xf32, #tpu.memory_space<vmem>>, vector<16x1xf32>
    %25 = arith.addf %23, %24 : vector<16x1xf32>
    %cst_20 = arith.constant 0.000000e+00 : f32
    %26 = vector.broadcast %cst_20 : f32 to vector<16x1xf32>
    %27 = arith.subf %26, %25 : vector<16x1xf32>
    %28 = math.exp %27 : vector<16x1xf32>
    %cst_21 = arith.constant 1.000000e+00 : f32
    %29 = vector.broadcast %cst_21 : f32 to vector<16x1xf32>
    %30 = arith.addf %29, %28 : vector<16x1xf32>
    %31 = tpu.reciprocal %30 {approx = true} : vector<16x1xf32> -> vector<16x1xf32>
    %32 = vector.broadcast %31 : vector<16x1xf32> to vector<16x16xf32>
    %33 = arith.mulf %11, %32 : vector<16x16xf32>
    %c0_22 = arith.constant 0 : index
    %c0_23 = arith.constant 0 : index
    %34 = vector.load %arg5[%c0_22, %c0_23] : memref<272x16xf32, #tpu.memory_space<vmem>>, vector<16x16xf32>
    %cst_24 = arith.constant dense<0.000000e+00> : vector<16x16xf32>
    %35 = tpu.matmul %34, %33, %cst_24 {dimension_numbers = #tpu.dot_dimension_numbers<[1], [0], [0], [1], [0, 0, 1, 1], [], []>} : vector<16x16xf32>, vector<16x16xf32>, vector<16x16xf32> -> vector<16x16xf32>
    %c0_25 = arith.constant 0 : index
    %c0_26 = arith.constant 0 : index
    %36 = vector.load %arg8[%c0_25, %c0_26] : memref<304x1xf32, #tpu.memory_space<vmem>>, vector<16x1xf32>
    %37 = vector.broadcast %36 : vector<16x1xf32> to vector<16x16xf32>
    %38 = arith.addf %35, %37 : vector<16x16xf32>
    %c0_27 = arith.constant 0 : index
    %c0_28 = arith.constant 0 : index
    %39 = vector.load %arg9[%c0_27, %c0_28] : memref<16x64xbf16, #tpu.memory_space<vmem>>, vector<16x64xbf16>
    %40 = arith.truncf %38 : vector<16x16xf32> to vector<16x16xbf16>
    %cst_29 = arith.constant dense<0.000000e+00> : vector<16x64xf32>
    %41 = tpu.matmul %40, %39, %cst_29 {dimension_numbers = #tpu.dot_dimension_numbers<[1], [0], [0], [1], [0, 0, 1, 1], [], []>} : vector<16x16xbf16>, vector<16x64xbf16>, vector<16x64xf32> -> vector<16x64xf32>
    %42 = arith.addf %41, %10 : vector<16x64xf32>
    %cst_30 = arith.constant dense<0.000000e+00> : vector<16xf32>
    %43 = vector.multi_reduction <add>, %42, %cst_30 [1] : vector<16x64xf32> to vector<16xf32>
    %44 = vector.shape_cast %43 : vector<16xf32> to vector<16x1xf32>
    %cst_31 = arith.constant 6.400000e+01 : f32
    %45 = vector.broadcast %cst_31 : f32 to vector<16x1xf32>
    %46 = arith.divf %44, %45 : vector<16x1xf32>
    %c208_32 = arith.constant 208 : index
    %c0_33 = arith.constant 0 : index
    %47 = vector.load %arg5[%c208_32, %c0_33] : memref<272x16xf32, #tpu.memory_space<vmem>>, vector<16x16xf32>
    %cst_34 = arith.constant dense<0.000000e+00> : vector<16x1xf32>
    %48 = tpu.matmul %47, %46, %cst_34 {dimension_numbers = #tpu.dot_dimension_numbers<[1], [0], [0], [1], [0, 0, 1, 1], [], []>} : vector<16x16xf32>, vector<16x1xf32>, vector<16x1xf32> -> vector<16x1xf32>
    %c144 = arith.constant 144 : index
    %c0_35 = arith.constant 0 : index
    %49 = vector.load %arg8[%c144, %c0_35] : memref<304x1xf32, #tpu.memory_space<vmem>>, vector<16x1xf32>
    %50 = arith.addf %48, %49 : vector<16x1xf32>
    %cst_36 = arith.constant 0.000000e+00 : f32
    %51 = vector.broadcast %cst_36 : f32 to vector<16x1xf32>
    %52 = arith.maximumf %50, %51 : vector<16x1xf32>
    %c16 = arith.constant 16 : index
    %c0_37 = arith.constant 0 : index
    %53 = vector.load %arg6[%c16, %c0_37] : memref<80x16xf32, #tpu.memory_space<vmem>>, vector<16x16xf32>
    %cst_38 = arith.constant dense<0.000000e+00> : vector<16x1xf32>
    %54 = tpu.matmul %53, %52, %cst_38 {dimension_numbers = #tpu.dot_dimension_numbers<[1], [0], [0], [1], [0, 0, 1, 1], [], []>} : vector<16x16xf32>, vector<16x1xf32>, vector<16x1xf32> -> vector<16x1xf32>
    %c224 = arith.constant 224 : index
    %c0_39 = arith.constant 0 : index
    %55 = vector.load %arg8[%c224, %c0_39] : memref<304x1xf32, #tpu.memory_space<vmem>>, vector<16x1xf32>
    %56 = arith.addf %54, %55 : vector<16x1xf32>
    %cst_40 = arith.constant 0.000000e+00 : f32
    %57 = vector.broadcast %cst_40 : f32 to vector<16x1xf32>
    %58 = arith.subf %57, %56 : vector<16x1xf32>
    %59 = math.exp %58 : vector<16x1xf32>
    %cst_41 = arith.constant 1.000000e+00 : f32
    %60 = vector.broadcast %cst_41 : f32 to vector<16x1xf32>
    %61 = arith.addf %60, %59 : vector<16x1xf32>
    %62 = tpu.reciprocal %61 {approx = true} : vector<16x1xf32> -> vector<16x1xf32>
    %63 = vector.broadcast %62 : vector<16x1xf32> to vector<16x64xf32>
    %64 = arith.mulf %42, %63 : vector<16x64xf32>
    %c64 = arith.constant 64 : index
    %c0_42 = arith.constant 0 : index
    %65 = vector.load %arg5[%c64, %c0_42] : memref<272x16xf32, #tpu.memory_space<vmem>>, vector<16x16xf32>
    %cst_43 = arith.constant dense<0.000000e+00> : vector<16x64xf32>
    %66 = tpu.matmul %65, %64, %cst_43 {dimension_numbers = #tpu.dot_dimension_numbers<[1], [0], [0], [1], [0, 0, 1, 1], [], []>} : vector<16x16xf32>, vector<16x64xf32>, vector<16x64xf32> -> vector<16x64xf32>
    %c80 = arith.constant 80 : index
    %c0_44 = arith.constant 0 : index
    %67 = vector.load %arg5[%c80, %c0_44] : memref<272x16xf32, #tpu.memory_space<vmem>>, vector<16x16xf32>
    %cst_45 = arith.constant dense<0.000000e+00> : vector<16x64xf32>
    %68 = tpu.matmul %67, %41, %cst_45 {dimension_numbers = #tpu.dot_dimension_numbers<[1], [0], [0], [1], [0, 0, 1, 1], [], []>} : vector<16x16xf32>, vector<16x64xf32>, vector<16x64xf32> -> vector<16x64xf32>
    %69 = arith.addf %66, %68 : vector<16x64xf32>
    %c64_46 = arith.constant 64 : index
    %c0_47 = arith.constant 0 : index
    %70 = vector.load %arg8[%c64_46, %c0_47] : memref<304x1xf32, #tpu.memory_space<vmem>>, vector<16x1xf32>
    %71 = vector.broadcast %70 : vector<16x1xf32> to vector<16x64xf32>
    %72 = arith.addf %69, %71 : vector<16x64xf32>
    %cst_48 = arith.constant dense<0.000000e+00> : vector<16xf32>
    %73 = vector.multi_reduction <add>, %72, %cst_48 [1] : vector<16x64xf32> to vector<16xf32>
    %74 = vector.shape_cast %73 : vector<16xf32> to vector<16x1xf32>
    %cst_49 = arith.constant 6.400000e+01 : f32
    %75 = vector.broadcast %cst_49 : f32 to vector<16x1xf32>
    %76 = arith.divf %74, %75 : vector<16x1xf32>
    %c256 = arith.constant 256 : index
    %c0_50 = arith.constant 0 : index
    %77 = vector.load %arg5[%c256, %c0_50] : memref<272x16xf32, #tpu.memory_space<vmem>>, vector<16x16xf32>
    %cst_51 = arith.constant dense<0.000000e+00> : vector<16x1xf32>
    %78 = tpu.matmul %77, %76, %cst_51 {dimension_numbers = #tpu.dot_dimension_numbers<[1], [0], [0], [1], [0, 0, 1, 1], [], []>} : vector<16x16xf32>, vector<16x1xf32>, vector<16x1xf32> -> vector<16x1xf32>
    %c192_52 = arith.constant 192 : index
    %c0_53 = arith.constant 0 : index
    %79 = vector.load %arg8[%c192_52, %c0_53] : memref<304x1xf32, #tpu.memory_space<vmem>>, vector<16x1xf32>
    %80 = arith.addf %78, %79 : vector<16x1xf32>
    %cst_54 = arith.constant 0.000000e+00 : f32
    %81 = vector.broadcast %cst_54 : f32 to vector<16x1xf32>
    %82 = arith.maximumf %80, %81 : vector<16x1xf32>
    %c64_55 = arith.constant 64 : index
    %c0_56 = arith.constant 0 : index
    %83 = vector.load %arg6[%c64_55, %c0_56] : memref<80x16xf32, #tpu.memory_space<vmem>>, vector<16x16xf32>
    %cst_57 = arith.constant dense<0.000000e+00> : vector<16x1xf32>
    %84 = tpu.matmul %83, %82, %cst_57 {dimension_numbers = #tpu.dot_dimension_numbers<[1], [0], [0], [1], [0, 0, 1, 1], [], []>} : vector<16x16xf32>, vector<16x1xf32>, vector<16x1xf32> -> vector<16x1xf32>
    %c272 = arith.constant 272 : index
    %c0_58 = arith.constant 0 : index
    %85 = vector.load %arg8[%c272, %c0_58] : memref<304x1xf32, #tpu.memory_space<vmem>>, vector<16x1xf32>
    %86 = arith.addf %84, %85 : vector<16x1xf32>
    %cst_59 = arith.constant 0.000000e+00 : f32
    %87 = vector.broadcast %cst_59 : f32 to vector<16x1xf32>
    %88 = arith.subf %87, %86 : vector<16x1xf32>
    %89 = math.exp %88 : vector<16x1xf32>
    %cst_60 = arith.constant 1.000000e+00 : f32
    %90 = vector.broadcast %cst_60 : f32 to vector<16x1xf32>
    %91 = arith.addf %90, %89 : vector<16x1xf32>
    %92 = tpu.reciprocal %91 {approx = true} : vector<16x1xf32> -> vector<16x1xf32>
    %93 = vector.broadcast %92 : vector<16x1xf32> to vector<16x64xf32>
    %94 = arith.mulf %72, %93 : vector<16x64xf32>
    %c16_61 = arith.constant 16 : index
    %c0_62 = arith.constant 0 : index
    %95 = vector.load %arg5[%c16_61, %c0_62] : memref<272x16xf32, #tpu.memory_space<vmem>>, vector<16x16xf32>
    %cst_63 = arith.constant dense<0.000000e+00> : vector<16x64xf32>
    %96 = tpu.matmul %95, %64, %cst_63 {dimension_numbers = #tpu.dot_dimension_numbers<[1], [0], [0], [1], [0, 0, 1, 1], [], []>} : vector<16x16xf32>, vector<16x64xf32>, vector<16x64xf32> -> vector<16x64xf32>
    %c16_64 = arith.constant 16 : index
    %c0_65 = arith.constant 0 : index
    %97 = vector.load %arg8[%c16_64, %c0_65] : memref<304x1xf32, #tpu.memory_space<vmem>>, vector<16x1xf32>
    %98 = vector.broadcast %97 : vector<16x1xf32> to vector<16x64xf32>
    %99 = arith.addf %96, %98 : vector<16x64xf32>
    %c32 = arith.constant 32 : index
    %c0_66 = arith.constant 0 : index
    %100 = vector.load %arg5[%c32, %c0_66] : memref<272x16xf32, #tpu.memory_space<vmem>>, vector<16x16xf32>
    %cst_67 = arith.constant dense<0.000000e+00> : vector<16x64xf32>
    %101 = tpu.matmul %100, %10, %cst_67 {dimension_numbers = #tpu.dot_dimension_numbers<[1], [0], [0], [1], [0, 0, 1, 1], [], []>} : vector<16x16xf32>, vector<16x64xf32>, vector<16x64xf32> -> vector<16x64xf32>
    %c32_68 = arith.constant 32 : index
    %c0_69 = arith.constant 0 : index
    %102 = vector.load %arg8[%c32_68, %c0_69] : memref<304x1xf32, #tpu.memory_space<vmem>>, vector<16x1xf32>
    %103 = vector.broadcast %102 : vector<16x1xf32> to vector<16x64xf32>
    %104 = arith.addf %101, %103 : vector<16x64xf32>
    %c16_70 = arith.constant 16 : index
    %c0_71 = arith.constant 0 : index
    %105 = vector.load %arg5[%c16_70, %c0_71] : memref<272x16xf32, #tpu.memory_space<vmem>>, vector<16x16xf32>
    %cst_72 = arith.constant dense<0.000000e+00> : vector<16x64xf32>
    %106 = tpu.matmul %105, %94, %cst_72 {dimension_numbers = #tpu.dot_dimension_numbers<[1], [0], [0], [1], [0, 0, 1, 1], [], []>} : vector<16x16xf32>, vector<16x64xf32>, vector<16x64xf32> -> vector<16x64xf32>
    %c16_73 = arith.constant 16 : index
    %c0_74 = arith.constant 0 : index
    %107 = vector.load %arg8[%c16_73, %c0_74] : memref<304x1xf32, #tpu.memory_space<vmem>>, vector<16x1xf32>
    %108 = vector.broadcast %107 : vector<16x1xf32> to vector<16x64xf32>
    %109 = arith.addf %106, %108 : vector<16x64xf32>
    %110 = tpu.concatenate %99, %104, %109 in 0 : vector<16x64xf32>, vector<16x64xf32>, vector<16x64xf32> -> vector<48x64xf32>
    %c0_75 = arith.constant 0 : index
    %c0_76 = arith.constant 0 : index
    %111 = vector.load %arg10[%c0_75, %c0_76] : memref<64x256xbf16, #tpu.memory_space<vmem>>, vector<64x256xbf16>
    %112 = arith.truncf %110 : vector<48x64xf32> to vector<48x64xbf16>
    %cst_77 = arith.constant dense<0.000000e+00> : vector<48x256xf32>
    %113 = tpu.matmul %112, %111, %cst_77 {dimension_numbers = #tpu.dot_dimension_numbers<[1], [0], [0], [1], [0, 0, 1, 1], [], []>} : vector<48x64xbf16>, vector<64x256xbf16>, vector<48x256xf32> -> vector<48x256xf32>
    %114 = vector.extract_strided_slice %113 {offsets = [0, 0], sizes = [16, 256], strides = [1, 1]} : vector<48x256xf32> to vector<16x256xf32>
    %115 = vector.extract_strided_slice %113 {offsets = [16, 0], sizes = [16, 256], strides = [1, 1]} : vector<48x256xf32> to vector<16x256xf32>
    %116 = vector.extract_strided_slice %113 {offsets = [32, 0], sizes = [16, 256], strides = [1, 1]} : vector<48x256xf32> to vector<16x256xf32>
    %117 = arith.mulf %114, %115 : vector<16x256xf32>
    %118 = arith.addf %117, %9 : vector<16x256xf32>
    %cst_78 = arith.constant dense<0.000000e+00> : vector<16xf32>
    %119 = vector.multi_reduction <add>, %118, %cst_78 [1] : vector<16x256xf32> to vector<16xf32>
    %120 = vector.shape_cast %119 : vector<16xf32> to vector<16x1xf32>
    %cst_79 = arith.constant 2.560000e+02 : f32
    %121 = vector.broadcast %cst_79 : f32 to vector<16x1xf32>
    %122 = arith.divf %120, %121 : vector<16x1xf32>
    %c224_80 = arith.constant 224 : index
    %c0_81 = arith.constant 0 : index
    %123 = vector.load %arg5[%c224_80, %c0_81] : memref<272x16xf32, #tpu.memory_space<vmem>>, vector<16x16xf32>
    %cst_82 = arith.constant dense<0.000000e+00> : vector<16x1xf32>
    %124 = tpu.matmul %123, %122, %cst_82 {dimension_numbers = #tpu.dot_dimension_numbers<[1], [0], [0], [1], [0, 0, 1, 1], [], []>} : vector<16x16xf32>, vector<16x1xf32>, vector<16x1xf32> -> vector<16x1xf32>
    %c160 = arith.constant 160 : index
    %c0_83 = arith.constant 0 : index
    %125 = vector.load %arg8[%c160, %c0_83] : memref<304x1xf32, #tpu.memory_space<vmem>>, vector<16x1xf32>
    %126 = arith.addf %124, %125 : vector<16x1xf32>
    %cst_84 = arith.constant 0.000000e+00 : f32
    %127 = vector.broadcast %cst_84 : f32 to vector<16x1xf32>
    %128 = arith.maximumf %126, %127 : vector<16x1xf32>
    %c32_85 = arith.constant 32 : index
    %c0_86 = arith.constant 0 : index
    %129 = vector.load %arg6[%c32_85, %c0_86] : memref<80x16xf32, #tpu.memory_space<vmem>>, vector<16x16xf32>
    %cst_87 = arith.constant dense<0.000000e+00> : vector<16x1xf32>
    %130 = tpu.matmul %129, %128, %cst_87 {dimension_numbers = #tpu.dot_dimension_numbers<[1], [0], [0], [1], [0, 0, 1, 1], [], []>} : vector<16x16xf32>, vector<16x1xf32>, vector<16x1xf32> -> vector<16x1xf32>
    %c240 = arith.constant 240 : index
    %c0_88 = arith.constant 0 : index
    %131 = vector.load %arg8[%c240, %c0_88] : memref<304x1xf32, #tpu.memory_space<vmem>>, vector<16x1xf32>
    %132 = arith.addf %130, %131 : vector<16x1xf32>
    %cst_89 = arith.constant 0.000000e+00 : f32
    %133 = vector.broadcast %cst_89 : f32 to vector<16x1xf32>
    %134 = arith.subf %133, %132 : vector<16x1xf32>
    %135 = math.exp %134 : vector<16x1xf32>
    %cst_90 = arith.constant 1.000000e+00 : f32
    %136 = vector.broadcast %cst_90 : f32 to vector<16x1xf32>
    %137 = arith.addf %136, %135 : vector<16x1xf32>
    %138 = tpu.reciprocal %137 {approx = true} : vector<16x1xf32> -> vector<16x1xf32>
    %139 = vector.broadcast %138 : vector<16x1xf32> to vector<16x256xf32>
    %140 = arith.mulf %118, %139 : vector<16x256xf32>
    %c96 = arith.constant 96 : index
    %c0_91 = arith.constant 0 : index
    %141 = vector.load %arg5[%c96, %c0_91] : memref<272x16xf32, #tpu.memory_space<vmem>>, vector<16x16xf32>
    %cst_92 = arith.constant dense<0.000000e+00> : vector<16x256xf32>
    %142 = tpu.matmul %141, %140, %cst_92 {dimension_numbers = #tpu.dot_dimension_numbers<[1], [0], [0], [1], [0, 0, 1, 1], [], []>} : vector<16x16xf32>, vector<16x256xf32>, vector<16x256xf32> -> vector<16x256xf32>
    %c112 = arith.constant 112 : index
    %c0_93 = arith.constant 0 : index
    %143 = vector.load %arg5[%c112, %c0_93] : memref<272x16xf32, #tpu.memory_space<vmem>>, vector<16x16xf32>
    %cst_94 = arith.constant dense<0.000000e+00> : vector<16x256xf32>
    %144 = tpu.matmul %143, %116, %cst_94 {dimension_numbers = #tpu.dot_dimension_numbers<[1], [0], [0], [1], [0, 0, 1, 1], [], []>} : vector<16x16xf32>, vector<16x256xf32>, vector<16x256xf32> -> vector<16x256xf32>
    %145 = arith.addf %142, %144 : vector<16x256xf32>
    %c80_95 = arith.constant 80 : index
    %c0_96 = arith.constant 0 : index
    %146 = vector.load %arg8[%c80_95, %c0_96] : memref<304x1xf32, #tpu.memory_space<vmem>>, vector<16x1xf32>
    %147 = vector.broadcast %146 : vector<16x1xf32> to vector<16x256xf32>
    %148 = arith.addf %145, %147 : vector<16x256xf32>
    %cst_97 = arith.constant dense<0.000000e+00> : vector<16xf32>
    %149 = vector.multi_reduction <add>, %148, %cst_97 [1] : vector<16x256xf32> to vector<16xf32>
    %150 = vector.shape_cast %149 : vector<16xf32> to vector<16x1xf32>
    %cst_98 = arith.constant 2.560000e+02 : f32
    %151 = vector.broadcast %cst_98 : f32 to vector<16x1xf32>
    %152 = arith.divf %150, %151 : vector<16x1xf32>
    %c256_99 = arith.constant 256 : index
    %c0_100 = arith.constant 0 : index
    %153 = vector.load %arg5[%c256_99, %c0_100] : memref<272x16xf32, #tpu.memory_space<vmem>>, vector<16x16xf32>
    %cst_101 = arith.constant dense<0.000000e+00> : vector<16x1xf32>
    %154 = tpu.matmul %153, %152, %cst_101 {dimension_numbers = #tpu.dot_dimension_numbers<[1], [0], [0], [1], [0, 0, 1, 1], [], []>} : vector<16x16xf32>, vector<16x1xf32>, vector<16x1xf32> -> vector<16x1xf32>
    %c192_102 = arith.constant 192 : index
    %c0_103 = arith.constant 0 : index
    %155 = vector.load %arg8[%c192_102, %c0_103] : memref<304x1xf32, #tpu.memory_space<vmem>>, vector<16x1xf32>
    %156 = arith.addf %154, %155 : vector<16x1xf32>
    %cst_104 = arith.constant 0.000000e+00 : f32
    %157 = vector.broadcast %cst_104 : f32 to vector<16x1xf32>
    %158 = arith.maximumf %156, %157 : vector<16x1xf32>
    %c64_105 = arith.constant 64 : index
    %c0_106 = arith.constant 0 : index
    %159 = vector.load %arg6[%c64_105, %c0_106] : memref<80x16xf32, #tpu.memory_space<vmem>>, vector<16x16xf32>
    %cst_107 = arith.constant dense<0.000000e+00> : vector<16x1xf32>
    %160 = tpu.matmul %159, %158, %cst_107 {dimension_numbers = #tpu.dot_dimension_numbers<[1], [0], [0], [1], [0, 0, 1, 1], [], []>} : vector<16x16xf32>, vector<16x1xf32>, vector<16x1xf32> -> vector<16x1xf32>
    %c272_108 = arith.constant 272 : index
    %c0_109 = arith.constant 0 : index
    %161 = vector.load %arg8[%c272_108, %c0_109] : memref<304x1xf32, #tpu.memory_space<vmem>>, vector<16x1xf32>
    %162 = arith.addf %160, %161 : vector<16x1xf32>
    %cst_110 = arith.constant 0.000000e+00 : f32
    %163 = vector.broadcast %cst_110 : f32 to vector<16x1xf32>
    %164 = arith.subf %163, %162 : vector<16x1xf32>
    %165 = math.exp %164 : vector<16x1xf32>
    %cst_111 = arith.constant 1.000000e+00 : f32
    %166 = vector.broadcast %cst_111 : f32 to vector<16x1xf32>
    %167 = arith.addf %166, %165 : vector<16x1xf32>
    %168 = tpu.reciprocal %167 {approx = true} : vector<16x1xf32> -> vector<16x1xf32>
    %169 = vector.broadcast %168 : vector<16x1xf32> to vector<16x256xf32>
    %170 = arith.mulf %148, %169 : vector<16x256xf32>
    %c48 = arith.constant 48 : index
    %c0_112 = arith.constant 0 : index
    %171 = vector.load %arg5[%c48, %c0_112] : memref<272x16xf32, #tpu.memory_space<vmem>>, vector<16x16xf32>
    %cst_113 = arith.constant dense<0.000000e+00> : vector<16x256xf32>
    %172 = tpu.matmul %171, %140, %cst_113 {dimension_numbers = #tpu.dot_dimension_numbers<[1], [0], [0], [1], [0, 0, 1, 1], [], []>} : vector<16x16xf32>, vector<16x256xf32>, vector<16x256xf32> -> vector<16x256xf32>
    %c48_114 = arith.constant 48 : index
    %c0_115 = arith.constant 0 : index
    %173 = vector.load %arg8[%c48_114, %c0_115] : memref<304x1xf32, #tpu.memory_space<vmem>>, vector<16x1xf32>
    %174 = vector.broadcast %173 : vector<16x1xf32> to vector<16x256xf32>
    %175 = arith.addf %172, %174 : vector<16x256xf32>
    %c48_116 = arith.constant 48 : index
    %c0_117 = arith.constant 0 : index
    %176 = vector.load %arg5[%c48_116, %c0_117] : memref<272x16xf32, #tpu.memory_space<vmem>>, vector<16x16xf32>
    %cst_118 = arith.constant dense<0.000000e+00> : vector<16x256xf32>
    %177 = tpu.matmul %176, %9, %cst_118 {dimension_numbers = #tpu.dot_dimension_numbers<[1], [0], [0], [1], [0, 0, 1, 1], [], []>} : vector<16x16xf32>, vector<16x256xf32>, vector<16x256xf32> -> vector<16x256xf32>
    %c48_119 = arith.constant 48 : index
    %c0_120 = arith.constant 0 : index
    %178 = vector.load %arg8[%c48_119, %c0_120] : memref<304x1xf32, #tpu.memory_space<vmem>>, vector<16x1xf32>
    %179 = vector.broadcast %178 : vector<16x1xf32> to vector<16x256xf32>
    %180 = arith.addf %177, %179 : vector<16x256xf32>
    %c32_121 = arith.constant 32 : index
    %c0_122 = arith.constant 0 : index
    %181 = vector.load %arg5[%c32_121, %c0_122] : memref<272x16xf32, #tpu.memory_space<vmem>>, vector<16x16xf32>
    %cst_123 = arith.constant dense<0.000000e+00> : vector<16x256xf32>
    %182 = tpu.matmul %181, %170, %cst_123 {dimension_numbers = #tpu.dot_dimension_numbers<[1], [0], [0], [1], [0, 0, 1, 1], [], []>} : vector<16x16xf32>, vector<16x256xf32>, vector<16x256xf32> -> vector<16x256xf32>
    %c32_124 = arith.constant 32 : index
    %c0_125 = arith.constant 0 : index
    %183 = vector.load %arg8[%c32_124, %c0_125] : memref<304x1xf32, #tpu.memory_space<vmem>>, vector<16x1xf32>
    %184 = vector.broadcast %183 : vector<16x1xf32> to vector<16x256xf32>
    %185 = arith.addf %182, %184 : vector<16x256xf32>
    %186 = tpu.concatenate %175, %180, %185 in 0 : vector<16x256xf32>, vector<16x256xf32>, vector<16x256xf32> -> vector<48x256xf32>
    %c0_126 = arith.constant 0 : index
    %c0_127 = arith.constant 0 : index
    %187 = vector.load %arg11[%c0_126, %c0_127] : memref<256x1024xbf16, #tpu.memory_space<vmem>>, vector<256x1024xbf16>
    %188 = arith.truncf %186 : vector<48x256xf32> to vector<48x256xbf16>
    %cst_128 = arith.constant dense<0.000000e+00> : vector<48x1024xf32>
    %189 = tpu.matmul %188, %187, %cst_128 {dimension_numbers = #tpu.dot_dimension_numbers<[1], [0], [0], [1], [0, 0, 1, 1], [], []>} : vector<48x256xbf16>, vector<256x1024xbf16>, vector<48x1024xf32> -> vector<48x1024xf32>
    %190 = vector.extract_strided_slice %189 {offsets = [0, 0], sizes = [16, 1024], strides = [1, 1]} : vector<48x1024xf32> to vector<16x1024xf32>
    %191 = vector.extract_strided_slice %189 {offsets = [16, 0], sizes = [16, 1024], strides = [1, 1]} : vector<48x1024xf32> to vector<16x1024xf32>
    %192 = vector.extract_strided_slice %189 {offsets = [32, 0], sizes = [16, 1024], strides = [1, 1]} : vector<48x1024xf32> to vector<16x1024xf32>
    %193 = arith.mulf %190, %191 : vector<16x1024xf32>
    %194 = arith.addf %193, %8 : vector<16x1024xf32>
    %cst_129 = arith.constant dense<0.000000e+00> : vector<16xf32>
    %195 = vector.multi_reduction <add>, %194, %cst_129 [1] : vector<16x1024xf32> to vector<16xf32>
    %196 = vector.shape_cast %195 : vector<16xf32> to vector<16x1xf32>
    %cst_130 = arith.constant 1.024000e+03 : f32
    %197 = vector.broadcast %cst_130 : f32 to vector<16x1xf32>
    %198 = arith.divf %196, %197 : vector<16x1xf32>
    %c240_131 = arith.constant 240 : index
    %c0_132 = arith.constant 0 : index
    %199 = vector.load %arg5[%c240_131, %c0_132] : memref<272x16xf32, #tpu.memory_space<vmem>>, vector<16x16xf32>
    %cst_133 = arith.constant dense<0.000000e+00> : vector<16x1xf32>
    %200 = tpu.matmul %199, %198, %cst_133 {dimension_numbers = #tpu.dot_dimension_numbers<[1], [0], [0], [1], [0, 0, 1, 1], [], []>} : vector<16x16xf32>, vector<16x1xf32>, vector<16x1xf32> -> vector<16x1xf32>
    %c176 = arith.constant 176 : index
    %c0_134 = arith.constant 0 : index
    %201 = vector.load %arg8[%c176, %c0_134] : memref<304x1xf32, #tpu.memory_space<vmem>>, vector<16x1xf32>
    %202 = arith.addf %200, %201 : vector<16x1xf32>
    %cst_135 = arith.constant 0.000000e+00 : f32
    %203 = vector.broadcast %cst_135 : f32 to vector<16x1xf32>
    %204 = arith.maximumf %202, %203 : vector<16x1xf32>
    %c48_136 = arith.constant 48 : index
    %c0_137 = arith.constant 0 : index
    %205 = vector.load %arg6[%c48_136, %c0_137] : memref<80x16xf32, #tpu.memory_space<vmem>>, vector<16x16xf32>
    %cst_138 = arith.constant dense<0.000000e+00> : vector<16x1xf32>
    %206 = tpu.matmul %205, %204, %cst_138 {dimension_numbers = #tpu.dot_dimension_numbers<[1], [0], [0], [1], [0, 0, 1, 1], [], []>} : vector<16x16xf32>, vector<16x1xf32>, vector<16x1xf32> -> vector<16x1xf32>
    %c256_139 = arith.constant 256 : index
    %c0_140 = arith.constant 0 : index
    %207 = vector.load %arg8[%c256_139, %c0_140] : memref<304x1xf32, #tpu.memory_space<vmem>>, vector<16x1xf32>
    %208 = arith.addf %206, %207 : vector<16x1xf32>
    %cst_141 = arith.constant 0.000000e+00 : f32
    %209 = vector.broadcast %cst_141 : f32 to vector<16x1xf32>
    %210 = arith.subf %209, %208 : vector<16x1xf32>
    %211 = math.exp %210 : vector<16x1xf32>
    %cst_142 = arith.constant 1.000000e+00 : f32
    %212 = vector.broadcast %cst_142 : f32 to vector<16x1xf32>
    %213 = arith.addf %212, %211 : vector<16x1xf32>
    %214 = tpu.reciprocal %213 {approx = true} : vector<16x1xf32> -> vector<16x1xf32>
    %215 = vector.broadcast %214 : vector<16x1xf32> to vector<16x1024xf32>
    %216 = arith.mulf %194, %215 : vector<16x1024xf32>
    %c128_143 = arith.constant 128 : index
    %c0_144 = arith.constant 0 : index
    %217 = vector.load %arg5[%c128_143, %c0_144] : memref<272x16xf32, #tpu.memory_space<vmem>>, vector<32x16xf32>
    %cst_145 = arith.constant dense<0.000000e+00> : vector<32x1024xf32>
    %218 = tpu.matmul %217, %216, %cst_145 {dimension_numbers = #tpu.dot_dimension_numbers<[1], [0], [0], [1], [0, 0, 1, 1], [], []>} : vector<32x16xf32>, vector<16x1024xf32>, vector<32x1024xf32> -> vector<32x1024xf32>
    %c160_146 = arith.constant 160 : index
    %c0_147 = arith.constant 0 : index
    %219 = vector.load %arg5[%c160_146, %c0_147] : memref<272x16xf32, #tpu.memory_space<vmem>>, vector<32x16xf32>
    %cst_148 = arith.constant dense<0.000000e+00> : vector<32x1024xf32>
    %220 = tpu.matmul %219, %192, %cst_148 {dimension_numbers = #tpu.dot_dimension_numbers<[1], [0], [0], [1], [0, 0, 1, 1], [], []>} : vector<32x16xf32>, vector<16x1024xf32>, vector<32x1024xf32> -> vector<32x1024xf32>
    %221 = arith.addf %218, %220 : vector<32x1024xf32>
    %c96_149 = arith.constant 96 : index
    %c0_150 = arith.constant 0 : index
    %222 = vector.load %arg8[%c96_149, %c0_150] : memref<304x1xf32, #tpu.memory_space<vmem>>, vector<32x1xf32>
    %223 = vector.broadcast %222 : vector<32x1xf32> to vector<32x1024xf32>
    %224 = arith.addf %221, %223 : vector<32x1024xf32>
    %c0_151 = arith.constant 0 : index
    %c0_152 = arith.constant 0 : index
    %225 = vector.load %arg7[%c0_151, %c0_152] : memref<9x32xf32, #tpu.memory_space<vmem>>, vector<9x32xf32>
    %cst_153 = arith.constant dense<0.000000e+00> : vector<9x1024xf32>
    %226 = tpu.matmul %225, %224, %cst_153 {dimension_numbers = #tpu.dot_dimension_numbers<[1], [0], [0], [1], [0, 0, 1, 1], [], []>} : vector<9x32xf32>, vector<32x1024xf32>, vector<9x1024xf32> -> vector<9x1024xf32>
    %c288 = arith.constant 288 : index
    %c0_154 = arith.constant 0 : index
    %227 = vector.load %arg8[%c288, %c0_154] : memref<304x1xf32, #tpu.memory_space<vmem>>, vector<9x1xf32>
    %228 = vector.broadcast %227 : vector<9x1xf32> to vector<9x1024xf32>
    %229 = arith.addf %226, %228 : vector<9x1024xf32>
    %230 = vector.extract_strided_slice %229 {offsets = [0, 0], sizes = [8, 1024], strides = [1, 1]} : vector<9x1024xf32> to vector<8x1024xf32>
    %c0_155 = arith.constant 0 : index
    %c0_156 = arith.constant 0 : index
    %c0_157 = arith.constant 0 : index
    %231 = vector.load %arg12[%c0_155, %c0_156, %c0_157] : memref<1x8x1024xf32, #tpu.memory_space<vmem>>, vector<1x8x1024xf32>
    %232 = vector.shape_cast %231 : vector<1x8x1024xf32> to vector<8x1024xf32>
    %233 = vector.shape_cast %230 : vector<8x1024xf32> to vector<1x8x1024xf32>
    tpu.vector_store %arg12[%c0_155, %c0_156, %c0_157], %233 {strides = array<i32>} : memref<1x8x1024xf32, #tpu.memory_space<vmem>>, vector<1x8x1024xf32>,
    %234 = vector.extract_strided_slice %229 {offsets = [8, 0], sizes = [1, 1024], strides = [1, 1]} : vector<9x1024xf32> to vector<1x1024xf32>
    %c0_158 = arith.constant 0 : index
    %c0_159 = arith.constant 0 : index
    %c0_160 = arith.constant 0 : index
    %235 = vector.load %arg13[%c0_158, %c0_159, %c0_160] : memref<1x1x1024xf32, #tpu.memory_space<vmem>>, vector<1x1x1024xf32>
    %236 = vector.shape_cast %235 : vector<1x1x1024xf32> to vector<1x1024xf32>
    %237 = vector.shape_cast %234 : vector<1x1024xf32> to vector<1x1x1024xf32>
    tpu.vector_store %arg13[%c0_158, %c0_159, %c0_160], %237 {strides = array<i32>} : memref<1x1x1024xf32, #tpu.memory_space<vmem>>, vector<1x1x1024xf32>,
    return
  }
  func.func @transform_0(%arg0: i32) -> (i32, i32, i32) {
    %c0_i32 = arith.constant 0 : i32
    %c0_i32_0 = arith.constant 0 : i32
    %c0_i32_1 = arith.constant 0 : i32
    return %arg0, %c0_i32, %c0_i32_0 : i32, i32, i32
  }
  func.func @transform_1(%arg0: i32) -> (i32, i32, i32) {
    %c0_i32 = arith.constant 0 : i32
    %c0_i32_0 = arith.constant 0 : i32
    %c0_i32_1 = arith.constant 0 : i32
    return %arg0, %c0_i32, %c0_i32_0 : i32, i32, i32
  }
  func.func @transform_2(%arg0: i32) -> (i32, i32, i32) {
    %c0_i32 = arith.constant 0 : i32
    %c0_i32_0 = arith.constant 0 : i32
    %c0_i32_1 = arith.constant 0 : i32
    return %arg0, %c0_i32, %c0_i32_0 : i32, i32, i32
  }
  func.func @transform_3(%arg0: i32) -> (i32, i32, i32) {
    %c0_i32 = arith.constant 0 : i32
    %c0_i32_0 = arith.constant 0 : i32
    %c0_i32_1 = arith.constant 0 : i32
    return %arg0, %c0_i32, %c0_i32_0 : i32, i32, i32
  }
  func.func @transform_4(%arg0: i32) -> (i32, i32) {
    %c0_i32 = arith.constant 0 : i32
    %c0_i32_0 = arith.constant 0 : i32
    %c0_i32_1 = arith.constant 0 : i32
    return %c0_i32, %c0_i32_0 : i32, i32
  }
  func.func @transform_5(%arg0: i32) -> (i32, i32) {
    %c0_i32 = arith.constant 0 : i32
    %c0_i32_0 = arith.constant 0 : i32
    %c0_i32_1 = arith.constant 0 : i32
    return %c0_i32, %c0_i32_0 : i32, i32
  }
  func.func @transform_6(%arg0: i32) -> (i32, i32) {
    %c0_i32 = arith.constant 0 : i32
    %c0_i32_0 = arith.constant 0 : i32
    %c0_i32_1 = arith.constant 0 : i32
    return %c0_i32, %c0_i32_0 : i32, i32
  }
  func.func @transform_7(%arg0: i32) -> (i32, i32) {
    %c0_i32 = arith.constant 0 : i32
    %c0_i32_0 = arith.constant 0 : i32
    %c0_i32_1 = arith.constant 0 : i32
    return %c0_i32, %c0_i32_0 : i32, i32
  }
  func.func @transform_8(%arg0: i32) -> (i32, i32) {
    %c0_i32 = arith.constant 0 : i32
    %c0_i32_0 = arith.constant 0 : i32
    %c0_i32_1 = arith.constant 0 : i32
    return %c0_i32, %c0_i32_0 : i32, i32
  }
  func.func @transform_9(%arg0: i32) -> (i32, i32) {
    %c0_i32 = arith.constant 0 : i32
    %c0_i32_0 = arith.constant 0 : i32
    %c0_i32_1 = arith.constant 0 : i32
    return %c0_i32, %c0_i32_0 : i32, i32
  }
  func.func @transform_10(%arg0: i32) -> (i32, i32) {
    %c0_i32 = arith.constant 0 : i32
    %c0_i32_0 = arith.constant 0 : i32
    %c0_i32_1 = arith.constant 0 : i32
    return %c0_i32, %c0_i32_0 : i32, i32
  }
  func.func @transform_11(%arg0: i32) -> (i32, i32, i32) {
    %c0_i32 = arith.constant 0 : i32
    %c0_i32_0 = arith.constant 0 : i32
    %c0_i32_1 = arith.constant 0 : i32
    return %arg0, %c0_i32, %c0_i32_0 : i32, i32, i32
  }
  func.func @transform_12(%arg0: i32) -> (i32, i32, i32) {
    %c0_i32 = arith.constant 0 : i32
    %c0_i32_0 = arith.constant 0 : i32
    %c0_i32_1 = arith.constant 0 : i32
    return %arg0, %c0_i32, %c0_i32_0 : i32, i32, i32
  }
}

</mosaic_0001>

<llo_original>
// kernel: tpu_custom_call.1
$region0: #{tpu_custom_call.1}
  #allocation0 [shape = 'u32[]', space=smem, size = 0x4, offset = 0x4, fixed_abs, tag = 'smem constant byte address 0x4 - core index']
  #allocation1 [shape = 'u32[144,128]{1,0:T(1,128)}', space=vmem, size = 0x12000, scoped, tag = 'internal scratch']
  %s0 = inlined_call_operand.vmem [shape: f32[2,8,1024], index: 0, kind: input, shape index: {}]
  %s1 = inlined_call_operand.vmem [shape: f32[2,8,256], index: 1, kind: input, shape index: {}]
  %s2 = inlined_call_operand.vmem [shape: f32[2,8,64], index: 2, kind: input, shape index: {}]
  %s3 = inlined_call_operand.vmem [shape: f32[2,8,16], index: 3, kind: input, shape index: {}]
  %s4 = inlined_call_operand.vmem [shape: f32[272,16], index: 4, kind: input, shape index: {}]
  %s5 = inlined_call_operand.vmem [shape: f32[80,16], index: 5, kind: input, shape index: {}]
  %s6 = inlined_call_operand.vmem [shape: f32[9,32], index: 6, kind: input, shape index: {}]
  %s7 = inlined_call_operand.vmem [shape: f32[304,1], index: 7, kind: input, shape index: {}]
  %s8 = inlined_call_operand.vmem [shape: bf16[16,64], index: 8, kind: input, shape index: {}]
  %s9 = inlined_call_operand.vmem [shape: bf16[64,256], index: 9, kind: input, shape index: {}]
  %s10 = inlined_call_operand.hbm [shape: bf16[256,1024], index: 10, kind: input, shape index: {}]
  %s11 = inlined_call_operand.hbm [shape: f32[2,8,1024], index: 11, kind: output, shape index: {0}]
  %s12 = inlined_call_operand.hbm [shape: f32[2,1,1024], index: 12, kind: output, shape index: {1}]
  %13 = xla_tuple %s11, %s12
  %s14 = sld [smem:[#allocation0]]
  $region89: #{tpu_custom_call.1} parent=0
    _
  %s16 = ssub.s32 1, %s14
  %s17 = scalar_select 0, %s16, %s14
  $region1: #{tpu_custom_call.1} parent=0
    #allocation2 [shape = 'u8[524288]{0}', space=vmem, size = 0x80000, scoped, tag = 'input window, operand 10, single buffered']
    #allocation3 [shape = 's32[2]{0}', space=sflag, size = 0x8, scoped, tag = 'scoped memory for tpu_custom_call.1']
    #allocation4 [shape = 's32[2]{0}', space=sflag, size = 0x8, scoped, tag = 'scoped memory for tpu_custom_call.1']
    #allocation5 [shape = 'u8[65536]{0}', space=vmem, size = 0x10000, scoped, tag = 'output window, operand 0']
    #allocation6 [shape = 'u8[8192]{0}', space=vmem, size = 0x2000, scoped, tag = 'output window, operand 1']
    #allocation7 [shape = 's32[2]{0}', space=sflag, size = 0x8, scoped, tag = 'scoped memory for tpu_custom_call.1']
    %18 = vsyncpa [#allocation3], 0
    %19 = vsyncpa [#allocation4], 0
    %s20 = scalar_lea.sflag [#allocation4], 1
    %21 = vsyncpa %s20, 0
    %22 = vsyncpa [#allocation7], 0
    %s23 = scalar_lea.sflag [#allocation7], 1
    %24 = vsyncpa %s23, 0
    loop: start=0, step=1, limit=4
    $region2: #{tpu_custom_call.1} parent=1 // loop_pre_header
      _
    $region3: #{tpu_custom_call.1} parent=1 // loop_header
      %s26 = sphi 0, %s30
      %p27 = scmp.ge.s32.totalorder %s26, 4
      %s36 = sphi 0, %s38
      %s39 = sphi 0, %s36
      %s40 = sphi 0, %s39
      %s56 = sphi 0, %s40
      %s62 = sphi 0, %s64
      %s65 = sphi 0, %s62
      %s66 = sphi 0, %s65
      %s82 = sphi 0, %s66
      %s88 = sphi 0, %s90
      %s91 = sphi 0, %s88
      %s92 = sphi 0, %s91
      %s108 = sphi 0, %s92
      %s114 = sphi 0, %s116
      %s117 = sphi 0, %s114
      %s118 = sphi 0, %s117
      %s134 = sphi 0, %s118
      %s138 = sphi 0, %s138
      %s140 = sphi 0, %s138
      %s141 = sphi 0, %s140
      %s155 = sphi 0, %s141
      %s159 = sphi 0, %s159
      %s161 = sphi 0, %s159
      %s162 = sphi 0, %s161
      %s176 = sphi 0, %s162
      %s180 = sphi 0, %s180
      %s182 = sphi 0, %s180
      %s183 = sphi 0, %s182
      %s197 = sphi 0, %s183
      %s201 = sphi 0, %s201
      %s203 = sphi 0, %s201
      %s204 = sphi 0, %s203
      %s218 = sphi 0, %s204
      %s222 = sphi 0, %s222
      %s224 = sphi 0, %s222
      %s225 = sphi 0, %s224
      %s239 = sphi 0, %s225
      %s243 = sphi 0, %s243
      %s245 = sphi 0, %s243
      %s246 = sphi 0, %s245
      %s260 = sphi 0, %s246
      %s264 = sphi 0, %s264
      %s266 = sphi 0, %s264
      %s267 = sphi 0, %s266
      %s281 = sphi 0, %s267
      %s287 = sphi 0, %s289
      %s290 = sphi 0, %s287
      %s291 = sphi 0, %s290
      %s307 = sphi 0, %s291
      %s313 = sphi 0, %s315
      %s316 = sphi 0, %s313
      %s317 = sphi 0, %s316
      %s333 = sphi 0, %s317
    $region4: #{tpu_custom_call.1} parent=1 // loop_header_branch
      %29 = sbr.rel (%p27) target = $region8
    $region5: #{tpu_custom_call.1} parent=1 // loop_body
      %s31 = ssub.s32 %s26, 1
      %s32 = ssub.s32 %s26, 2
      %s33 = sadd.s32 %s26, 1
      %s34 = ssub.s32 %s26, %s33
      %p35 = scmp.eq.s32.totalorder %s34, 0
      %s37 = sadd.s32 %s36, 1
      %s38 = scalar_select %p35, %s36, %s37
      %p41 = pneg %p35
      %p42 = scmp.eq.s32.totalorder %s26, 1
      %p43 = por %p41, %p42
      %p44 = scmp.ne.s32.totalorder %s36, %s39
      %p45 = scmp.eq.s32.totalorder %s26, 0
      %p46 = por %p44, %p45
      %p47 = scmp.ne.s32.totalorder %s36, %s39
      %p48 = scmp.eq.s32.totalorder %s31, 1
      %p49 = por %p47, %p48
      %p50 = scmp.ne.s32.totalorder %s39, %s40
      %p51 = scmp.eq.s32.totalorder %s31, 0
      %p52 = por %p50, %p51
      %p53 = scmp.ne.s32.totalorder %s39, %s40
      %p54 = scmp.eq.s32.totalorder %s32, 1
      %p55 = por %p53, %p54
      %p57 = scmp.ne.s32.totalorder %s40, %s56
      %p58 = scmp.eq.s32.totalorder %s32, 0
      %p59 = por %p57, %p58
      %s60 = ssub.s32 %s26, %s33
      %p61 = scmp.eq.s32.totalorder %s60, 0
      %s63 = sadd.s32 %s62, 1
      %s64 = scalar_select %p61, %s62, %s63
      %p67 = pneg %p61
      %p68 = scmp.eq.s32.totalorder %s26, 1
      %p69 = por %p67, %p68
      %p70 = scmp.ne.s32.totalorder %s62, %s65
      %p71 = scmp.eq.s32.totalorder %s26, 0
      %p72 = por %p70, %p71
      %p73 = scmp.ne.s32.totalorder %s62, %s65
      %p74 = scmp.eq.s32.totalorder %s31, 1
      %p75 = por %p73, %p74
      %p76 = scmp.ne.s32.totalorder %s65, %s66
      %p77 = scmp.eq.s32.totalorder %s31, 0
      %p78 = por %p76, %p77
      %p79 = scmp.ne.s32.totalorder %s65, %s66
      %p80 = scmp.eq.s32.totalorder %s32, 1
      %p81 = por %p79, %p80
      %p83 = scmp.ne.s32.totalorder %s66, %s82
      %p84 = scmp.eq.s32.totalorder %s32, 0
      %p85 = por %p83, %p84
      %s86 = ssub.s32 %s26, %s33
      %p87 = scmp.eq.s32.totalorder %s86, 0
      %s89 = sadd.s32 %s88, 1
      %s90 = scalar_select %p87, %s88, %s89
      %p93 = pneg %p87
      %p94 = scmp.eq.s32.totalorder %s26, 1
      %p95 = por %p93, %p94
      %p96 = scmp.ne.s32.totalorder %s88, %s91
      %p97 = scmp.eq.s32.totalorder %s26, 0
      %p98 = por %p96, %p97
      %p99 = scmp.ne.s32.totalorder %s88, %s91
      %p100 = scmp.eq.s32.totalorder %s31, 1
      %p101 = por %p99, %p100
      %p102 = scmp.ne.s32.totalorder %s91, %s92
      %p103 = scmp.eq.s32.totalorder %s31, 0
      %p104 = por %p102, %p103
      %p105 = scmp.ne.s32.totalorder %s91, %s92
      %p106 = scmp.eq.s32.totalorder %s32, 1
      %p107 = por %p105, %p106
      %p109 = scmp.ne.s32.totalorder %s92, %s108
      %p110 = scmp.eq.s32.totalorder %s32, 0
      %p111 = por %p109, %p110
      %s112 = ssub.s32 %s26, %s33
      %p113 = scmp.eq.s32.totalorder %s112, 0
      %s115 = sadd.s32 %s114, 1
      %s116 = scalar_select %p113, %s114, %s115
      %p119 = pneg %p113
      %p120 = scmp.eq.s32.totalorder %s26, 1
      %p121 = por %p119, %p120
      %p122 = scmp.ne.s32.totalorder %s114, %s117
      %p123 = scmp.eq.s32.totalorder %s26, 0
      %p124 = por %p122, %p123
      %p125 = scmp.ne.s32.totalorder %s114, %s117
      %p126 = scmp.eq.s32.totalorder %s31, 1
      %p127 = por %p125, %p126
      %p128 = scmp.ne.s32.totalorder %s117, %s118
      %p129 = scmp.eq.s32.totalorder %s31, 0
      %p130 = por %p128, %p129
      %p131 = scmp.ne.s32.totalorder %s117, %s118
      %p132 = scmp.eq.s32.totalorder %s32, 1
      %p133 = por %p131, %p132
      %p135 = scmp.ne.s32.totalorder %s118, %s134
      %p136 = scmp.eq.s32.totalorder %s32, 0
      %p137 = por %p135, %p136
      %s139 = sadd.s32 %s138, 1
      %p142 = scmp.eq.s32.totalorder %s26, 1
      %p143 = scmp.ne.s32.totalorder %s138, %s140
      %p144 = scmp.eq.s32.totalorder %s26, 0
      %p145 = por %p143, %p144
      %p146 = scmp.ne.s32.totalorder %s138, %s140
      %p147 = scmp.eq.s32.totalorder %s31, 1
      %p148 = por %p146, %p147
      %p149 = scmp.ne.s32.totalorder %s140, %s141
      %p150 = scmp.eq.s32.totalorder %s31, 0
      %p151 = por %p149, %p150
      %p152 = scmp.ne.s32.totalorder %s140, %s141
      %p153 = scmp.eq.s32.totalorder %s32, 1
      %p154 = por %p152, %p153
      %p156 = scmp.ne.s32.totalorder %s141, %s155
      %p157 = scmp.eq.s32.totalorder %s32, 0
      %p158 = por %p156, %p157
      %s160 = sadd.s32 %s159, 1
      %p163 = scmp.eq.s32.totalorder %s26, 1
      %p164 = scmp.ne.s32.totalorder %s159, %s161
      %p165 = scmp.eq.s32.totalorder %s26, 0
      %p166 = por %p164, %p165
      %p167 = scmp.ne.s32.totalorder %s159, %s161
      %p168 = scmp.eq.s32.totalorder %s31, 1
      %p169 = por %p167, %p168
      %p170 = scmp.ne.s32.totalorder %s161, %s162
      %p171 = scmp.eq.s32.totalorder %s31, 0
      %p172 = por %p170, %p171
      %p173 = scmp.ne.s32.totalorder %s161, %s162
      %p174 = scmp.eq.s32.totalorder %s32, 1
      %p175 = por %p173, %p174
      %p177 = scmp.ne.s32.totalorder %s162, %s176
      %p178 = scmp.eq.s32.totalorder %s32, 0
      %p179 = por %p177, %p178
      %s181 = sadd.s32 %s180, 1
      %p184 = scmp.eq.s32.totalorder %s26, 1
      %p185 = scmp.ne.s32.totalorder %s180, %s182
      %p186 = scmp.eq.s32.totalorder %s26, 0
      %p187 = por %p185, %p186
      %p188 = scmp.ne.s32.totalorder %s180, %s182
      %p189 = scmp.eq.s32.totalorder %s31, 1
      %p190 = por %p188, %p189
      %p191 = scmp.ne.s32.totalorder %s182, %s183
      %p192 = scmp.eq.s32.totalorder %s31, 0
      %p193 = por %p191, %p192
      %p194 = scmp.ne.s32.totalorder %s182, %s183
      %p195 = scmp.eq.s32.totalorder %s32, 1
      %p196 = por %p194, %p195
      %p198 = scmp.ne.s32.totalorder %s183, %s197
      %p199 = scmp.eq.s32.totalorder %s32, 0
      %p200 = por %p198, %p199
      %s202 = sadd.s32 %s201, 1
      %p205 = scmp.eq.s32.totalorder %s26, 1
      %p206 = scmp.ne.s32.totalorder %s201, %s203
      %p207 = scmp.eq.s32.totalorder %s26, 0
      %p208 = por %p206, %p207
      %p209 = scmp.ne.s32.totalorder %s201, %s203
      %p210 = scmp.eq.s32.totalorder %s31, 1
      %p211 = por %p209, %p210
      %p212 = scmp.ne.s32.totalorder %s203, %s204
      %p213 = scmp.eq.s32.totalorder %s31, 0
      %p214 = por %p212, %p213
      %p215 = scmp.ne.s32.totalorder %s203, %s204
      %p216 = scmp.eq.s32.totalorder %s32, 1
      %p217 = por %p215, %p216
      %p219 = scmp.ne.s32.totalorder %s204, %s218
      %p220 = scmp.eq.s32.totalorder %s32, 0
      %p221 = por %p219, %p220
      %s223 = sadd.s32 %s222, 1
      %p226 = scmp.eq.s32.totalorder %s26, 1
      %p227 = scmp.ne.s32.totalorder %s222, %s224
      %p228 = scmp.eq.s32.totalorder %s26, 0
      %p229 = por %p227, %p228
      %p230 = scmp.ne.s32.totalorder %s222, %s224
      %p231 = scmp.eq.s32.totalorder %s31, 1
      %p232 = por %p230, %p231
      %p233 = scmp.ne.s32.totalorder %s224, %s225
      %p234 = scmp.eq.s32.totalorder %s31, 0
      %p235 = por %p233, %p234
      %p236 = scmp.ne.s32.totalorder %s224, %s225
      %p237 = scmp.eq.s32.totalorder %s32, 1
      %p238 = por %p236, %p237
      %p240 = scmp.ne.s32.totalorder %s225, %s239
      %p241 = scmp.eq.s32.totalorder %s32, 0
      %p242 = por %p240, %p241
      %s244 = sadd.s32 %s243, 1
      %p247 = scmp.eq.s32.totalorder %s26, 1
      %p248 = scmp.ne.s32.totalorder %s243, %s245
      %p249 = scmp.eq.s32.totalorder %s26, 0
      %p250 = por %p248, %p249
      %p251 = scmp.ne.s32.totalorder %s243, %s245
      %p252 = scmp.eq.s32.totalorder %s31, 1
      %p253 = por %p251, %p252
      %p254 = scmp.ne.s32.totalorder %s245, %s246
      %p255 = scmp.eq.s32.totalorder %s31, 0
      %p256 = por %p254, %p255
      %p257 = scmp.ne.s32.totalorder %s245, %s246
      %p258 = scmp.eq.s32.totalorder %s32, 1
      %p259 = por %p257, %p258
      %p261 = scmp.ne.s32.totalorder %s246, %s260
      %p262 = scmp.eq.s32.totalorder %s32, 0
      %p263 = por %p261, %p262
      %s265 = sadd.s32 %s264, 1
      %p268 = scmp.eq.s32.totalorder %s26, 1
      %p269 = scmp.ne.s32.totalorder %s264, %s266
      %p270 = scmp.eq.s32.totalorder %s26, 0
      %p271 = por %p269, %p270
      %p272 = scmp.ne.s32.totalorder %s264, %s266
      %p273 = scmp.eq.s32.totalorder %s31, 1
      %p274 = por %p272, %p273
      %p275 = scmp.ne.s32.totalorder %s266, %s267
      %p276 = scmp.eq.s32.totalorder %s31, 0
      %p277 = por %p275, %p276
      %p278 = scmp.ne.s32.totalorder %s266, %s267
      %p279 = scmp.eq.s32.totalorder %s32, 1
      %p280 = por %p278, %p279
      %p282 = scmp.ne.s32.totalorder %s267, %s281
      %p283 = scmp.eq.s32.totalorder %s32, 0
      %p284 = por %p282, %p283
      %s285 = ssub.s32 %s26, %s33
      %p286 = scmp.eq.s32.totalorder %s285, 0
      %s288 = sadd.s32 %s287, 1
      %s289 = scalar_select %p286, %s287, %s288
      %p292 = pneg %p286
      %p293 = scmp.eq.s32.totalorder %s26, 1
      %p294 = por %p292, %p293
      %p295 = scmp.ne.s32.totalorder %s287, %s290
      %p296 = scmp.eq.s32.totalorder %s26, 0
      %p297 = por %p295, %p296
      %p298 = scmp.ne.s32.totalorder %s287, %s290
      %p299 = scmp.eq.s32.totalorder %s31, 1
      %p300 = por %p298, %p299
      %p301 = scmp.ne.s32.totalorder %s290, %s291
      %p302 = scmp.eq.s32.totalorder %s31, 0
      %p303 = por %p301, %p302
      %p304 = scmp.ne.s32.totalorder %s290, %s291
      %p305 = scmp.eq.s32.totalorder %s32, 1
      %p306 = por %p304, %p305
      %p308 = scmp.ne.s32.totalorder %s291, %s307
      %p309 = scmp.eq.s32.totalorder %s32, 0
      %p310 = por %p308, %p309
      %s311 = ssub.s32 %s26, %s33
      %p312 = scmp.eq.s32.totalorder %s311, 0
      %s314 = sadd.s32 %s313, 1
      %s315 = scalar_select %p312, %s313, %s314
      %p318 = pneg %p312
      %p319 = scmp.eq.s32.totalorder %s26, 1
      %p320 = por %p318, %p319
      %p321 = scmp.ne.s32.totalorder %s313, %s316
      %p322 = scmp.eq.s32.totalorder %s26, 0
      %p323 = por %p321, %p322
      %p324 = scmp.ne.s32.totalorder %s313, %s316
      %p325 = scmp.eq.s32.totalorder %s31, 1
      %p326 = por %p324, %p325
      %p327 = scmp.ne.s32.totalorder %s316, %s317
      %p328 = scmp.eq.s32.totalorder %s31, 0
      %p329 = por %p327, %p328
      %p330 = scmp.ne.s32.totalorder %s316, %s317
      %p331 = scmp.eq.s32.totalorder %s32, 1
      %p332 = por %p330, %p331
      %p334 = scmp.ne.s32.totalorder %s317, %s333
      %p335 = scmp.eq.s32.totalorder %s32, 0
      %p336 = por %p334, %p335
      %p337 = scmp.le.s32.totalorder 1, %s26
      %p338 = scmp.lt.s32.totalorder %s26, 3
      %p339 = pnand %p337, %p338
      %p340 = pneg %p339
      // Predicated region
      $region9: #{tpu_custom_call.1} parent=5 // pred_check
        _
      $region10: #{tpu_custom_call.1} parent=5 // pred_check_branch
        %342 = sbr.rel (%p339) target = $region12
      $region11: #{tpu_custom_call.1} parent=5 // pred_region
        %s343 = ssub.s32 %s26, 1
        // Predicated region
        $region13: #{tpu_custom_call.1} parent=11 // pred_check
          %p344 = pneg %p151
        $region14: #{tpu_custom_call.1} parent=11 // pred_check_branch
          %346 = sbr.rel (%p344) target = $region16
        $region15: #{tpu_custom_call.1} parent=11 // pred_region
          _
        $region16: #{tpu_custom_call.1} parent=11 // pred_fallthru
          _
        // Predicated region
        $region17: #{tpu_custom_call.1} parent=11 // pred_check
          %p347 = pneg %p172
        $region18: #{tpu_custom_call.1} parent=11 // pred_check_branch
          %349 = sbr.rel (%p347) target = $region20
        $region19: #{tpu_custom_call.1} parent=11 // pred_region
          _
        $region20: #{tpu_custom_call.1} parent=11 // pred_fallthru
          _
        // Predicated region
        $region21: #{tpu_custom_call.1} parent=11 // pred_check
          %p350 = pneg %p193
        $region22: #{tpu_custom_call.1} parent=11 // pred_check_branch
          %352 = sbr.rel (%p350) target = $region24
        $region23: #{tpu_custom_call.1} parent=11 // pred_region
          _
        $region24: #{tpu_custom_call.1} parent=11 // pred_fallthru
          _
        // Predicated region
        $region25: #{tpu_custom_call.1} parent=11 // pred_check
          %p353 = pneg %p214
        $region26: #{tpu_custom_call.1} parent=11 // pred_check_branch
          %355 = sbr.rel (%p353) target = $region28
        $region27: #{tpu_custom_call.1} parent=11 // pred_region
          _
        $region28: #{tpu_custom_call.1} parent=11 // pred_fallthru
          _
        // Predicated region
        $region29: #{tpu_custom_call.1} parent=11 // pred_check
          %p356 = pneg %p235
        $region30: #{tpu_custom_call.1} parent=11 // pred_check_branch
          %358 = sbr.rel (%p356) target = $region32
        $region31: #{tpu_custom_call.1} parent=11 // pred_region
          _
        $region32: #{tpu_custom_call.1} parent=11 // pred_fallthru
          _
        // Predicated region
        $region33: #{tpu_custom_call.1} parent=11 // pred_check
          %p359 = pneg %p256
        $region34: #{tpu_custom_call.1} parent=11 // pred_check_branch
          %361 = sbr.rel (%p359) target = $region36
        $region35: #{tpu_custom_call.1} parent=11 // pred_region
          _
        $region36: #{tpu_custom_call.1} parent=11 // pred_fallthru
          _
        // Predicated region
        $region37: #{tpu_custom_call.1} parent=11 // pred_check
          %p362 = pneg %p277
        $region38: #{tpu_custom_call.1} parent=11 // pred_check_branch
          %364 = sbr.rel (%p362) target = $region40
        $region39: #{tpu_custom_call.1} parent=11 // pred_region
          %s366 = ssub.s32 16384, 16384
          %367 = vsyncadd [#allocation3], %s366
          %s368 = sshll.u32 [#allocation2], 4
          %s369 = int_to_ptr.vmem [resolvable:$true] %s368
          %374 = dma.hbm_to_vmem [thread:$0]  %s10, 16384, %s369, [#allocation3], 512, 512, 32
        $region40: #{tpu_custom_call.1} parent=11 // pred_fallthru
          _
      $region12: #{tpu_custom_call.1} parent=5 // pred_fallthru
        _
      %p375 = scmp.lt.s32.totalorder %s26, 2
      // Predicated region
      $region41: #{tpu_custom_call.1} parent=5 // pred_check
        %p376 = pneg %p375
      $region42: #{tpu_custom_call.1} parent=5 // pred_check_branch
        %378 = sbr.rel (%p376) target = $region44
      $region43: #{tpu_custom_call.1} parent=5 // pred_region
        // Predicated region
        $region45: #{tpu_custom_call.1} parent=43 // pred_check
          %p379 = pneg %p46
        $region46: #{tpu_custom_call.1} parent=43 // pred_check_branch
          %381 = sbr.rel (%p379) target = $region48
        $region47: #{tpu_custom_call.1} parent=43 // pred_region
          %p382 = scmp.lt.s32.totalorder %s26, 1
          %s383 = scalar_select %p382, %s26, 1
          %s384 = smul.addr %s383, 8
          %s385 = smul.addr %s384, 8
          %s386 = scalar_lea.vmem %s0, %s385
        $region48: #{tpu_custom_call.1} parent=43 // pred_fallthru
          _
        // Predicated region
        $region49: #{tpu_custom_call.1} parent=43 // pred_check
          %p387 = pneg %p72
        $region50: #{tpu_custom_call.1} parent=43 // pred_check_branch
          %389 = sbr.rel (%p387) target = $region52
        $region51: #{tpu_custom_call.1} parent=43 // pred_region
          %p390 = scmp.lt.s32.totalorder %s26, 1
          %s391 = scalar_select %p390, %s26, 1
          %s392 = smul.addr %s391, 2
          %s393 = smul.addr %s392, 8
          %s394 = scalar_lea.vmem %s1, %s393
        $region52: #{tpu_custom_call.1} parent=43 // pred_fallthru
          _
        // Predicated region
        $region53: #{tpu_custom_call.1} parent=43 // pred_check
          %p395 = pneg %p98
        $region54: #{tpu_custom_call.1} parent=43 // pred_check_branch
          %397 = sbr.rel (%p395) target = $region56
        $region55: #{tpu_custom_call.1} parent=43 // pred_region
          %p398 = scmp.lt.s32.totalorder %s26, 1
          %s399 = scalar_select %p398, %s26, 1
          %s400 = smul.addr %s399, 8
          %s401 = scalar_lea.vmem %s2, %s400
        $region56: #{tpu_custom_call.1} parent=43 // pred_fallthru
          _
        // Predicated region
        $region57: #{tpu_custom_call.1} parent=43 // pred_check
          %p402 = pneg %p124
        $region58: #{tpu_custom_call.1} parent=43 // pred_check_branch
          %404 = sbr.rel (%p402) target = $region60
        $region59: #{tpu_custom_call.1} parent=43 // pred_region
          %p405 = scmp.lt.s32.totalorder %s26, 1
          %s406 = scalar_select %p405, %s26, 1
          %s407 = smul.addr %s406, 8
          %s408 = scalar_lea.vmem %s3, %s407
        $region60: #{tpu_custom_call.1} parent=43 // pred_fallthru
          _
      $region44: #{tpu_custom_call.1} parent=5 // pred_fallthru
        _
      %p409 = scmp.le.s32.totalorder 1, %s26
      %p410 = scmp.lt.s32.totalorder %s26, 3
      %p411 = pnand %p409, %p410
      %p412 = pneg %p411
      // Predicated region
      $region61: #{tpu_custom_call.1} parent=5 // pred_check
        _
      $region62: #{tpu_custom_call.1} parent=5 // pred_check_branch
        %414 = sbr.rel (%p411) target = $region64
      $region63: #{tpu_custom_call.1} parent=5 // pred_region
        %s415 = ssub.s32 %s26, 1
        // Predicated region
        $region65: #{tpu_custom_call.1} parent=63 // pred_check
          %p416 = pneg %p277
        $region66: #{tpu_custom_call.1} parent=63 // pred_check_branch
          %418 = sbr.rel (%p416) target = $region68
        $region67: #{tpu_custom_call.1} parent=63 // pred_region
          %419 = dma.done [#allocation3], 16384
        $region68: #{tpu_custom_call.1} parent=63 // pred_fallthru
          _
        %p420 = scmp.lt.s32.totalorder %s31, 1
        %s421 = scalar_select %p420, %s31, 1
        %s422 = smul.addr %s421, 8
        %s423 = smul.addr %s422, 8
        %s424 = scalar_lea.vmem %s0, %s423
        %p425 = pneg %p52
        %p426 = pneg %p49
        %p427 = scmp.lt.s32.totalorder %s31, 1
        %s428 = scalar_select %p427, %s31, 1
        %s429 = smul.addr %s428, 2
        %s430 = smul.addr %s429, 8
        %s431 = scalar_lea.vmem %s1, %s430
        %p432 = pneg %p78
        %p433 = pneg %p75
        %p434 = scmp.lt.s32.totalorder %s31, 1
        %s435 = scalar_select %p434, %s31, 1
        %s436 = smul.addr %s435, 8
        %s437 = scalar_lea.vmem %s2, %s436
        %p438 = pneg %p104
        %p439 = pneg %p101
        %p440 = scmp.lt.s32.totalorder %s31, 1
        %s441 = scalar_select %p440, %s31, 1
        %s442 = smul.addr %s441, 8
        %s443 = scalar_lea.vmem %s3, %s442
        %p444 = pneg %p130
        %p445 = pneg %p127
        %p446 = pneg %p151
        %p447 = pneg %p148
        %p448 = pneg %p172
        %p449 = pneg %p169
        %p450 = pneg %p193
        %p451 = pneg %p190
        %p452 = pneg %p214
        %p453 = pneg %p211
        %p454 = pneg %p235
        %p455 = pneg %p232
        %p456 = pneg %p256
        %p457 = pneg %p253
        %p458 = pneg %p277
        %p459 = pneg %p274
        %p460 = pneg %p303
        %p461 = pneg %p300
        %s462 = sand.u32 %s290, 1
        %s463 = scalar_lea.sflag [#allocation4], %s462
        %s464 = sand.u32 %s290, 1
        %s465 = smul.addr %s464, 64
        %s466 = scalar_lea.vmem [#allocation5], %s465
        %p467 = pneg %p329
        %p468 = pneg %p326
        %s469 = sand.u32 %s316, 1
        %s470 = scalar_lea.sflag [#allocation7], %s469
        %s471 = sand.u32 %s316, 1
        %s472 = smul.addr %s471, 8
        %s473 = scalar_lea.vmem [#allocation6], %s472
        %p474 = scmp.lt.s32.totalorder %s31, 1
        %s475 = scalar_select %p474, %s31, 1
        %s476 = smul.addr %s475, 8
        %s477 = smul.addr %s476, 8
        %s478 = scalar_lea.vmem %s0, %s477
        %p479 = scmp.lt.s32.totalorder %s31, 1
        %s480 = scalar_select %p479, %s31, 1
        %s481 = smul.addr %s480, 2
        %s482 = smul.addr %s481, 8
        %s483 = scalar_lea.vmem %s1, %s482
        %p484 = scmp.lt.s32.totalorder %s31, 1
        %s485 = scalar_select %p484, %s31, 1
        %s486 = smul.addr %s485, 8
        %s487 = scalar_lea.vmem %s2, %s486
        %p488 = scmp.lt.s32.totalorder %s31, 1
        %s489 = scalar_select %p488, %s31, 1
        %s490 = smul.addr %s489, 8
        %s491 = scalar_lea.vmem %s3, %s490
        %v493 = vld [vmem:[%s478] sm:$0xff]
        %v494 = vld [vmem:[%s478 + $0x8] sm:$0xff]
        %v495 = vld [vmem:[%s478 + $0x10] sm:$0xff]
        %v496 = vld [vmem:[%s478 + $0x18] sm:$0xff]
        %v497 = vld [vmem:[%s478 + $0x20] sm:$0xff]
        %v498 = vld [vmem:[%s478 + $0x28] sm:$0xff]
        %v499 = vld [vmem:[%s478 + $0x30] sm:$0xff]
        %v500 = vld [vmem:[%s478 + $0x38] sm:$0xff]
        %v501 = vld [vmem:[%s483] sm:$0xff]
        %v502 = vld [vmem:[%s483 + $0x8] sm:$0xff]
        %v503 = vld [vmem:[%s487] sm:$0xff]
        %v504 = vld [vmem:[%s491] sm:$0xff]
        %vm505 = vcmask 130048
        %v506 = vsel %vm505, %v504, 0.0
        %507 = vadd.xlane.f32.xlu0 %v506
        %v508 = vpop.xlane.xlu0 %507
        %v509 = vrcp.pop 16.0
        %v510 = vmul.f32 %v508, %v509
        %v511 = vld [vmem:[%s4 + $0xc0] sm:$0xff]
        %v512 = vld [vmem:[%s4 + $0xc8] sm:$0xff]
        %v513 = vld [vmem:[%s7 + $0x80] sm:$0xff]
        %v514 = vld [vmem:[%s7 + $0x88] sm:$0xff]
        %v516 = vsel %vm505, %v511, 0
        %v519 = vsel %vm505, %v512, 0
        %521 = vmatprep.subr.mxu0 0.0
        %522 = vmatpush1.msra.mxu0 0.0
        %523 = vmatprep.subr.mxu0 0.0
        %524 = vmatpush1.msra.mxu0 0.0
        %525 = vmatprep.subr.mxu0 0.0
        %526 = vmatpush1.msra.mxu0 0.0
        %527 = vmatprep.subr.mxu0 0.0
        %528 = vmatpush1.msra.mxu0 0.0
        %529 = vmatprep.subr.mxu0 0.0
        %530 = vmatpush1.msra.mxu0 0.0
        %531 = vmatprep.subr.mxu0 0.0
        %532 = vmatpush1.msra.mxu0 0.0
        %533 = vmatprep.subr.mxu0 0.0
        %534 = vmatpush1.msra.mxu0 0.0
        %535 = vmatprep.subr.mxu0 0.0
        %536 = vmatpush1.msra.mxu0 0.0
        %537 = vmatprep.subr.mxu0 0.0
        %538 = vmatpush1.msra.mxu0 0.0
        %539 = vmatprep.subr.mxu0 0.0
        %540 = vmatpush1.msra.mxu0 0.0
        %541 = vmatprep.subr.mxu0 0.0
        %542 = vmatpush1.msra.mxu0 0.0
        %543 = vmatprep.subr.mxu0 0.0
        %544 = vmatpush1.msra.mxu0 0.0
        %545 = vmatprep.subr.mxu0 0.0
        %546 = vmatpush1.msra.mxu0 0.0
        %547 = vmatprep.subr.mxu0 0.0
        %548 = vmatpush1.msra.mxu0 0.0
        %549 = vmatprep.subr.mxu0 0.0
        %550 = vmatpush1.msra.mxu0 %v510
        %551 = vmatprep.subr.mxu0 0.0
        %552 = vmatpush1.msra.mxu0 %v510
        %553 = vmatprep.subr.mxu0 0.0
        %554 = vmatpush2.msra.mxu0 0.0
        %555 = vmatprep.subr.mxu0 0.0
        %556 = vmatpush2.msra.mxu0 0.0
        %557 = vmatprep.subr.mxu0 0.0
        %558 = vmatpush2.msra.mxu0 0.0
        %559 = vmatprep.subr.mxu0 0.0
        %560 = vmatpush2.msra.mxu0 0.0
        %561 = vmatprep.subr.mxu0 0.0
        %562 = vmatpush2.msra.mxu0 0.0
        %563 = vmatprep.subr.mxu0 0.0
        %564 = vmatpush2.msra.mxu0 0.0
        %565 = vmatprep.subr.mxu0 0.0
        %566 = vmatpush2.msra.mxu0 0.0
        %567 = vmatprep.subr.mxu0 0.0
        %568 = vmatpush2.msra.mxu0 0.0
        %569 = vmatprep.subr.mxu0 0.0
        %570 = vmatpush2.msra.mxu0 0.0
        %571 = vmatprep.subr.mxu0 0.0
        %572 = vmatpush2.msra.mxu0 0.0
        %573 = vmatprep.subr.mxu0 0.0
        %574 = vmatpush2.msra.mxu0 0.0
        %575 = vmatprep.subr.mxu0 0.0
        %576 = vmatpush2.msra.mxu0 0.0
        %577 = vmatprep.subr.mxu0 0.0
        %578 = vmatpush2.msra.mxu0 0.0
        %579 = vmatprep.subr.mxu0 0.0
        %580 = vmatpush2.msra.mxu0 0.0
        %581 = vmatprep.subr.mxu0 0.0
        %582 = vmatpush2.msra.mxu0 0.0
        %583 = vmatprep.subr.mxu0 0.0
        %584 = vmatpush2.msra.mxu0 0.0
        %585 = vmatprep.mubr.f32.mxu0 0.0
        %586 = vmatmul.mubr.f32.gmra.mxu0 %v516
        %v587 = vpop.f32.mrf.mxu0
        %v588 = vadd.f32 %v513, %v587
        %v589 = vpop.f32.mrf.mxu0
        %590 = vmatprep.mubr.f32.mxu0 0.0
        %591 = vmatmul.mubr.f32.gmra.mxu0 %v519
        %v592 = vpop.f32.mrf.mxu0
        %v593 = vadd.f32 %v514, %v592
        %v594 = vpop.f32.mrf.mxu0
        %595 = vdwg.mxu0
        %v596 = vmax.f32 %v588, 0.0
        %v597 = vmax.f32 %v593, 0.0
        %v598 = vld [vmem:[%s5] sm:$0xff]
        %v599 = vld [vmem:[%s5 + $0x8] sm:$0xff]
        %v600 = vld [vmem:[%s7 + $0xd0] sm:$0xff]
        %v601 = vld [vmem:[%s7 + $0xd8] sm:$0xff]
        %v603 = vsel %vm505, %v598, 0
        %v606 = vsel %vm505, %v599, 0
        %608 = vmatprep.subr.mxu0 0.0
        %609 = vmatpush1.msra.mxu0 0.0
        %610 = vmatprep.subr.mxu0 0.0
        %611 = vmatpush1.msra.mxu0 0.0
        %612 = vmatprep.subr.mxu0 0.0
        %613 = vmatpush1.msra.mxu0 0.0
        %614 = vmatprep.subr.mxu0 0.0
        %615 = vmatpush1.msra.mxu0 0.0
        %616 = vmatprep.subr.mxu0 0.0
        %617 = vmatpush1.msra.mxu0 0.0
        %618 = vmatprep.subr.mxu0 0.0
        %619 = vmatpush1.msra.mxu0 0.0
        %620 = vmatprep.subr.mxu0 0.0
        %621 = vmatpush1.msra.mxu0 0.0
        %622 = vmatprep.subr.mxu0 0.0
        %623 = vmatpush1.msra.mxu0 0.0
        %624 = vmatprep.subr.mxu0 0.0
        %625 = vmatpush1.msra.mxu0 0.0
        %626 = vmatprep.subr.mxu0 0.0
        %627 = vmatpush1.msra.mxu0 0.0
        %628 = vmatprep.subr.mxu0 0.0
        %629 = vmatpush1.msra.mxu0 0.0
        %630 = vmatprep.subr.mxu0 0.0
        %631 = vmatpush1.msra.mxu0 0.0
        %632 = vmatprep.subr.mxu0 0.0
        %633 = vmatpush1.msra.mxu0 0.0
        %634 = vmatprep.subr.mxu0 0.0
        %635 = vmatpush1.msra.mxu0 0.0
        %636 = vmatprep.subr.mxu0 0.0
        %637 = vmatpush1.msra.mxu0 %v597
        %638 = vmatprep.subr.mxu0 0.0
        %639 = vmatpush1.msra.mxu0 %v596
        %640 = vmatprep.subr.mxu0 0.0
        %641 = vmatpush2.msra.mxu0 0.0
        %642 = vmatprep.subr.mxu0 0.0
        %643 = vmatpush2.msra.mxu0 0.0
        %644 = vmatprep.subr.mxu0 0.0
        %645 = vmatpush2.msra.mxu0 0.0
        %646 = vmatprep.subr.mxu0 0.0
        %647 = vmatpush2.msra.mxu0 0.0
        %648 = vmatprep.subr.mxu0 0.0
        %649 = vmatpush2.msra.mxu0 0.0
        %650 = vmatprep.subr.mxu0 0.0
        %651 = vmatpush2.msra.mxu0 0.0
        %652 = vmatprep.subr.mxu0 0.0
        %653 = vmatpush2.msra.mxu0 0.0
        %654 = vmatprep.subr.mxu0 0.0
        %655 = vmatpush2.msra.mxu0 0.0
        %656 = vmatprep.subr.mxu0 0.0
        %657 = vmatpush2.msra.mxu0 0.0
        %658 = vmatprep.subr.mxu0 0.0
        %659 = vmatpush2.msra.mxu0 0.0
        %660 = vmatprep.subr.mxu0 0.0
        %661 = vmatpush2.msra.mxu0 0.0
        %662 = vmatprep.subr.mxu0 0.0
        %663 = vmatpush2.msra.mxu0 0.0
        %664 = vmatprep.subr.mxu0 0.0
        %665 = vmatpush2.msra.mxu0 0.0
        %666 = vmatprep.subr.mxu0 0.0
        %667 = vmatpush2.msra.mxu0 0.0
        %668 = vmatprep.subr.mxu0 0.0
        %669 = vmatpush2.msra.mxu0 0.0
        %670 = vmatprep.subr.mxu0 0.0
        %671 = vmatpush2.msra.mxu0 0.0
        %672 = vmatprep.mubr.f32.mxu0 0.0
        %673 = vmatmul.mubr.f32.gmra.mxu0 %v603
        %v674 = vpop.f32.mrf.mxu0
        %v675 = vadd.f32 %v600, %v674
        %v676 = vpop.f32.mrf.mxu0
        %677 = vmatprep.mubr.f32.mxu0 0.0
        %678 = vmatmul.mubr.f32.gmra.mxu0 %v606
        %v679 = vpop.f32.mrf.mxu0
        %v680 = vadd.f32 %v601, %v679
        %v681 = vpop.f32.mrf.mxu0
        %682 = vdwg.mxu0
        %v683 = vsub.f32 0.0, %v675
        %v684 = vsub.f32 0.0, %v680
        %v685 = vmul.f32 %v683, 1.442695
        %v686 = vpow.pop %v685
        %v687 = vmul.f32 %v684, 1.442695
        %v688 = vpow.pop %v687
        %v689 = vadd.f32 %v686, 1.0
        %v690 = vadd.f32 %v688, 1.0
        %v691 = vrcp.pop %v689
        %v692 = vrcp.pop %v690
        %694 = vset.pattern.permute.xlu0 0
        %695 = vperm.xlu0 %694, %v691
        %v696 = vpop.permute.xlu0 %695
        %699 = vset.pattern.permute.xlu0 0
        %700 = vperm.xlu0 %699, %v692
        %v701 = vpop.permute.xlu0 %700
        %v703 = vmul.f32 %v504, %v696
        %v704 = vmul.f32 %v504, %v701
        %v705 = vld [vmem:[%s4] sm:$0xff]
        %v706 = vld [vmem:[%s4 + $0x8] sm:$0xff]
        %v707 = vld [vmem:[%s7] sm:$0xff]
        %v708 = vld [vmem:[%s7 + $0x8] sm:$0xff]
        %710 = vset.pattern.permute.xlu0 0
        %711 = vperm.xlu0 %710, %v707
        %v712 = vpop.permute.xlu0 %711
        %715 = vset.pattern.permute.xlu0 0
        %716 = vperm.xlu0 %715, %v708
        %v717 = vpop.permute.xlu0 %716
        %v720 = vsel %vm505, %v705, 0
        %v723 = vsel %vm505, %v706, 0
        %725 = vmatprep.subr.mxu0 0.0
        %726 = vmatpush1.msra.mxu0 0.0
        %727 = vmatprep.subr.mxu0 0.0
        %728 = vmatpush1.msra.mxu0 0.0
        %729 = vmatprep.subr.mxu0 0.0
        %730 = vmatpush1.msra.mxu0 0.0
        %731 = vmatprep.subr.mxu0 0.0
        %732 = vmatpush1.msra.mxu0 0.0
        %733 = vmatprep.subr.mxu0 0.0
        %734 = vmatpush1.msra.mxu0 0.0
        %735 = vmatprep.subr.mxu0 0.0
        %736 = vmatpush1.msra.mxu0 0.0
        %737 = vmatprep.subr.mxu0 0.0
        %738 = vmatpush1.msra.mxu0 0.0
        %739 = vmatprep.subr.mxu0 0.0
        %740 = vmatpush1.msra.mxu0 0.0
        %741 = vmatprep.subr.mxu0 0.0
        %742 = vmatpush1.msra.mxu0 0.0
        %743 = vmatprep.subr.mxu0 0.0
        %744 = vmatpush1.msra.mxu0 0.0
        %745 = vmatprep.subr.mxu0 0.0
        %746 = vmatpush1.msra.mxu0 0.0
        %747 = vmatprep.subr.mxu0 0.0
        %748 = vmatpush1.msra.mxu0 0.0
        %749 = vmatprep.subr.mxu0 0.0
        %750 = vmatpush1.msra.mxu0 0.0
        %751 = vmatprep.subr.mxu0 0.0
        %752 = vmatpush1.msra.mxu0 0.0
        %753 = vmatprep.subr.mxu0 0.0
        %754 = vmatpush1.msra.mxu0 %v704
        %755 = vmatprep.subr.mxu0 0.0
        %756 = vmatpush1.msra.mxu0 %v703
        %757 = vmatprep.subr.mxu0 0.0
        %758 = vmatpush2.msra.mxu0 0.0
        %759 = vmatprep.subr.mxu0 0.0
        %760 = vmatpush2.msra.mxu0 0.0
        %761 = vmatprep.subr.mxu0 0.0
        %762 = vmatpush2.msra.mxu0 0.0
        %763 = vmatprep.subr.mxu0 0.0
        %764 = vmatpush2.msra.mxu0 0.0
        %765 = vmatprep.subr.mxu0 0.0
        %766 = vmatpush2.msra.mxu0 0.0
        %767 = vmatprep.subr.mxu0 0.0
        %768 = vmatpush2.msra.mxu0 0.0
        %769 = vmatprep.subr.mxu0 0.0
        %770 = vmatpush2.msra.mxu0 0.0
        %771 = vmatprep.subr.mxu0 0.0
        %772 = vmatpush2.msra.mxu0 0.0
        %773 = vmatprep.subr.mxu0 0.0
        %774 = vmatpush2.msra.mxu0 0.0
        %775 = vmatprep.subr.mxu0 0.0
        %776 = vmatpush2.msra.mxu0 0.0
        %777 = vmatprep.subr.mxu0 0.0
        %778 = vmatpush2.msra.mxu0 0.0
        %779 = vmatprep.subr.mxu0 0.0
        %780 = vmatpush2.msra.mxu0 0.0
        %781 = vmatprep.subr.mxu0 0.0
        %782 = vmatpush2.msra.mxu0 0.0
        %783 = vmatprep.subr.mxu0 0.0
        %784 = vmatpush2.msra.mxu0 0.0
        %785 = vmatprep.subr.mxu0 0.0
        %786 = vmatpush2.msra.mxu0 0.0
        %787 = vmatprep.subr.mxu0 0.0
        %788 = vmatpush2.msra.mxu0 0.0
        %789 = vmatprep.mubr.f32.mxu0 0.0
        %790 = vmatmul.mubr.f32.gmra.mxu0 %v720
        %v791 = vpop.f32.mrf.mxu0
        %v792 = vadd.f32 %v712, %v791
        %v793 = vpop.f32.mrf.mxu0
        %794 = vmatprep.mubr.f32.mxu0 0.0
        %795 = vmatmul.mubr.f32.gmra.mxu0 %v723
        %v796 = vpop.f32.mrf.mxu0
        %v797 = vadd.f32 %v717, %v796
        %v798 = vpop.f32.mrf.mxu0
        %799 = vdwg.mxu0
        %v800 = vld [vmem:[%s8] sm:$0xf]
        %v801 = vld [vmem:[%s8 + $0x4] sm:$0xf]
        %v802 = vpack.c.bf16 %v797, %v792
        %v805 = vunpack.c.l.b16 %v800
        %v806 = vunpack.c.l.b16 %v801
        %v807 = vpack.c.b16 %v806, %v805
        %v810 = vsel %vm505, %v802, 0
        %812 = vmatprep.subr.bf16.mxu0 0
        %813 = vmatpush1.bf16.msra.mxu0 0
        %814 = vmatprep.subr.bf16.mxu0 0
        %815 = vmatpush1.bf16.msra.mxu0 0
        %816 = vmatprep.subr.bf16.mxu0 0
        %817 = vmatpush1.bf16.msra.mxu0 0
        %818 = vmatprep.subr.bf16.mxu0 0
        %819 = vmatpush1.bf16.msra.mxu0 0
        %820 = vmatprep.subr.bf16.mxu0 0
        %821 = vmatpush1.bf16.msra.mxu0 0
        %822 = vmatprep.subr.bf16.mxu0 0
        %823 = vmatpush1.bf16.msra.mxu0 0
        %824 = vmatprep.subr.bf16.mxu0 0
        %825 = vmatpush1.bf16.msra.mxu0 0
        %826 = vmatprep.subr.bf16.mxu0 0
        %827 = vmatpush1.bf16.msra.mxu0 %v807
        %828 = vmatprep.subr.bf16.mxu0 0
        %829 = vmatpush2.bf16.msra.mxu0 0
        %830 = vmatprep.subr.bf16.mxu0 0
        %831 = vmatpush2.bf16.msra.mxu0 0
        %832 = vmatprep.subr.bf16.mxu0 0
        %833 = vmatpush2.bf16.msra.mxu0 0
        %834 = vmatprep.subr.bf16.mxu0 0
        %835 = vmatpush2.bf16.msra.mxu0 0
        %836 = vmatprep.subr.bf16.mxu0 0
        %837 = vmatpush2.bf16.msra.mxu0 0
        %838 = vmatprep.subr.bf16.mxu0 0
        %839 = vmatpush2.bf16.msra.mxu0 0
        %840 = vmatprep.subr.bf16.mxu0 0
        %841 = vmatpush2.bf16.msra.mxu0 0
        %842 = vmatprep.subr.bf16.mxu0 0
        %843 = vmatpush2.bf16.msra.mxu0 0
        %844 = vmatprep.mubr.bf16.mxu0 0
        %845 = vmatmul.mubr.bf16.gmra.mxu0 %v810
        %v846 = vpop.f32.mrf.mxu0
        %v847 = vadd.f32 0.0, %v846
        %v848 = vpop.f32.mrf.mxu0
        %v849 = vpop.f32.mrf.mxu0
        %v850 = vadd.f32 0.0, %v849
        %v851 = vpop.f32.mrf.mxu0
        %852 = vdwg.mxu0
        %v853 = vadd.f32 %v847, %v503
        %v854 = vadd.f32 %v850, %v503
        %vm855 = vcmask 523264
        %v856 = vsel %vm855, %v853, 0.0
        %857 = vadd.xlane.f32.xlu0 %v856
        %v858 = vpop.xlane.xlu0 %857
        %v859 = vsel %vm855, %v854, 0.0
        %860 = vadd.xlane.f32.xlu0 %v859
        %v861 = vpop.xlane.xlu0 %860
        %v862 = vrcp.pop 64.0
        %v863 = vmul.f32 %v858, %v862
        %v864 = vmul.f32 %v861, %v862
        %v865 = vld [vmem:[%s4 + $0xd0] sm:$0xff]
        %v866 = vld [vmem:[%s4 + $0xd8] sm:$0xff]
        %v867 = vld [vmem:[%s7 + $0x90] sm:$0xff]
        %v868 = vld [vmem:[%s7 + $0x98] sm:$0xff]
        %v870 = vsel %vm505, %v865, 0
        %v873 = vsel %vm505, %v866, 0
        %875 = vmatprep.subr.mxu0 0.0
        %876 = vmatpush1.msra.mxu0 0.0
        %877 = vmatprep.subr.mxu0 0.0
        %878 = vmatpush1.msra.mxu0 0.0
        %879 = vmatprep.subr.mxu0 0.0
        %880 = vmatpush1.msra.mxu0 0.0
        %881 = vmatprep.subr.mxu0 0.0
        %882 = vmatpush1.msra.mxu0 0.0
        %883 = vmatprep.subr.mxu0 0.0
        %884 = vmatpush1.msra.mxu0 0.0
        %885 = vmatprep.subr.mxu0 0.0
        %886 = vmatpush1.msra.mxu0 0.0
        %887 = vmatprep.subr.mxu0 0.0
        %888 = vmatpush1.msra.mxu0 0.0
        %889 = vmatprep.subr.mxu0 0.0
        %890 = vmatpush1.msra.mxu0 0.0
        %891 = vmatprep.subr.mxu0 0.0
        %892 = vmatpush1.msra.mxu0 0.0
        %893 = vmatprep.subr.mxu0 0.0
        %894 = vmatpush1.msra.mxu0 0.0
        %895 = vmatprep.subr.mxu0 0.0
        %896 = vmatpush1.msra.mxu0 0.0
        %897 = vmatprep.subr.mxu0 0.0
        %898 = vmatpush1.msra.mxu0 0.0
        %899 = vmatprep.subr.mxu0 0.0
        %900 = vmatpush1.msra.mxu0 0.0
        %901 = vmatprep.subr.mxu0 0.0
        %902 = vmatpush1.msra.mxu0 0.0
        %903 = vmatprep.subr.mxu0 0.0
        %904 = vmatpush1.msra.mxu0 %v864
        %905 = vmatprep.subr.mxu0 0.0
        %906 = vmatpush1.msra.mxu0 %v863
        %907 = vmatprep.subr.mxu0 0.0
        %908 = vmatpush2.msra.mxu0 0.0
        %909 = vmatprep.subr.mxu0 0.0
        %910 = vmatpush2.msra.mxu0 0.0
        %911 = vmatprep.subr.mxu0 0.0
        %912 = vmatpush2.msra.mxu0 0.0
        %913 = vmatprep.subr.mxu0 0.0
        %914 = vmatpush2.msra.mxu0 0.0
        %915 = vmatprep.subr.mxu0 0.0
        %916 = vmatpush2.msra.mxu0 0.0
        %917 = vmatprep.subr.mxu0 0.0
        %918 = vmatpush2.msra.mxu0 0.0
        %919 = vmatprep.subr.mxu0 0.0
        %920 = vmatpush2.msra.mxu0 0.0
        %921 = vmatprep.subr.mxu0 0.0
        %922 = vmatpush2.msra.mxu0 0.0
        %923 = vmatprep.subr.mxu0 0.0
        %924 = vmatpush2.msra.mxu0 0.0
        %925 = vmatprep.subr.mxu0 0.0
        %926 = vmatpush2.msra.mxu0 0.0
        %927 = vmatprep.subr.mxu0 0.0
        %928 = vmatpush2.msra.mxu0 0.0
        %929 = vmatprep.subr.mxu0 0.0
        %930 = vmatpush2.msra.mxu0 0.0
        %931 = vmatprep.subr.mxu0 0.0
        %932 = vmatpush2.msra.mxu0 0.0
        %933 = vmatprep.subr.mxu0 0.0
        %934 = vmatpush2.msra.mxu0 0.0
        %935 = vmatprep.subr.mxu0 0.0
        %936 = vmatpush2.msra.mxu0 0.0
        %937 = vmatprep.subr.mxu0 0.0
        %938 = vmatpush2.msra.mxu0 0.0
        %939 = vmatprep.mubr.f32.mxu0 0.0
        %940 = vmatmul.mubr.f32.gmra.mxu0 %v870
        %v941 = vpop.f32.mrf.mxu0
        %v942 = vadd.f32 %v867, %v941
        %v943 = vpop.f32.mrf.mxu0
        %944 = vmatprep.mubr.f32.mxu0 0.0
        %945 = vmatmul.mubr.f32.gmra.mxu0 %v873
        %v946 = vpop.f32.mrf.mxu0
        %v947 = vadd.f32 %v868, %v946
        %v948 = vpop.f32.mrf.mxu0
        %949 = vdwg.mxu0
        %v950 = vmax.f32 %v942, 0.0
        %v951 = vmax.f32 %v947, 0.0
        %v952 = vld [vmem:[%s5 + $0x10] sm:$0xff]
        %v953 = vld [vmem:[%s5 + $0x18] sm:$0xff]
        %v954 = vld [vmem:[%s7 + $0xe0] sm:$0xff]
        %v955 = vld [vmem:[%s7 + $0xe8] sm:$0xff]
        %v957 = vsel %vm505, %v952, 0
        %v960 = vsel %vm505, %v953, 0
        %962 = vmatprep.subr.mxu0 0.0
        %963 = vmatpush1.msra.mxu0 0.0
        %964 = vmatprep.subr.mxu0 0.0
        %965 = vmatpush1.msra.mxu0 0.0
        %966 = vmatprep.subr.mxu0 0.0
        %967 = vmatpush1.msra.mxu0 0.0
        %968 = vmatprep.subr.mxu0 0.0
        %969 = vmatpush1.msra.mxu0 0.0
        %970 = vmatprep.subr.mxu0 0.0
        %971 = vmatpush1.msra.mxu0 0.0
        %972 = vmatprep.subr.mxu0 0.0
        %973 = vmatpush1.msra.mxu0 0.0
        %974 = vmatprep.subr.mxu0 0.0
        %975 = vmatpush1.msra.mxu0 0.0
        %976 = vmatprep.subr.mxu0 0.0
        %977 = vmatpush1.msra.mxu0 0.0
        %978 = vmatprep.subr.mxu0 0.0
        %979 = vmatpush1.msra.mxu0 0.0
        %980 = vmatprep.subr.mxu0 0.0
        %981 = vmatpush1.msra.mxu0 0.0
        %982 = vmatprep.subr.mxu0 0.0
        %983 = vmatpush1.msra.mxu0 0.0
        %984 = vmatprep.subr.mxu0 0.0
        %985 = vmatpush1.msra.mxu0 0.0
        %986 = vmatprep.subr.mxu0 0.0
        %987 = vmatpush1.msra.mxu0 0.0
        %988 = vmatprep.subr.mxu0 0.0
        %989 = vmatpush1.msra.mxu0 0.0
        %990 = vmatprep.subr.mxu0 0.0
        %991 = vmatpush1.msra.mxu0 %v951
        %992 = vmatprep.subr.mxu0 0.0
        %993 = vmatpush1.msra.mxu0 %v950
        %994 = vmatprep.subr.mxu0 0.0
        %995 = vmatpush2.msra.mxu0 0.0
        %996 = vmatprep.subr.mxu0 0.0
        %997 = vmatpush2.msra.mxu0 0.0
        %998 = vmatprep.subr.mxu0 0.0
        %999 = vmatpush2.msra.mxu0 0.0
        %1000 = vmatprep.subr.mxu0 0.0
        %1001 = vmatpush2.msra.mxu0 0.0
        %1002 = vmatprep.subr.mxu0 0.0
        %1003 = vmatpush2.msra.mxu0 0.0
        %1004 = vmatprep.subr.mxu0 0.0
        %1005 = vmatpush2.msra.mxu0 0.0
        %1006 = vmatprep.subr.mxu0 0.0
        %1007 = vmatpush2.msra.mxu0 0.0
        %1008 = vmatprep.subr.mxu0 0.0
        %1009 = vmatpush2.msra.mxu0 0.0
        %1010 = vmatprep.subr.mxu0 0.0
        %1011 = vmatpush2.msra.mxu0 0.0
        %1012 = vmatprep.subr.mxu0 0.0
        %1013 = vmatpush2.msra.mxu0 0.0
        %1014 = vmatprep.subr.mxu0 0.0
        %1015 = vmatpush2.msra.mxu0 0.0
        %1016 = vmatprep.subr.mxu0 0.0
        %1017 = vmatpush2.msra.mxu0 0.0
        %1018 = vmatprep.subr.mxu0 0.0
        %1019 = vmatpush2.msra.mxu0 0.0
        %1020 = vmatprep.subr.mxu0 0.0
        %1021 = vmatpush2.msra.mxu0 0.0
        %1022 = vmatprep.subr.mxu0 0.0
        %1023 = vmatpush2.msra.mxu0 0.0
        %1024 = vmatprep.subr.mxu0 0.0
        %1025 = vmatpush2.msra.mxu0 0.0
        %1026 = vmatprep.mubr.f32.mxu0 0.0
        %1027 = vmatmul.mubr.f32.gmra.mxu0 %v957
        %v1028 = vpop.f32.mrf.mxu0
        %v1029 = vadd.f32 %v954, %v1028
        %v1030 = vpop.f32.mrf.mxu0
        %1031 = vmatprep.mubr.f32.mxu0 0.0
        %1032 = vmatmul.mubr.f32.gmra.mxu0 %v960
        %v1033 = vpop.f32.mrf.mxu0
        %v1034 = vadd.f32 %v955, %v1033
        %v1035 = vpop.f32.mrf.mxu0
        %1036 = vdwg.mxu0
        %v1037 = vsub.f32 0.0, %v1029
        %v1038 = vsub.f32 0.0, %v1034
        %v1039 = vmul.f32 %v1037, 1.442695
        %v1040 = vpow.pop %v1039
        %v1041 = vmul.f32 %v1038, 1.442695
        %v1042 = vpow.pop %v1041
        %v1043 = vadd.f32 %v1040, 1.0
        %v1044 = vadd.f32 %v1042, 1.0
        %v1045 = vrcp.pop %v1043
        %v1046 = vrcp.pop %v1044
        %1048 = vset.pattern.permute.xlu0 0
        %1049 = vperm.xlu0 %1048, %v1045
        %v1050 = vpop.permute.xlu0 %1049
        %1053 = vset.pattern.permute.xlu0 0
        %1054 = vperm.xlu0 %1053, %v1046
        %v1055 = vpop.permute.xlu0 %1054
        %v1057 = vmul.f32 %v853, %v1050
        %v1058 = vmul.f32 %v854, %v1055
        %v1059 = vld [vmem:[%s4 + $0x40] sm:$0xff]
        %v1060 = vld [vmem:[%s4 + $0x48] sm:$0xff]
        %v1061 = vld [vmem:[%s4 + $0x50] sm:$0xff]
        %v1062 = vld [vmem:[%s4 + $0x58] sm:$0xff]
        %v1064 = vsel %vm505, %v1061, 0
        %v1067 = vsel %vm505, %v1062, 0
        %1069 = vmatprep.subr.mxu0 0.0
        %1070 = vmatpush1.msra.mxu0 0.0
        %1071 = vmatprep.subr.mxu0 0.0
        %1072 = vmatpush1.msra.mxu0 0.0
        %1073 = vmatprep.subr.mxu0 0.0
        %1074 = vmatpush1.msra.mxu0 0.0
        %1075 = vmatprep.subr.mxu0 0.0
        %1076 = vmatpush1.msra.mxu0 0.0
        %1077 = vmatprep.subr.mxu0 0.0
        %1078 = vmatpush1.msra.mxu0 0.0
        %1079 = vmatprep.subr.mxu0 0.0
        %1080 = vmatpush1.msra.mxu0 0.0
        %1081 = vmatprep.subr.mxu0 0.0
        %1082 = vmatpush1.msra.mxu0 0.0
        %1083 = vmatprep.subr.mxu0 0.0
        %1084 = vmatpush1.msra.mxu0 0.0
        %1085 = vmatprep.subr.mxu0 0.0
        %1086 = vmatpush1.msra.mxu0 0.0
        %1087 = vmatprep.subr.mxu0 0.0
        %1088 = vmatpush1.msra.mxu0 0.0
        %1089 = vmatprep.subr.mxu0 0.0
        %1090 = vmatpush1.msra.mxu0 0.0
        %1091 = vmatprep.subr.mxu0 0.0
        %1092 = vmatpush1.msra.mxu0 0.0
        %1093 = vmatprep.subr.mxu0 0.0
        %1094 = vmatpush1.msra.mxu0 0.0
        %1095 = vmatprep.subr.mxu0 0.0
        %1096 = vmatpush1.msra.mxu0 0.0
        %1097 = vmatprep.subr.mxu0 0.0
        %1098 = vmatpush1.msra.mxu0 %v850
        %1099 = vmatprep.subr.mxu0 0.0
        %1100 = vmatpush1.msra.mxu0 %v847
        %1101 = vmatprep.subr.mxu0 0.0
        %1102 = vmatpush2.msra.mxu0 0.0
        %1103 = vmatprep.subr.mxu0 0.0
        %1104 = vmatpush2.msra.mxu0 0.0
        %1105 = vmatprep.subr.mxu0 0.0
        %1106 = vmatpush2.msra.mxu0 0.0
        %1107 = vmatprep.subr.mxu0 0.0
        %1108 = vmatpush2.msra.mxu0 0.0
        %1109 = vmatprep.subr.mxu0 0.0
        %1110 = vmatpush2.msra.mxu0 0.0
        %1111 = vmatprep.subr.mxu0 0.0
        %1112 = vmatpush2.msra.mxu0 0.0
        %1113 = vmatprep.subr.mxu0 0.0
        %1114 = vmatpush2.msra.mxu0 0.0
        %1115 = vmatprep.subr.mxu0 0.0
        %1116 = vmatpush2.msra.mxu0 0.0
        %1117 = vmatprep.subr.mxu0 0.0
        %1118 = vmatpush2.msra.mxu0 0.0
        %1119 = vmatprep.subr.mxu0 0.0
        %1120 = vmatpush2.msra.mxu0 0.0
        %1121 = vmatprep.subr.mxu0 0.0
        %1122 = vmatpush2.msra.mxu0 0.0
        %1123 = vmatprep.subr.mxu0 0.0
        %1124 = vmatpush2.msra.mxu0 0.0
        %1125 = vmatprep.subr.mxu0 0.0
        %1126 = vmatpush2.msra.mxu0 0.0
        %1127 = vmatprep.subr.mxu0 0.0
        %1128 = vmatpush2.msra.mxu0 0.0
        %1129 = vmatprep.subr.mxu0 0.0
        %1130 = vmatpush2.msra.mxu0 0.0
        %1131 = vmatprep.subr.mxu0 0.0
        %1132 = vmatpush2.msra.mxu0 0.0
        %1133 = vmatprep.mubr.f32.mxu0 0.0
        %1134 = vmatmul.mubr.f32.gmra.mxu0 %v1064
        %v1135 = vpop.f32.mrf.mxu0
        %v1136 = vadd.f32 0.0, %v1135
        %v1137 = vpop.f32.mrf.mxu0
        %1138 = vmatprep.mubr.f32.mxu0 0.0
        %1139 = vmatmul.mubr.f32.gmra.mxu0 %v1067
        %v1140 = vpop.f32.mrf.mxu0
        %v1141 = vadd.f32 0.0, %v1140
        %v1142 = vpop.f32.mrf.mxu0
        %1143 = vdwg.mxu0
        %v1145 = vsel %vm505, %v1059, 0
        %v1148 = vsel %vm505, %v1060, 0
        %1150 = vmatprep.subr.mxu0 0.0
        %1151 = vmatpush1.msra.mxu0 0.0
        %1152 = vmatprep.subr.mxu0 0.0
        %1153 = vmatpush1.msra.mxu0 0.0
        %1154 = vmatprep.subr.mxu0 0.0
        %1155 = vmatpush1.msra.mxu0 0.0
        %1156 = vmatprep.subr.mxu0 0.0
        %1157 = vmatpush1.msra.mxu0 0.0
        %1158 = vmatprep.subr.mxu0 0.0
        %1159 = vmatpush1.msra.mxu0 0.0
        %1160 = vmatprep.subr.mxu0 0.0
        %1161 = vmatpush1.msra.mxu0 0.0
        %1162 = vmatprep.subr.mxu0 0.0
        %1163 = vmatpush1.msra.mxu0 0.0
        %1164 = vmatprep.subr.mxu0 0.0
        %1165 = vmatpush1.msra.mxu0 0.0
        %1166 = vmatprep.subr.mxu0 0.0
        %1167 = vmatpush1.msra.mxu0 0.0
        %1168 = vmatprep.subr.mxu0 0.0
        %1169 = vmatpush1.msra.mxu0 0.0
        %1170 = vmatprep.subr.mxu0 0.0
        %1171 = vmatpush1.msra.mxu0 0.0
        %1172 = vmatprep.subr.mxu0 0.0
        %1173 = vmatpush1.msra.mxu0 0.0
        %1174 = vmatprep.subr.mxu0 0.0
        %1175 = vmatpush1.msra.mxu0 0.0
        %1176 = vmatprep.subr.mxu0 0.0
        %1177 = vmatpush1.msra.mxu0 0.0
        %1178 = vmatprep.subr.mxu0 0.0
        %1179 = vmatpush1.msra.mxu0 %v1058
        %1180 = vmatprep.subr.mxu0 0.0
        %1181 = vmatpush1.msra.mxu0 %v1057
        %1182 = vmatprep.subr.mxu0 0.0
        %1183 = vmatpush2.msra.mxu0 0.0
        %1184 = vmatprep.subr.mxu0 0.0
        %1185 = vmatpush2.msra.mxu0 0.0
        %1186 = vmatprep.subr.mxu0 0.0
        %1187 = vmatpush2.msra.mxu0 0.0
        %1188 = vmatprep.subr.mxu0 0.0
        %1189 = vmatpush2.msra.mxu0 0.0
        %1190 = vmatprep.subr.mxu0 0.0
        %1191 = vmatpush2.msra.mxu0 0.0
        %1192 = vmatprep.subr.mxu0 0.0
        %1193 = vmatpush2.msra.mxu0 0.0
        %1194 = vmatprep.subr.mxu0 0.0
        %1195 = vmatpush2.msra.mxu0 0.0
        %1196 = vmatprep.subr.mxu0 0.0
        %1197 = vmatpush2.msra.mxu0 0.0
        %1198 = vmatprep.subr.mxu0 0.0
        %1199 = vmatpush2.msra.mxu0 0.0
        %1200 = vmatprep.subr.mxu0 0.0
        %1201 = vmatpush2.msra.mxu0 0.0
        %1202 = vmatprep.subr.mxu0 0.0
        %1203 = vmatpush2.msra.mxu0 0.0
        %1204 = vmatprep.subr.mxu0 0.0
        %1205 = vmatpush2.msra.mxu0 0.0
        %1206 = vmatprep.subr.mxu0 0.0
        %1207 = vmatpush2.msra.mxu0 0.0
        %1208 = vmatprep.subr.mxu0 0.0
        %1209 = vmatpush2.msra.mxu0 0.0
        %1210 = vmatprep.subr.mxu0 0.0
        %1211 = vmatpush2.msra.mxu0 0.0
        %1212 = vmatprep.subr.mxu0 0.0
        %1213 = vmatpush2.msra.mxu0 0.0
        %1214 = vmatprep.mubr.f32.mxu0 0.0
        %1215 = vmatmul.mubr.f32.gmra.mxu0 %v1145
        %v1216 = vpop.f32.mrf.mxu0
        %v1217 = vadd.f32 %v1136, %v1216
        %v1218 = vpop.f32.mrf.mxu0
        %1219 = vmatprep.mubr.f32.mxu0 0.0
        %1220 = vmatmul.mubr.f32.gmra.mxu0 %v1148
        %v1221 = vpop.f32.mrf.mxu0
        %v1222 = vadd.f32 %v1141, %v1221
        %v1223 = vpop.f32.mrf.mxu0
        %1224 = vdwg.mxu0
        %v1225 = vld [vmem:[%s7 + $0x40] sm:$0xff]
        %v1226 = vld [vmem:[%s7 + $0x48] sm:$0xff]
        %1228 = vset.pattern.permute.xlu0 0
        %1229 = vperm.xlu0 %1228, %v1225
        %v1230 = vpop.permute.xlu0 %1229
        %1233 = vset.pattern.permute.xlu0 0
        %1234 = vperm.xlu0 %1233, %v1226
        %v1235 = vpop.permute.xlu0 %1234
        %v1237 = vadd.f32 %v1217, %v1230
        %v1238 = vadd.f32 %v1222, %v1235
        %v1239 = vsel %vm855, %v1237, 0.0
        %1240 = vadd.xlane.f32.xlu0 %v1239
        %v1241 = vpop.xlane.xlu0 %1240
        %v1242 = vsel %vm855, %v1238, 0.0
        %1243 = vadd.xlane.f32.xlu0 %v1242
        %v1244 = vpop.xlane.xlu0 %1243
        %v1245 = vmul.f32 %v1241, %v862
        %v1246 = vmul.f32 %v1244, %v862
        %v1247 = vld [vmem:[%s4 + $0x100] sm:$0xff]
        %v1248 = vld [vmem:[%s4 + $0x108] sm:$0xff]
        %v1249 = vld [vmem:[%s7 + $0xc0] sm:$0xff]
        %v1250 = vld [vmem:[%s7 + $0xc8] sm:$0xff]
        %v1252 = vsel %vm505, %v1247, 0
        %v1255 = vsel %vm505, %v1248, 0
        %1257 = vmatprep.subr.mxu0 0.0
        %1258 = vmatpush1.msra.mxu0 0.0
        %1259 = vmatprep.subr.mxu0 0.0
        %1260 = vmatpush1.msra.mxu0 0.0
        %1261 = vmatprep.subr.mxu0 0.0
        %1262 = vmatpush1.msra.mxu0 0.0
        %1263 = vmatprep.subr.mxu0 0.0
        %1264 = vmatpush1.msra.mxu0 0.0
        %1265 = vmatprep.subr.mxu0 0.0
        %1266 = vmatpush1.msra.mxu0 0.0
        %1267 = vmatprep.subr.mxu0 0.0
        %1268 = vmatpush1.msra.mxu0 0.0
        %1269 = vmatprep.subr.mxu0 0.0
        %1270 = vmatpush1.msra.mxu0 0.0
        %1271 = vmatprep.subr.mxu0 0.0
        %1272 = vmatpush1.msra.mxu0 0.0
        %1273 = vmatprep.subr.mxu0 0.0
        %1274 = vmatpush1.msra.mxu0 0.0
        %1275 = vmatprep.subr.mxu0 0.0
        %1276 = vmatpush1.msra.mxu0 0.0
        %1277 = vmatprep.subr.mxu0 0.0
        %1278 = vmatpush1.msra.mxu0 0.0
        %1279 = vmatprep.subr.mxu0 0.0
        %1280 = vmatpush1.msra.mxu0 0.0
        %1281 = vmatprep.subr.mxu0 0.0
        %1282 = vmatpush1.msra.mxu0 0.0
        %1283 = vmatprep.subr.mxu0 0.0
        %1284 = vmatpush1.msra.mxu0 0.0
        %1285 = vmatprep.subr.mxu0 0.0
        %1286 = vmatpush1.msra.mxu0 %v1246
        %1287 = vmatprep.subr.mxu0 0.0
        %1288 = vmatpush1.msra.mxu0 %v1245
        %1289 = vmatprep.subr.mxu0 0.0
        %1290 = vmatpush2.msra.mxu0 0.0
        %1291 = vmatprep.subr.mxu0 0.0
        %1292 = vmatpush2.msra.mxu0 0.0
        %1293 = vmatprep.subr.mxu0 0.0
        %1294 = vmatpush2.msra.mxu0 0.0
        %1295 = vmatprep.subr.mxu0 0.0
        %1296 = vmatpush2.msra.mxu0 0.0
        %1297 = vmatprep.subr.mxu0 0.0
        %1298 = vmatpush2.msra.mxu0 0.0
        %1299 = vmatprep.subr.mxu0 0.0
        %1300 = vmatpush2.msra.mxu0 0.0
        %1301 = vmatprep.subr.mxu0 0.0
        %1302 = vmatpush2.msra.mxu0 0.0
        %1303 = vmatprep.subr.mxu0 0.0
        %1304 = vmatpush2.msra.mxu0 0.0
        %1305 = vmatprep.subr.mxu0 0.0
        %1306 = vmatpush2.msra.mxu0 0.0
        %1307 = vmatprep.subr.mxu0 0.0
        %1308 = vmatpush2.msra.mxu0 0.0
        %1309 = vmatprep.subr.mxu0 0.0
        %1310 = vmatpush2.msra.mxu0 0.0
        %1311 = vmatprep.subr.mxu0 0.0
        %1312 = vmatpush2.msra.mxu0 0.0
        %1313 = vmatprep.subr.mxu0 0.0
        %1314 = vmatpush2.msra.mxu0 0.0
        %1315 = vmatprep.subr.mxu0 0.0
        %1316 = vmatpush2.msra.mxu0 0.0
        %1317 = vmatprep.subr.mxu0 0.0
        %1318 = vmatpush2.msra.mxu0 0.0
        %1319 = vmatprep.subr.mxu0 0.0
        %1320 = vmatpush2.msra.mxu0 0.0
        %1321 = vmatprep.mubr.f32.mxu0 0.0
        %1322 = vmatmul.mubr.f32.gmra.mxu0 %v1252
        %v1323 = vpop.f32.mrf.mxu0
        %v1324 = vadd.f32 %v1249, %v1323
        %v1325 = vpop.f32.mrf.mxu0
        %1326 = vmatprep.mubr.f32.mxu0 0.0
        %1327 = vmatmul.mubr.f32.gmra.mxu0 %v1255
        %v1328 = vpop.f32.mrf.mxu0
        %v1329 = vadd.f32 %v1250, %v1328
        %v1330 = vpop.f32.mrf.mxu0
        %1331 = vdwg.mxu0
        %v1332 = vmax.f32 %v1324, 0.0
        %v1333 = vmax.f32 %v1329, 0.0
        %v1334 = vld [vmem:[%s5 + $0x40] sm:$0xff]
        %v1335 = vld [vmem:[%s5 + $0x48] sm:$0xff]
        %v1336 = vld [vmem:[%s7 + $0x110] sm:$0xff]
        %v1337 = vld [vmem:[%s7 + $0x118] sm:$0xff]
        %v1339 = vsel %vm505, %v1334, 0
        %v1342 = vsel %vm505, %v1335, 0
        %1344 = vmatprep.subr.mxu0 0.0
        %1345 = vmatpush1.msra.mxu0 0.0
        %1346 = vmatprep.subr.mxu0 0.0
        %1347 = vmatpush1.msra.mxu0 0.0
        %1348 = vmatprep.subr.mxu0 0.0
        %1349 = vmatpush1.msra.mxu0 0.0
        %1350 = vmatprep.subr.mxu0 0.0
        %1351 = vmatpush1.msra.mxu0 0.0
        %1352 = vmatprep.subr.mxu0 0.0
        %1353 = vmatpush1.msra.mxu0 0.0
        %1354 = vmatprep.subr.mxu0 0.0
        %1355 = vmatpush1.msra.mxu0 0.0
        %1356 = vmatprep.subr.mxu0 0.0
        %1357 = vmatpush1.msra.mxu0 0.0
        %1358 = vmatprep.subr.mxu0 0.0
        %1359 = vmatpush1.msra.mxu0 0.0
        %1360 = vmatprep.subr.mxu0 0.0
        %1361 = vmatpush1.msra.mxu0 0.0
        %1362 = vmatprep.subr.mxu0 0.0
        %1363 = vmatpush1.msra.mxu0 0.0
        %1364 = vmatprep.subr.mxu0 0.0
        %1365 = vmatpush1.msra.mxu0 0.0
        %1366 = vmatprep.subr.mxu0 0.0
        %1367 = vmatpush1.msra.mxu0 0.0
        %1368 = vmatprep.subr.mxu0 0.0
        %1369 = vmatpush1.msra.mxu0 0.0
        %1370 = vmatprep.subr.mxu0 0.0
        %1371 = vmatpush1.msra.mxu0 0.0
        %1372 = vmatprep.subr.mxu0 0.0
        %1373 = vmatpush1.msra.mxu0 %v1333
        %1374 = vmatprep.subr.mxu0 0.0
        %1375 = vmatpush1.msra.mxu0 %v1332
        %1376 = vmatprep.subr.mxu0 0.0
        %1377 = vmatpush2.msra.mxu0 0.0
        %1378 = vmatprep.subr.mxu0 0.0
        %1379 = vmatpush2.msra.mxu0 0.0
        %1380 = vmatprep.subr.mxu0 0.0
        %1381 = vmatpush2.msra.mxu0 0.0
        %1382 = vmatprep.subr.mxu0 0.0
        %1383 = vmatpush2.msra.mxu0 0.0
        %1384 = vmatprep.subr.mxu0 0.0
        %1385 = vmatpush2.msra.mxu0 0.0
        %1386 = vmatprep.subr.mxu0 0.0
        %1387 = vmatpush2.msra.mxu0 0.0
        %1388 = vmatprep.subr.mxu0 0.0
        %1389 = vmatpush2.msra.mxu0 0.0
        %1390 = vmatprep.subr.mxu0 0.0
        %1391 = vmatpush2.msra.mxu0 0.0
        %1392 = vmatprep.subr.mxu0 0.0
        %1393 = vmatpush2.msra.mxu0 0.0
        %1394 = vmatprep.subr.mxu0 0.0
        %1395 = vmatpush2.msra.mxu0 0.0
        %1396 = vmatprep.subr.mxu0 0.0
        %1397 = vmatpush2.msra.mxu0 0.0
        %1398 = vmatprep.subr.mxu0 0.0
        %1399 = vmatpush2.msra.mxu0 0.0
        %1400 = vmatprep.subr.mxu0 0.0
        %1401 = vmatpush2.msra.mxu0 0.0
        %1402 = vmatprep.subr.mxu0 0.0
        %1403 = vmatpush2.msra.mxu0 0.0
        %1404 = vmatprep.subr.mxu0 0.0
        %1405 = vmatpush2.msra.mxu0 0.0
        %1406 = vmatprep.subr.mxu0 0.0
        %1407 = vmatpush2.msra.mxu0 0.0
        %1408 = vmatprep.mubr.f32.mxu0 0.0
        %1409 = vmatmul.mubr.f32.gmra.mxu0 %v1339
        %v1410 = vpop.f32.mrf.mxu0
        %v1411 = vadd.f32 %v1336, %v1410
        %v1412 = vpop.f32.mrf.mxu0
        %1413 = vmatprep.mubr.f32.mxu0 0.0
        %1414 = vmatmul.mubr.f32.gmra.mxu0 %v1342
        %v1415 = vpop.f32.mrf.mxu0
        %v1416 = vadd.f32 %v1337, %v1415
        %v1417 = vpop.f32.mrf.mxu0
        %1418 = vdwg.mxu0
        %v1419 = vsub.f32 0.0, %v1411
        %v1420 = vsub.f32 0.0, %v1416
        %v1421 = vmul.f32 %v1419, 1.442695
        %v1422 = vpow.pop %v1421
        %v1423 = vmul.f32 %v1420, 1.442695
        %v1424 = vpow.pop %v1423
        %v1425 = vadd.f32 %v1422, 1.0
        %v1426 = vadd.f32 %v1424, 1.0
        %v1427 = vrcp.pop %v1425
        %v1428 = vrcp.pop %v1426
        %1430 = vset.pattern.permute.xlu0 0
        %1431 = vperm.xlu0 %1430, %v1427
        %v1432 = vpop.permute.xlu0 %1431
        %1435 = vset.pattern.permute.xlu0 0
        %1436 = vperm.xlu0 %1435, %v1428
        %v1437 = vpop.permute.xlu0 %1436
        %v1439 = vmul.f32 %v1237, %v1432
        %v1440 = vmul.f32 %v1238, %v1437
        %v1441 = vld [vmem:[%s4 + $0x10] sm:$0xff]
        %v1442 = vld [vmem:[%s4 + $0x18] sm:$0xff]
        %v1443 = vld [vmem:[%s7 + $0x10] sm:$0xff]
        %v1444 = vld [vmem:[%s7 + $0x18] sm:$0xff]
        %1446 = vset.pattern.permute.xlu0 0
        %1447 = vperm.xlu0 %1446, %v1443
        %v1448 = vpop.permute.xlu0 %1447
        %1451 = vset.pattern.permute.xlu0 0
        %1452 = vperm.xlu0 %1451, %v1444
        %v1453 = vpop.permute.xlu0 %1452
        %v1456 = vsel %vm505, %v1441, 0
        %v1459 = vsel %vm505, %v1442, 0
        %1461 = vmatprep.subr.mxu0 0.0
        %1462 = vmatpush1.msra.mxu0 0.0
        %1463 = vmatprep.subr.mxu0 0.0
        %1464 = vmatpush1.msra.mxu0 0.0
        %1465 = vmatprep.subr.mxu0 0.0
        %1466 = vmatpush1.msra.mxu0 0.0
        %1467 = vmatprep.subr.mxu0 0.0
        %1468 = vmatpush1.msra.mxu0 0.0
        %1469 = vmatprep.subr.mxu0 0.0
        %1470 = vmatpush1.msra.mxu0 0.0
        %1471 = vmatprep.subr.mxu0 0.0
        %1472 = vmatpush1.msra.mxu0 0.0
        %1473 = vmatprep.subr.mxu0 0.0
        %1474 = vmatpush1.msra.mxu0 0.0
        %1475 = vmatprep.subr.mxu0 0.0
        %1476 = vmatpush1.msra.mxu0 0.0
        %1477 = vmatprep.subr.mxu0 0.0
        %1478 = vmatpush1.msra.mxu0 0.0
        %1479 = vmatprep.subr.mxu0 0.0
        %1480 = vmatpush1.msra.mxu0 0.0
        %1481 = vmatprep.subr.mxu0 0.0
        %1482 = vmatpush1.msra.mxu0 0.0
        %1483 = vmatprep.subr.mxu0 0.0
        %1484 = vmatpush1.msra.mxu0 0.0
        %1485 = vmatprep.subr.mxu0 0.0
        %1486 = vmatpush1.msra.mxu0 0.0
        %1487 = vmatprep.subr.mxu0 0.0
        %1488 = vmatpush1.msra.mxu0 0.0
        %1489 = vmatprep.subr.mxu0 0.0
        %1490 = vmatpush1.msra.mxu0 %v1058
        %1491 = vmatprep.subr.mxu0 0.0
        %1492 = vmatpush1.msra.mxu0 %v1057
        %1493 = vmatprep.subr.mxu0 0.0
        %1494 = vmatpush2.msra.mxu0 0.0
        %1495 = vmatprep.subr.mxu0 0.0
        %1496 = vmatpush2.msra.mxu0 0.0
        %1497 = vmatprep.subr.mxu0 0.0
        %1498 = vmatpush2.msra.mxu0 0.0
        %1499 = vmatprep.subr.mxu0 0.0
        %1500 = vmatpush2.msra.mxu0 0.0
        %1501 = vmatprep.subr.mxu0 0.0
        %1502 = vmatpush2.msra.mxu0 0.0
        %1503 = vmatprep.subr.mxu0 0.0
        %1504 = vmatpush2.msra.mxu0 0.0
        %1505 = vmatprep.subr.mxu0 0.0
        %1506 = vmatpush2.msra.mxu0 0.0
        %1507 = vmatprep.subr.mxu0 0.0
        %1508 = vmatpush2.msra.mxu0 0.0
        %1509 = vmatprep.subr.mxu0 0.0
        %1510 = vmatpush2.msra.mxu0 0.0
        %1511 = vmatprep.subr.mxu0 0.0
        %1512 = vmatpush2.msra.mxu0 0.0
        %1513 = vmatprep.subr.mxu0 0.0
        %1514 = vmatpush2.msra.mxu0 0.0
        %1515 = vmatprep.subr.mxu0 0.0
        %1516 = vmatpush2.msra.mxu0 0.0
        %1517 = vmatprep.subr.mxu0 0.0
        %1518 = vmatpush2.msra.mxu0 0.0
        %1519 = vmatprep.subr.mxu0 0.0
        %1520 = vmatpush2.msra.mxu0 0.0
        %1521 = vmatprep.subr.mxu0 0.0
        %1522 = vmatpush2.msra.mxu0 0.0
        %1523 = vmatprep.subr.mxu0 0.0
        %1524 = vmatpush2.msra.mxu0 0.0
        %1525 = vmatprep.mubr.f32.mxu0 0.0
        %1526 = vmatmul.mubr.f32.gmra.mxu0 %v1456
        %v1527 = vpop.f32.mrf.mxu0
        %v1528 = vadd.f32 %v1448, %v1527
        %v1529 = vpop.f32.mrf.mxu0
        %1530 = vmatprep.mubr.f32.mxu0 0.0
        %1531 = vmatmul.mubr.f32.gmra.mxu0 %v1459
        %v1532 = vpop.f32.mrf.mxu0
        %v1533 = vadd.f32 %v1453, %v1532
        %v1534 = vpop.f32.mrf.mxu0
        %1535 = vdwg.mxu0
        %v1536 = vld [vmem:[%s4 + $0x20] sm:$0xff]
        %v1537 = vld [vmem:[%s4 + $0x28] sm:$0xff]
        %v1538 = vld [vmem:[%s7 + $0x20] sm:$0xff]
        %v1539 = vld [vmem:[%s7 + $0x28] sm:$0xff]
        %1541 = vset.pattern.permute.xlu0 0
        %1542 = vperm.xlu0 %1541, %v1538
        %v1543 = vpop.permute.xlu0 %1542
        %1546 = vset.pattern.permute.xlu0 0
        %1547 = vperm.xlu0 %1546, %v1539
        %v1548 = vpop.permute.xlu0 %1547
        %v1551 = vsel %vm505, %v1536, 0
        %v1554 = vsel %vm505, %v1537, 0
        %1556 = vmatprep.subr.mxu0 0.0
        %1557 = vmatpush1.msra.mxu0 0.0
        %1558 = vmatprep.subr.mxu0 0.0
        %1559 = vmatpush1.msra.mxu0 0.0
        %1560 = vmatprep.subr.mxu0 0.0
        %1561 = vmatpush1.msra.mxu0 0.0
        %1562 = vmatprep.subr.mxu0 0.0
        %1563 = vmatpush1.msra.mxu0 0.0
        %1564 = vmatprep.subr.mxu0 0.0
        %1565 = vmatpush1.msra.mxu0 0.0
        %1566 = vmatprep.subr.mxu0 0.0
        %1567 = vmatpush1.msra.mxu0 0.0
        %1568 = vmatprep.subr.mxu0 0.0
        %1569 = vmatpush1.msra.mxu0 0.0
        %1570 = vmatprep.subr.mxu0 0.0
        %1571 = vmatpush1.msra.mxu0 0.0
        %1572 = vmatprep.subr.mxu0 0.0
        %1573 = vmatpush1.msra.mxu0 0.0
        %1574 = vmatprep.subr.mxu0 0.0
        %1575 = vmatpush1.msra.mxu0 0.0
        %1576 = vmatprep.subr.mxu0 0.0
        %1577 = vmatpush1.msra.mxu0 0.0
        %1578 = vmatprep.subr.mxu0 0.0
        %1579 = vmatpush1.msra.mxu0 0.0
        %1580 = vmatprep.subr.mxu0 0.0
        %1581 = vmatpush1.msra.mxu0 0.0
        %1582 = vmatprep.subr.mxu0 0.0
        %1583 = vmatpush1.msra.mxu0 0.0
        %1584 = vmatprep.subr.mxu0 0.0
        %1585 = vmatpush1.msra.mxu0 %v503
        %1586 = vmatprep.subr.mxu0 0.0
        %1587 = vmatpush1.msra.mxu0 %v503
        %1588 = vmatprep.subr.mxu0 0.0
        %1589 = vmatpush2.msra.mxu0 0.0
        %1590 = vmatprep.subr.mxu0 0.0
        %1591 = vmatpush2.msra.mxu0 0.0
        %1592 = vmatprep.subr.mxu0 0.0
        %1593 = vmatpush2.msra.mxu0 0.0
        %1594 = vmatprep.subr.mxu0 0.0
        %1595 = vmatpush2.msra.mxu0 0.0
        %1596 = vmatprep.subr.mxu0 0.0
        %1597 = vmatpush2.msra.mxu0 0.0
        %1598 = vmatprep.subr.mxu0 0.0
        %1599 = vmatpush2.msra.mxu0 0.0
        %1600 = vmatprep.subr.mxu0 0.0
        %1601 = vmatpush2.msra.mxu0 0.0
        %1602 = vmatprep.subr.mxu0 0.0
        %1603 = vmatpush2.msra.mxu0 0.0
        %1604 = vmatprep.subr.mxu0 0.0
        %1605 = vmatpush2.msra.mxu0 0.0
        %1606 = vmatprep.subr.mxu0 0.0
        %1607 = vmatpush2.msra.mxu0 0.0
        %1608 = vmatprep.subr.mxu0 0.0
        %1609 = vmatpush2.msra.mxu0 0.0
        %1610 = vmatprep.subr.mxu0 0.0
        %1611 = vmatpush2.msra.mxu0 0.0
        %1612 = vmatprep.subr.mxu0 0.0
        %1613 = vmatpush2.msra.mxu0 0.0
        %1614 = vmatprep.subr.mxu0 0.0
        %1615 = vmatpush2.msra.mxu0 0.0
        %1616 = vmatprep.subr.mxu0 0.0
        %1617 = vmatpush2.msra.mxu0 0.0
        %1618 = vmatprep.subr.mxu0 0.0
        %1619 = vmatpush2.msra.mxu0 0.0
        %1620 = vmatprep.mubr.f32.mxu0 0.0
        %1621 = vmatmul.mubr.f32.gmra.mxu0 %v1551
        %v1622 = vpop.f32.mrf.mxu0
        %v1623 = vadd.f32 %v1543, %v1622
        %v1624 = vpop.f32.mrf.mxu0
        %1625 = vmatprep.mubr.f32.mxu0 0.0
        %1626 = vmatmul.mubr.f32.gmra.mxu0 %v1554
        %v1627 = vpop.f32.mrf.mxu0
        %v1628 = vadd.f32 %v1548, %v1627
        %v1629 = vpop.f32.mrf.mxu0
        %1630 = vdwg.mxu0
        %1631 = vmatprep.subr.mxu0 0.0
        %1632 = vmatpush1.msra.mxu0 0.0
        %1633 = vmatprep.subr.mxu0 0.0
        %1634 = vmatpush1.msra.mxu0 0.0
        %1635 = vmatprep.subr.mxu0 0.0
        %1636 = vmatpush1.msra.mxu0 0.0
        %1637 = vmatprep.subr.mxu0 0.0
        %1638 = vmatpush1.msra.mxu0 0.0
        %1639 = vmatprep.subr.mxu0 0.0
        %1640 = vmatpush1.msra.mxu0 0.0
        %1641 = vmatprep.subr.mxu0 0.0
        %1642 = vmatpush1.msra.mxu0 0.0
        %1643 = vmatprep.subr.mxu0 0.0
        %1644 = vmatpush1.msra.mxu0 0.0
        %1645 = vmatprep.subr.mxu0 0.0
        %1646 = vmatpush1.msra.mxu0 0.0
        %1647 = vmatprep.subr.mxu0 0.0
        %1648 = vmatpush1.msra.mxu0 0.0
        %1649 = vmatprep.subr.mxu0 0.0
        %1650 = vmatpush1.msra.mxu0 0.0
        %1651 = vmatprep.subr.mxu0 0.0
        %1652 = vmatpush1.msra.mxu0 0.0
        %1653 = vmatprep.subr.mxu0 0.0
        %1654 = vmatpush1.msra.mxu0 0.0
        %1655 = vmatprep.subr.mxu0 0.0
        %1656 = vmatpush1.msra.mxu0 0.0
        %1657 = vmatprep.subr.mxu0 0.0
        %1658 = vmatpush1.msra.mxu0 0.0
        %1659 = vmatprep.subr.mxu0 0.0
        %1660 = vmatpush1.msra.mxu0 %v1440
        %1661 = vmatprep.subr.mxu0 0.0
        %1662 = vmatpush1.msra.mxu0 %v1439
        %1663 = vmatprep.subr.mxu0 0.0
        %1664 = vmatpush2.msra.mxu0 0.0
        %1665 = vmatprep.subr.mxu0 0.0
        %1666 = vmatpush2.msra.mxu0 0.0
        %1667 = vmatprep.subr.mxu0 0.0
        %1668 = vmatpush2.msra.mxu0 0.0
        %1669 = vmatprep.subr.mxu0 0.0
        %1670 = vmatpush2.msra.mxu0 0.0
        %1671 = vmatprep.subr.mxu0 0.0
        %1672 = vmatpush2.msra.mxu0 0.0
        %1673 = vmatprep.subr.mxu0 0.0
        %1674 = vmatpush2.msra.mxu0 0.0
        %1675 = vmatprep.subr.mxu0 0.0
        %1676 = vmatpush2.msra.mxu0 0.0
        %1677 = vmatprep.subr.mxu0 0.0
        %1678 = vmatpush2.msra.mxu0 0.0
        %1679 = vmatprep.subr.mxu0 0.0
        %1680 = vmatpush2.msra.mxu0 0.0
        %1681 = vmatprep.subr.mxu0 0.0
        %1682 = vmatpush2.msra.mxu0 0.0
        %1683 = vmatprep.subr.mxu0 0.0
        %1684 = vmatpush2.msra.mxu0 0.0
        %1685 = vmatprep.subr.mxu0 0.0
        %1686 = vmatpush2.msra.mxu0 0.0
        %1687 = vmatprep.subr.mxu0 0.0
        %1688 = vmatpush2.msra.mxu0 0.0
        %1689 = vmatprep.subr.mxu0 0.0
        %1690 = vmatpush2.msra.mxu0 0.0
        %1691 = vmatprep.subr.mxu0 0.0
        %1692 = vmatpush2.msra.mxu0 0.0
        %1693 = vmatprep.subr.mxu0 0.0
        %1694 = vmatpush2.msra.mxu0 0.0
        %1695 = vmatprep.mubr.f32.mxu0 0.0
        %1696 = vmatmul.mubr.f32.gmra.mxu0 %v1456
        %v1697 = vpop.f32.mrf.mxu0
        %v1698 = vadd.f32 %v1448, %v1697
        %v1699 = vpop.f32.mrf.mxu0
        %1700 = vmatprep.mubr.f32.mxu0 0.0
        %1701 = vmatmul.mubr.f32.gmra.mxu0 %v1459
        %v1702 = vpop.f32.mrf.mxu0
        %v1703 = vadd.f32 %v1453, %v1702
        %v1704 = vpop.f32.mrf.mxu0
        %1705 = vdwg.mxu0
        %v1706 = vld [vmem:[%s9] sm:$0xff]
        %v1707 = vld [vmem:[%s9 + $0x8] sm:$0xff]
        %v1708 = vld [vmem:[%s9 + $0x10] sm:$0xff]
        %v1709 = vld [vmem:[%s9 + $0x18] sm:$0xff]
        %v1710 = vld [vmem:[%s9 + $0x20] sm:$0xff]
        %v1711 = vld [vmem:[%s9 + $0x28] sm:$0xff]
        %v1712 = vld [vmem:[%s9 + $0x30] sm:$0xff]
        %v1713 = vld [vmem:[%s9 + $0x38] sm:$0xff]
        %v1714 = vpack.c.bf16 %v1533, %v1528
        %v1715 = vpack.c.bf16 %v1628, %v1623
        %v1716 = vpack.c.bf16 %v1703, %v1698
        %v1725 = vunpack.c.l.b16 %v1706
        %v1726 = vunpack.c.h.b16 %v1706
        %v1727 = vunpack.c.l.b16 %v1707
        %v1728 = vunpack.c.h.b16 %v1707
        %v1729 = vunpack.c.l.b16 %v1708
        %v1730 = vunpack.c.h.b16 %v1708
        %v1731 = vunpack.c.l.b16 %v1709
        %v1732 = vunpack.c.h.b16 %v1709
        %v1733 = vunpack.c.l.b16 %v1710
        %v1734 = vunpack.c.h.b16 %v1710
        %v1735 = vunpack.c.l.b16 %v1711
        %v1736 = vunpack.c.h.b16 %v1711
        %v1737 = vunpack.c.l.b16 %v1712
        %v1738 = vunpack.c.h.b16 %v1712
        %v1739 = vunpack.c.l.b16 %v1713
        %v1740 = vunpack.c.h.b16 %v1713
        %v1741 = vpack.c.b16 %v1727, %v1725
        %v1742 = vpack.c.b16 %v1728, %v1726
        %v1743 = vpack.c.b16 %v1731, %v1729
        %v1744 = vpack.c.b16 %v1732, %v1730
        %v1745 = vpack.c.b16 %v1735, %v1733
        %v1746 = vpack.c.b16 %v1736, %v1734
        %v1747 = vpack.c.b16 %v1739, %v1737
        %v1748 = vpack.c.b16 %v1740, %v1738
        %v1758 = vsel %vm855, %v1714, 0
        %v1761 = vsel %vm855, %v1715, 0
        %v1764 = vsel %vm855, %v1716, 0
        %1766 = vmatprep.subr.bf16.mxu0 0
        %1767 = vmatpush1.bf16.msra.mxu0 0
        %1768 = vmatprep.subr.bf16.mxu0 0
        %1769 = vmatpush1.bf16.msra.mxu0 0
        %1770 = vmatprep.subr.bf16.mxu0 0
        %1771 = vmatpush1.bf16.msra.mxu0 0
        %1772 = vmatprep.subr.bf16.mxu0 0
        %1773 = vmatpush1.bf16.msra.mxu0 0
        %1774 = vmatprep.subr.bf16.mxu0 %v1748
        %1775 = vmatpush1.bf16.msra.mxu0 %v1747
        %1776 = vmatprep.subr.bf16.mxu0 %v1746
        %1777 = vmatpush1.bf16.msra.mxu0 %v1745
        %1778 = vmatprep.subr.bf16.mxu0 %v1744
        %1779 = vmatpush1.bf16.msra.mxu0 %v1743
        %1780 = vmatprep.subr.bf16.mxu0 %v1742
        %1781 = vmatpush1.bf16.msra.mxu0 %v1741
        %1782 = vmatprep.subr.bf16.mxu0 0
        %1783 = vmatpush2.bf16.msra.mxu0 0
        %1784 = vmatprep.subr.bf16.mxu0 0
        %1785 = vmatpush2.bf16.msra.mxu0 0
        %1786 = vmatprep.subr.bf16.mxu0 0
        %1787 = vmatpush2.bf16.msra.mxu0 0
        %1788 = vmatprep.subr.bf16.mxu0 0
        %1789 = vmatpush2.bf16.msra.mxu0 0
        %1790 = vmatprep.subr.bf16.mxu0 0
        %1791 = vmatpush2.bf16.msra.mxu0 0
        %1792 = vmatprep.subr.bf16.mxu0 0
        %1793 = vmatpush2.bf16.msra.mxu0 0
        %1794 = vmatprep.subr.bf16.mxu0 0
        %1795 = vmatpush2.bf16.msra.mxu0 0
        %1796 = vmatprep.subr.bf16.mxu0 0
        %1797 = vmatpush2.bf16.msra.mxu0 0
        %1798 = vmatprep.mubr.bf16.mxu0 0
        %1799 = vmatmul.mubr.bf16.gmra.mxu0 %v1758
        %v1800 = vpop.f32.mrf.mxu0
        %v1801 = vadd.f32 0.0, %v1800
        %v1802 = vpop.f32.mrf.mxu0
        %v1803 = vadd.f32 0.0, %v1802
        %v1804 = vpop.f32.mrf.mxu0
        %v1805 = vadd.f32 0.0, %v1804
        %v1806 = vpop.f32.mrf.mxu0
        %v1807 = vadd.f32 0.0, %v1806
        %1808 = vmatprep.mubr.bf16.mxu0 0
        %1809 = vmatmul.mubr.bf16.gmra.mxu0 %v1761
        %v1810 = vpop.f32.mrf.mxu0
        %v1811 = vadd.f32 0.0, %v1810
        %v1812 = vpop.f32.mrf.mxu0
        %v1813 = vadd.f32 0.0, %v1812
        %v1814 = vpop.f32.mrf.mxu0
        %v1815 = vadd.f32 0.0, %v1814
        %v1816 = vpop.f32.mrf.mxu0
        %v1817 = vadd.f32 0.0, %v1816
        %1818 = vmatprep.mubr.bf16.mxu0 0
        %1819 = vmatmul.mubr.bf16.gmra.mxu0 %v1764
        %v1820 = vpop.f32.mrf.mxu0
        %v1821 = vadd.f32 0.0, %v1820
        %v1822 = vpop.f32.mrf.mxu0
        %v1823 = vadd.f32 0.0, %v1822
        %v1824 = vpop.f32.mrf.mxu0
        %v1825 = vadd.f32 0.0, %v1824
        %v1826 = vpop.f32.mrf.mxu0
        %v1827 = vadd.f32 0.0, %v1826
        %1828 = vdwg.mxu0
        %v1829 = vmul.f32 %v1801, %v1811
        %v1830 = vmul.f32 %v1803, %v1813
        %v1831 = vmul.f32 %v1805, %v1815
        %v1832 = vmul.f32 %v1807, %v1817
        %v1833 = vadd.f32 %v1829, %v501
        %v1834 = vadd.f32 %v1830, %v502
        %v1835 = vadd.f32 %v1831, %v501
        %v1836 = vadd.f32 %v1832, %v502
        %v1837 = vadd.f32 %v1833, %v1834
        %1838 = vadd.xlane.f32.xlu0 %v1837
        %v1839 = vpop.xlane.xlu0 %1838
        %v1840 = vadd.f32 %v1835, %v1836
        %1841 = vadd.xlane.f32.xlu0 %v1840
        %v1842 = vpop.xlane.xlu0 %1841
        %v1843 = vrcp.pop 256.0
        %v1844 = vmul.f32 %v1839, %v1843
        %v1845 = vmul.f32 %v1842, %v1843
        %v1846 = vld [vmem:[%s4 + $0xe0] sm:$0xff]
        %v1847 = vld [vmem:[%s4 + $0xe8] sm:$0xff]
        %v1848 = vld [vmem:[%s7 + $0xa0] sm:$0xff]
        %v1849 = vld [vmem:[%s7 + $0xa8] sm:$0xff]
        %v1851 = vsel %vm505, %v1846, 0
        %v1854 = vsel %vm505, %v1847, 0
        %1856 = vmatprep.subr.mxu0 0.0
        %1857 = vmatpush1.msra.mxu0 0.0
        %1858 = vmatprep.subr.mxu0 0.0
        %1859 = vmatpush1.msra.mxu0 0.0
        %1860 = vmatprep.subr.mxu0 0.0
        %1861 = vmatpush1.msra.mxu0 0.0
        %1862 = vmatprep.subr.mxu0 0.0
        %1863 = vmatpush1.msra.mxu0 0.0
        %1864 = vmatprep.subr.mxu0 0.0
        %1865 = vmatpush1.msra.mxu0 0.0
        %1866 = vmatprep.subr.mxu0 0.0
        %1867 = vmatpush1.msra.mxu0 0.0
        %1868 = vmatprep.subr.mxu0 0.0
        %1869 = vmatpush1.msra.mxu0 0.0
        %1870 = vmatprep.subr.mxu0 0.0
        %1871 = vmatpush1.msra.mxu0 0.0
        %1872 = vmatprep.subr.mxu0 0.0
        %1873 = vmatpush1.msra.mxu0 0.0
        %1874 = vmatprep.subr.mxu0 0.0
        %1875 = vmatpush1.msra.mxu0 0.0
        %1876 = vmatprep.subr.mxu0 0.0
        %1877 = vmatpush1.msra.mxu0 0.0
        %1878 = vmatprep.subr.mxu0 0.0
        %1879 = vmatpush1.msra.mxu0 0.0
        %1880 = vmatprep.subr.mxu0 0.0
        %1881 = vmatpush1.msra.mxu0 0.0
        %1882 = vmatprep.subr.mxu0 0.0
        %1883 = vmatpush1.msra.mxu0 0.0
        %1884 = vmatprep.subr.mxu0 0.0
        %1885 = vmatpush1.msra.mxu0 %v1845
        %1886 = vmatprep.subr.mxu0 0.0
        %1887 = vmatpush1.msra.mxu0 %v1844
        %1888 = vmatprep.subr.mxu0 0.0
        %1889 = vmatpush2.msra.mxu0 0.0
        %1890 = vmatprep.subr.mxu0 0.0
        %1891 = vmatpush2.msra.mxu0 0.0
        %1892 = vmatprep.subr.mxu0 0.0
        %1893 = vmatpush2.msra.mxu0 0.0
        %1894 = vmatprep.subr.mxu0 0.0
        %1895 = vmatpush2.msra.mxu0 0.0
        %1896 = vmatprep.subr.mxu0 0.0
        %1897 = vmatpush2.msra.mxu0 0.0
        %1898 = vmatprep.subr.mxu0 0.0
        %1899 = vmatpush2.msra.mxu0 0.0
        %1900 = vmatprep.subr.mxu0 0.0
        %1901 = vmatpush2.msra.mxu0 0.0
        %1902 = vmatprep.subr.mxu0 0.0
        %1903 = vmatpush2.msra.mxu0 0.0
        %1904 = vmatprep.subr.mxu0 0.0
        %1905 = vmatpush2.msra.mxu0 0.0
        %1906 = vmatprep.subr.mxu0 0.0
        %1907 = vmatpush2.msra.mxu0 0.0
        %1908 = vmatprep.subr.mxu0 0.0
        %1909 = vmatpush2.msra.mxu0 0.0
        %1910 = vmatprep.subr.mxu0 0.0
        %1911 = vmatpush2.msra.mxu0 0.0
        %1912 = vmatprep.subr.mxu0 0.0
        %1913 = vmatpush2.msra.mxu0 0.0
        %1914 = vmatprep.subr.mxu0 0.0
        %1915 = vmatpush2.msra.mxu0 0.0
        %1916 = vmatprep.subr.mxu0 0.0
        %1917 = vmatpush2.msra.mxu0 0.0
        %1918 = vmatprep.subr.mxu0 0.0
        %1919 = vmatpush2.msra.mxu0 0.0
        %1920 = vmatprep.mubr.f32.mxu0 0.0
        %1921 = vmatmul.mubr.f32.gmra.mxu0 %v1851
        %v1922 = vpop.f32.mrf.mxu0
        %v1923 = vadd.f32 %v1848, %v1922
        %v1924 = vpop.f32.mrf.mxu0
        %1925 = vmatprep.mubr.f32.mxu0 0.0
        %1926 = vmatmul.mubr.f32.gmra.mxu0 %v1854
        %v1927 = vpop.f32.mrf.mxu0
        %v1928 = vadd.f32 %v1849, %v1927
        %v1929 = vpop.f32.mrf.mxu0
        %1930 = vdwg.mxu0
        %v1931 = vmax.f32 %v1923, 0.0
        %v1932 = vmax.f32 %v1928, 0.0
        %v1933 = vld [vmem:[%s5 + $0x20] sm:$0xff]
        %v1934 = vld [vmem:[%s5 + $0x28] sm:$0xff]
        %v1935 = vld [vmem:[%s7 + $0xf0] sm:$0xff]
        %v1936 = vld [vmem:[%s7 + $0xf8] sm:$0xff]
        %v1938 = vsel %vm505, %v1933, 0
        %v1941 = vsel %vm505, %v1934, 0
        %1943 = vmatprep.subr.mxu0 0.0
        %1944 = vmatpush1.msra.mxu0 0.0
        %1945 = vmatprep.subr.mxu0 0.0
        %1946 = vmatpush1.msra.mxu0 0.0
        %1947 = vmatprep.subr.mxu0 0.0
        %1948 = vmatpush1.msra.mxu0 0.0
        %1949 = vmatprep.subr.mxu0 0.0
        %1950 = vmatpush1.msra.mxu0 0.0
        %1951 = vmatprep.subr.mxu0 0.0
        %1952 = vmatpush1.msra.mxu0 0.0
        %1953 = vmatprep.subr.mxu0 0.0
        %1954 = vmatpush1.msra.mxu0 0.0
        %1955 = vmatprep.subr.mxu0 0.0
        %1956 = vmatpush1.msra.mxu0 0.0
        %1957 = vmatprep.subr.mxu0 0.0
        %1958 = vmatpush1.msra.mxu0 0.0
        %1959 = vmatprep.subr.mxu0 0.0
        %1960 = vmatpush1.msra.mxu0 0.0
        %1961 = vmatprep.subr.mxu0 0.0
        %1962 = vmatpush1.msra.mxu0 0.0
        %1963 = vmatprep.subr.mxu0 0.0
        %1964 = vmatpush1.msra.mxu0 0.0
        %1965 = vmatprep.subr.mxu0 0.0
        %1966 = vmatpush1.msra.mxu0 0.0
        %1967 = vmatprep.subr.mxu0 0.0
        %1968 = vmatpush1.msra.mxu0 0.0
        %1969 = vmatprep.subr.mxu0 0.0
        %1970 = vmatpush1.msra.mxu0 0.0
        %1971 = vmatprep.subr.mxu0 0.0
        %1972 = vmatpush1.msra.mxu0 %v1932
        %1973 = vmatprep.subr.mxu0 0.0
        %1974 = vmatpush1.msra.mxu0 %v1931
        %1975 = vmatprep.subr.mxu0 0.0
        %1976 = vmatpush2.msra.mxu0 0.0
        %1977 = vmatprep.subr.mxu0 0.0
        %1978 = vmatpush2.msra.mxu0 0.0
        %1979 = vmatprep.subr.mxu0 0.0
        %1980 = vmatpush2.msra.mxu0 0.0
        %1981 = vmatprep.subr.mxu0 0.0
        %1982 = vmatpush2.msra.mxu0 0.0
        %1983 = vmatprep.subr.mxu0 0.0
        %1984 = vmatpush2.msra.mxu0 0.0
        %1985 = vmatprep.subr.mxu0 0.0
        %1986 = vmatpush2.msra.mxu0 0.0
        %1987 = vmatprep.subr.mxu0 0.0
        %1988 = vmatpush2.msra.mxu0 0.0
        %1989 = vmatprep.subr.mxu0 0.0
        %1990 = vmatpush2.msra.mxu0 0.0
        %1991 = vmatprep.subr.mxu0 0.0
        %1992 = vmatpush2.msra.mxu0 0.0
        %1993 = vmatprep.subr.mxu0 0.0
        %1994 = vmatpush2.msra.mxu0 0.0
        %1995 = vmatprep.subr.mxu0 0.0
        %1996 = vmatpush2.msra.mxu0 0.0
        %1997 = vmatprep.subr.mxu0 0.0
        %1998 = vmatpush2.msra.mxu0 0.0
        %1999 = vmatprep.subr.mxu0 0.0
        %2000 = vmatpush2.msra.mxu0 0.0
        %2001 = vmatprep.subr.mxu0 0.0
        %2002 = vmatpush2.msra.mxu0 0.0
        %2003 = vmatprep.subr.mxu0 0.0
        %2004 = vmatpush2.msra.mxu0 0.0
        %2005 = vmatprep.subr.mxu0 0.0
        %2006 = vmatpush2.msra.mxu0 0.0
        %2007 = vmatprep.mubr.f32.mxu0 0.0
        %2008 = vmatmul.mubr.f32.gmra.mxu0 %v1938
        %v2009 = vpop.f32.mrf.mxu0
        %v2010 = vadd.f32 %v1935, %v2009
        %v2011 = vpop.f32.mrf.mxu0
        %2012 = vmatprep.mubr.f32.mxu0 0.0
        %2013 = vmatmul.mubr.f32.gmra.mxu0 %v1941
        %v2014 = vpop.f32.mrf.mxu0
        %v2015 = vadd.f32 %v1936, %v2014
        %v2016 = vpop.f32.mrf.mxu0
        %2017 = vdwg.mxu0
        %v2018 = vsub.f32 0.0, %v2010
        %v2019 = vsub.f32 0.0, %v2015
        %v2020 = vmul.f32 %v2018, 1.442695
        %v2021 = vpow.pop %v2020
        %v2022 = vmul.f32 %v2019, 1.442695
        %v2023 = vpow.pop %v2022
        %v2024 = vadd.f32 %v2021, 1.0
        %v2025 = vadd.f32 %v2023, 1.0
        %v2026 = vrcp.pop %v2024
        %v2027 = vrcp.pop %v2025
        %2029 = vset.pattern.permute.xlu0 0
        %2030 = vperm.xlu0 %2029, %v2026
        %v2031 = vpop.permute.xlu0 %2030
        %2034 = vset.pattern.permute.xlu0 0
        %2035 = vperm.xlu0 %2034, %v2027
        %v2036 = vpop.permute.xlu0 %2035
        %v2038 = vmul.f32 %v1833, %v2031
        %v2039 = vmul.f32 %v1834, %v2031
        %v2040 = vmul.f32 %v1835, %v2036
        %v2041 = vmul.f32 %v1836, %v2036
        %v2042 = vld [vmem:[%s4 + $0x60] sm:$0xff]
        %v2043 = vld [vmem:[%s4 + $0x68] sm:$0xff]
        %v2044 = vld [vmem:[%s4 + $0x70] sm:$0xff]
        %v2045 = vld [vmem:[%s4 + $0x78] sm:$0xff]
        %v2047 = vsel %vm505, %v2044, 0
        %v2050 = vsel %vm505, %v2045, 0
        %2052 = vmatprep.subr.mxu0 0.0
        %2053 = vmatpush1.msra.mxu0 0.0
        %2054 = vmatprep.subr.mxu0 0.0
        %2055 = vmatpush1.msra.mxu0 0.0
        %2056 = vmatprep.subr.mxu0 0.0
        %2057 = vmatpush1.msra.mxu0 0.0
        %2058 = vmatprep.subr.mxu0 0.0
        %2059 = vmatpush1.msra.mxu0 0.0
        %2060 = vmatprep.subr.mxu0 0.0
        %2061 = vmatpush1.msra.mxu0 0.0
        %2062 = vmatprep.subr.mxu0 0.0
        %2063 = vmatpush1.msra.mxu0 0.0
        %2064 = vmatprep.subr.mxu0 0.0
        %2065 = vmatpush1.msra.mxu0 0.0
        %2066 = vmatprep.subr.mxu0 0.0
        %2067 = vmatpush1.msra.mxu0 0.0
        %2068 = vmatprep.subr.mxu0 0.0
        %2069 = vmatpush1.msra.mxu0 0.0
        %2070 = vmatprep.subr.mxu0 0.0
        %2071 = vmatpush1.msra.mxu0 0.0
        %2072 = vmatprep.subr.mxu0 0.0
        %2073 = vmatpush1.msra.mxu0 0.0
        %2074 = vmatprep.subr.mxu0 0.0
        %2075 = vmatpush1.msra.mxu0 0.0
        %2076 = vmatprep.subr.mxu0 0.0
        %2077 = vmatpush1.msra.mxu0 0.0
        %2078 = vmatprep.subr.mxu0 0.0
        %2079 = vmatpush1.msra.mxu0 0.0
        %2080 = vmatprep.subr.mxu0 %v1827
        %2081 = vmatpush1.msra.mxu0 %v1825
        %2082 = vmatprep.subr.mxu0 %v1823
        %2083 = vmatpush1.msra.mxu0 %v1821
        %2084 = vmatprep.subr.mxu0 0.0
        %2085 = vmatpush2.msra.mxu0 0.0
        %2086 = vmatprep.subr.mxu0 0.0
        %2087 = vmatpush2.msra.mxu0 0.0
        %2088 = vmatprep.subr.mxu0 0.0
        %2089 = vmatpush2.msra.mxu0 0.0
        %2090 = vmatprep.subr.mxu0 0.0
        %2091 = vmatpush2.msra.mxu0 0.0
        %2092 = vmatprep.subr.mxu0 0.0
        %2093 = vmatpush2.msra.mxu0 0.0
        %2094 = vmatprep.subr.mxu0 0.0
        %2095 = vmatpush2.msra.mxu0 0.0
        %2096 = vmatprep.subr.mxu0 0.0
        %2097 = vmatpush2.msra.mxu0 0.0
        %2098 = vmatprep.subr.mxu0 0.0
        %2099 = vmatpush2.msra.mxu0 0.0
        %2100 = vmatprep.subr.mxu0 0.0
        %2101 = vmatpush2.msra.mxu0 0.0
        %2102 = vmatprep.subr.mxu0 0.0
        %2103 = vmatpush2.msra.mxu0 0.0
        %2104 = vmatprep.subr.mxu0 0.0
        %2105 = vmatpush2.msra.mxu0 0.0
        %2106 = vmatprep.subr.mxu0 0.0
        %2107 = vmatpush2.msra.mxu0 0.0
        %2108 = vmatprep.subr.mxu0 0.0
        %2109 = vmatpush2.msra.mxu0 0.0
        %2110 = vmatprep.subr.mxu0 0.0
        %2111 = vmatpush2.msra.mxu0 0.0
        %2112 = vmatprep.subr.mxu0 0.0
        %2113 = vmatpush2.msra.mxu0 0.0
        %2114 = vmatprep.subr.mxu0 0.0
        %2115 = vmatpush2.msra.mxu0 0.0
        %2116 = vmatprep.mubr.f32.mxu0 0.0
        %2117 = vmatmul.mubr.f32.gmra.mxu0 %v2047
        %v2118 = vpop.f32.mrf.mxu0
        %v2119 = vadd.f32 0.0, %v2118
        %v2120 = vpop.f32.mrf.mxu0
        %v2121 = vadd.f32 0.0, %v2120
        %2122 = vmatprep.mubr.f32.mxu0 0.0
        %2123 = vmatmul.mubr.f32.gmra.mxu0 %v2050
        %v2124 = vpop.f32.mrf.mxu0
        %v2125 = vadd.f32 0.0, %v2124
        %v2126 = vpop.f32.mrf.mxu0
        %v2127 = vadd.f32 0.0, %v2126
        %2128 = vdwg.mxu0
        %v2130 = vsel %vm505, %v2042, 0
        %v2133 = vsel %vm505, %v2043, 0
        %2135 = vmatprep.subr.mxu0 0.0
        %2136 = vmatpush1.msra.mxu0 0.0
        %2137 = vmatprep.subr.mxu0 0.0
        %2138 = vmatpush1.msra.mxu0 0.0
        %2139 = vmatprep.subr.mxu0 0.0
        %2140 = vmatpush1.msra.mxu0 0.0
        %2141 = vmatprep.subr.mxu0 0.0
        %2142 = vmatpush1.msra.mxu0 0.0
        %2143 = vmatprep.subr.mxu0 0.0
        %2144 = vmatpush1.msra.mxu0 0.0
        %2145 = vmatprep.subr.mxu0 0.0
        %2146 = vmatpush1.msra.mxu0 0.0
        %2147 = vmatprep.subr.mxu0 0.0
        %2148 = vmatpush1.msra.mxu0 0.0
        %2149 = vmatprep.subr.mxu0 0.0
        %2150 = vmatpush1.msra.mxu0 0.0
        %2151 = vmatprep.subr.mxu0 0.0
        %2152 = vmatpush1.msra.mxu0 0.0
        %2153 = vmatprep.subr.mxu0 0.0
        %2154 = vmatpush1.msra.mxu0 0.0
        %2155 = vmatprep.subr.mxu0 0.0
        %2156 = vmatpush1.msra.mxu0 0.0
        %2157 = vmatprep.subr.mxu0 0.0
        %2158 = vmatpush1.msra.mxu0 0.0
        %2159 = vmatprep.subr.mxu0 0.0
        %2160 = vmatpush1.msra.mxu0 0.0
        %2161 = vmatprep.subr.mxu0 0.0
        %2162 = vmatpush1.msra.mxu0 0.0
        %2163 = vmatprep.subr.mxu0 %v2041
        %2164 = vmatpush1.msra.mxu0 %v2040
        %2165 = vmatprep.subr.mxu0 %v2039
        %2166 = vmatpush1.msra.mxu0 %v2038
        %2167 = vmatprep.subr.mxu0 0.0
        %2168 = vmatpush2.msra.mxu0 0.0
        %2169 = vmatprep.subr.mxu0 0.0
        %2170 = vmatpush2.msra.mxu0 0.0
        %2171 = vmatprep.subr.mxu0 0.0
        %2172 = vmatpush2.msra.mxu0 0.0
        %2173 = vmatprep.subr.mxu0 0.0
        %2174 = vmatpush2.msra.mxu0 0.0
        %2175 = vmatprep.subr.mxu0 0.0
        %2176 = vmatpush2.msra.mxu0 0.0
        %2177 = vmatprep.subr.mxu0 0.0
        %2178 = vmatpush2.msra.mxu0 0.0
        %2179 = vmatprep.subr.mxu0 0.0
        %2180 = vmatpush2.msra.mxu0 0.0
        %2181 = vmatprep.subr.mxu0 0.0
        %2182 = vmatpush2.msra.mxu0 0.0
        %2183 = vmatprep.subr.mxu0 0.0
        %2184 = vmatpush2.msra.mxu0 0.0
        %2185 = vmatprep.subr.mxu0 0.0
        %2186 = vmatpush2.msra.mxu0 0.0
        %2187 = vmatprep.subr.mxu0 0.0
        %2188 = vmatpush2.msra.mxu0 0.0
        %2189 = vmatprep.subr.mxu0 0.0
        %2190 = vmatpush2.msra.mxu0 0.0
        %2191 = vmatprep.subr.mxu0 0.0
        %2192 = vmatpush2.msra.mxu0 0.0
        %2193 = vmatprep.subr.mxu0 0.0
        %2194 = vmatpush2.msra.mxu0 0.0
        %2195 = vmatprep.subr.mxu0 0.0
        %2196 = vmatpush2.msra.mxu0 0.0
        %2197 = vmatprep.subr.mxu0 0.0
        %2198 = vmatpush2.msra.mxu0 0.0
        %2199 = vmatprep.mubr.f32.mxu0 0.0
        %2200 = vmatmul.mubr.f32.gmra.mxu0 %v2130
        %v2201 = vpop.f32.mrf.mxu0
        %v2202 = vadd.f32 %v2119, %v2201
        %v2203 = vpop.f32.mrf.mxu0
        %v2204 = vadd.f32 %v2121, %v2203
        %2205 = vmatprep.mubr.f32.mxu0 0.0
        %2206 = vmatmul.mubr.f32.gmra.mxu0 %v2133
        %v2207 = vpop.f32.mrf.mxu0
        %v2208 = vadd.f32 %v2125, %v2207
        %v2209 = vpop.f32.mrf.mxu0
        %v2210 = vadd.f32 %v2127, %v2209
        %2211 = vdwg.mxu0
        %v2212 = vld [vmem:[%s7 + $0x50] sm:$0xff]
        %v2213 = vld [vmem:[%s7 + $0x58] sm:$0xff]
        %2215 = vset.pattern.permute.xlu0 0
        %2216 = vperm.xlu0 %2215, %v2212
        %v2217 = vpop.permute.xlu0 %2216
        %2220 = vset.pattern.permute.xlu0 0
        %2221 = vperm.xlu0 %2220, %v2213
        %v2222 = vpop.permute.xlu0 %2221
        %v2224 = vadd.f32 %v2202, %v2217
        %v2225 = vadd.f32 %v2204, %v2217
        %v2226 = vadd.f32 %v2208, %v2222
        %v2227 = vadd.f32 %v2210, %v2222
        %v2228 = vadd.f32 %v2224, %v2225
        %2229 = vadd.xlane.f32.xlu0 %v2228
        %v2230 = vpop.xlane.xlu0 %2229
        %v2231 = vadd.f32 %v2226, %v2227
        %2232 = vadd.xlane.f32.xlu0 %v2231
        %v2233 = vpop.xlane.xlu0 %2232
        %v2234 = vmul.f32 %v2230, %v1843
        %v2235 = vmul.f32 %v2233, %v1843
        %2236 = vmatprep.subr.mxu0 0.0
        %2237 = vmatpush1.msra.mxu0 0.0
        %2238 = vmatprep.subr.mxu0 0.0
        %2239 = vmatpush1.msra.mxu0 0.0
        %2240 = vmatprep.subr.mxu0 0.0
        %2241 = vmatpush1.msra.mxu0 0.0
        %2242 = vmatprep.subr.mxu0 0.0
        %2243 = vmatpush1.msra.mxu0 0.0
        %2244 = vmatprep.subr.mxu0 0.0
        %2245 = vmatpush1.msra.mxu0 0.0
        %2246 = vmatprep.subr.mxu0 0.0
        %2247 = vmatpush1.msra.mxu0 0.0
        %2248 = vmatprep.subr.mxu0 0.0
        %2249 = vmatpush1.msra.mxu0 0.0
        %2250 = vmatprep.subr.mxu0 0.0
        %2251 = vmatpush1.msra.mxu0 0.0
        %2252 = vmatprep.subr.mxu0 0.0
        %2253 = vmatpush1.msra.mxu0 0.0
        %2254 = vmatprep.subr.mxu0 0.0
        %2255 = vmatpush1.msra.mxu0 0.0
        %2256 = vmatprep.subr.mxu0 0.0
        %2257 = vmatpush1.msra.mxu0 0.0
        %2258 = vmatprep.subr.mxu0 0.0
        %2259 = vmatpush1.msra.mxu0 0.0
        %2260 = vmatprep.subr.mxu0 0.0
        %2261 = vmatpush1.msra.mxu0 0.0
        %2262 = vmatprep.subr.mxu0 0.0
        %2263 = vmatpush1.msra.mxu0 0.0
        %2264 = vmatprep.subr.mxu0 0.0
        %2265 = vmatpush1.msra.mxu0 %v2235
        %2266 = vmatprep.subr.mxu0 0.0
        %2267 = vmatpush1.msra.mxu0 %v2234
        %2268 = vmatprep.subr.mxu0 0.0
        %2269 = vmatpush2.msra.mxu0 0.0
        %2270 = vmatprep.subr.mxu0 0.0
        %2271 = vmatpush2.msra.mxu0 0.0
        %2272 = vmatprep.subr.mxu0 0.0
        %2273 = vmatpush2.msra.mxu0 0.0
        %2274 = vmatprep.subr.mxu0 0.0
        %2275 = vmatpush2.msra.mxu0 0.0
        %2276 = vmatprep.subr.mxu0 0.0
        %2277 = vmatpush2.msra.mxu0 0.0
        %2278 = vmatprep.subr.mxu0 0.0
        %2279 = vmatpush2.msra.mxu0 0.0
        %2280 = vmatprep.subr.mxu0 0.0
        %2281 = vmatpush2.msra.mxu0 0.0
        %2282 = vmatprep.subr.mxu0 0.0
        %2283 = vmatpush2.msra.mxu0 0.0
        %2284 = vmatprep.subr.mxu0 0.0
        %2285 = vmatpush2.msra.mxu0 0.0
        %2286 = vmatprep.subr.mxu0 0.0
        %2287 = vmatpush2.msra.mxu0 0.0
        %2288 = vmatprep.subr.mxu0 0.0
        %2289 = vmatpush2.msra.mxu0 0.0
        %2290 = vmatprep.subr.mxu0 0.0
        %2291 = vmatpush2.msra.mxu0 0.0
        %2292 = vmatprep.subr.mxu0 0.0
        %2293 = vmatpush2.msra.mxu0 0.0
        %2294 = vmatprep.subr.mxu0 0.0
        %2295 = vmatpush2.msra.mxu0 0.0
        %2296 = vmatprep.subr.mxu0 0.0
        %2297 = vmatpush2.msra.mxu0 0.0
        %2298 = vmatprep.subr.mxu0 0.0
        %2299 = vmatpush2.msra.mxu0 0.0
        %2300 = vmatprep.mubr.f32.mxu0 0.0
        %2301 = vmatmul.mubr.f32.gmra.mxu0 %v1252
        %v2302 = vpop.f32.mrf.mxu0
        %v2303 = vadd.f32 %v1249, %v2302
        %v2304 = vpop.f32.mrf.mxu0
        %2305 = vmatprep.mubr.f32.mxu0 0.0
        %2306 = vmatmul.mubr.f32.gmra.mxu0 %v1255
        %v2307 = vpop.f32.mrf.mxu0
        %v2308 = vadd.f32 %v1250, %v2307
        %v2309 = vpop.f32.mrf.mxu0
        %2310 = vdwg.mxu0
        %v2311 = vmax.f32 %v2303, 0.0
        %v2312 = vmax.f32 %v2308, 0.0
        %2313 = vmatprep.subr.mxu0 0.0
        %2314 = vmatpush1.msra.mxu0 0.0
        %2315 = vmatprep.subr.mxu0 0.0
        %2316 = vmatpush1.msra.mxu0 0.0
        %2317 = vmatprep.subr.mxu0 0.0
        %2318 = vmatpush1.msra.mxu0 0.0
        %2319 = vmatprep.subr.mxu0 0.0
        %2320 = vmatpush1.msra.mxu0 0.0
        %2321 = vmatprep.subr.mxu0 0.0
        %2322 = vmatpush1.msra.mxu0 0.0
        %2323 = vmatprep.subr.mxu0 0.0
        %2324 = vmatpush1.msra.mxu0 0.0
        %2325 = vmatprep.subr.mxu0 0.0
        %2326 = vmatpush1.msra.mxu0 0.0
        %2327 = vmatprep.subr.mxu0 0.0
        %2328 = vmatpush1.msra.mxu0 0.0
        %2329 = vmatprep.subr.mxu0 0.0
        %2330 = vmatpush1.msra.mxu0 0.0
        %2331 = vmatprep.subr.mxu0 0.0
        %2332 = vmatpush1.msra.mxu0 0.0
        %2333 = vmatprep.subr.mxu0 0.0
        %2334 = vmatpush1.msra.mxu0 0.0
        %2335 = vmatprep.subr.mxu0 0.0
        %2336 = vmatpush1.msra.mxu0 0.0
        %2337 = vmatprep.subr.mxu0 0.0
        %2338 = vmatpush1.msra.mxu0 0.0
        %2339 = vmatprep.subr.mxu0 0.0
        %2340 = vmatpush1.msra.mxu0 0.0
        %2341 = vmatprep.subr.mxu0 0.0
        %2342 = vmatpush1.msra.mxu0 %v2312
        %2343 = vmatprep.subr.mxu0 0.0
        %2344 = vmatpush1.msra.mxu0 %v2311
        %2345 = vmatprep.subr.mxu0 0.0
        %2346 = vmatpush2.msra.mxu0 0.0
        %2347 = vmatprep.subr.mxu0 0.0
        %2348 = vmatpush2.msra.mxu0 0.0
        %2349 = vmatprep.subr.mxu0 0.0
        %2350 = vmatpush2.msra.mxu0 0.0
        %2351 = vmatprep.subr.mxu0 0.0
        %2352 = vmatpush2.msra.mxu0 0.0
        %2353 = vmatprep.subr.mxu0 0.0
        %2354 = vmatpush2.msra.mxu0 0.0
        %2355 = vmatprep.subr.mxu0 0.0
        %2356 = vmatpush2.msra.mxu0 0.0
        %2357 = vmatprep.subr.mxu0 0.0
        %2358 = vmatpush2.msra.mxu0 0.0
        %2359 = vmatprep.subr.mxu0 0.0
        %2360 = vmatpush2.msra.mxu0 0.0
        %2361 = vmatprep.subr.mxu0 0.0
        %2362 = vmatpush2.msra.mxu0 0.0
        %2363 = vmatprep.subr.mxu0 0.0
        %2364 = vmatpush2.msra.mxu0 0.0
        %2365 = vmatprep.subr.mxu0 0.0
        %2366 = vmatpush2.msra.mxu0 0.0
        %2367 = vmatprep.subr.mxu0 0.0
        %2368 = vmatpush2.msra.mxu0 0.0
        %2369 = vmatprep.subr.mxu0 0.0
        %2370 = vmatpush2.msra.mxu0 0.0
        %2371 = vmatprep.subr.mxu0 0.0
        %2372 = vmatpush2.msra.mxu0 0.0
        %2373 = vmatprep.subr.mxu0 0.0
        %2374 = vmatpush2.msra.mxu0 0.0
        %2375 = vmatprep.subr.mxu0 0.0
        %2376 = vmatpush2.msra.mxu0 0.0
        %2377 = vmatprep.mubr.f32.mxu0 0.0
        %2378 = vmatmul.mubr.f32.gmra.mxu0 %v1339
        %v2379 = vpop.f32.mrf.mxu0
        %v2380 = vadd.f32 %v1336, %v2379
        %v2381 = vpop.f32.mrf.mxu0
        %2382 = vmatprep.mubr.f32.mxu0 0.0
        %2383 = vmatmul.mubr.f32.gmra.mxu0 %v1342
        %v2384 = vpop.f32.mrf.mxu0
        %v2385 = vadd.f32 %v1337, %v2384
        %v2386 = vpop.f32.mrf.mxu0
        %2387 = vdwg.mxu0
        %v2388 = vsub.f32 0.0, %v2380
        %v2389 = vsub.f32 0.0, %v2385
        %v2390 = vmul.f32 %v2388, 1.442695
        %v2391 = vpow.pop %v2390
        %v2392 = vmul.f32 %v2389, 1.442695
        %v2393 = vpow.pop %v2392
        %v2394 = vadd.f32 %v2391, 1.0
        %v2395 = vadd.f32 %v2393, 1.0
        %v2396 = vrcp.pop %v2394
        %v2397 = vrcp.pop %v2395
        %2399 = vset.pattern.permute.xlu0 0
        %2400 = vperm.xlu0 %2399, %v2396
        %v2401 = vpop.permute.xlu0 %2400
        %2404 = vset.pattern.permute.xlu0 0
        %2405 = vperm.xlu0 %2404, %v2397
        %v2406 = vpop.permute.xlu0 %2405
        %v2408 = vmul.f32 %v2224, %v2401
        %v2409 = vmul.f32 %v2225, %v2401
        %v2410 = vmul.f32 %v2226, %v2406
        %v2411 = vmul.f32 %v2227, %v2406
        %v2412 = vld [vmem:[%s4 + $0x30] sm:$0xff]
        %v2413 = vld [vmem:[%s4 + $0x38] sm:$0xff]
        %v2414 = vld [vmem:[%s7 + $0x30] sm:$0xff]
        %v2415 = vld [vmem:[%s7 + $0x38] sm:$0xff]
        %2417 = vset.pattern.permute.xlu0 0
        %2418 = vperm.xlu0 %2417, %v2414
        %v2419 = vpop.permute.xlu0 %2418
        %2422 = vset.pattern.permute.xlu0 0
        %2423 = vperm.xlu0 %2422, %v2415
        %v2424 = vpop.permute.xlu0 %2423
        %v2427 = vsel %vm505, %v2412, 0
        %v2430 = vsel %vm505, %v2413, 0
        %2432 = vmatprep.subr.mxu0 0.0
        %2433 = vmatpush1.msra.mxu0 0.0
        %2434 = vmatprep.subr.mxu0 0.0
        %2435 = vmatpush1.msra.mxu0 0.0
        %2436 = vmatprep.subr.mxu0 0.0
        %2437 = vmatpush1.msra.mxu0 0.0
        %2438 = vmatprep.subr.mxu0 0.0
        %2439 = vmatpush1.msra.mxu0 0.0
        %2440 = vmatprep.subr.mxu0 0.0
        %2441 = vmatpush1.msra.mxu0 0.0
        %2442 = vmatprep.subr.mxu0 0.0
        %2443 = vmatpush1.msra.mxu0 0.0
        %2444 = vmatprep.subr.mxu0 0.0
        %2445 = vmatpush1.msra.mxu0 0.0
        %2446 = vmatprep.subr.mxu0 0.0
        %2447 = vmatpush1.msra.mxu0 0.0
        %2448 = vmatprep.subr.mxu0 0.0
        %2449 = vmatpush1.msra.mxu0 0.0
        %2450 = vmatprep.subr.mxu0 0.0
        %2451 = vmatpush1.msra.mxu0 0.0
        %2452 = vmatprep.subr.mxu0 0.0
        %2453 = vmatpush1.msra.mxu0 0.0
        %2454 = vmatprep.subr.mxu0 0.0
        %2455 = vmatpush1.msra.mxu0 0.0
        %2456 = vmatprep.subr.mxu0 0.0
        %2457 = vmatpush1.msra.mxu0 0.0
        %2458 = vmatprep.subr.mxu0 0.0
        %2459 = vmatpush1.msra.mxu0 0.0
        %2460 = vmatprep.subr.mxu0 %v2041
        %2461 = vmatpush1.msra.mxu0 %v2040
        %2462 = vmatprep.subr.mxu0 %v2039
        %2463 = vmatpush1.msra.mxu0 %v2038
        %2464 = vmatprep.subr.mxu0 0.0
        %2465 = vmatpush2.msra.mxu0 0.0
        %2466 = vmatprep.subr.mxu0 0.0
        %2467 = vmatpush2.msra.mxu0 0.0
        %2468 = vmatprep.subr.mxu0 0.0
        %2469 = vmatpush2.msra.mxu0 0.0
        %2470 = vmatprep.subr.mxu0 0.0
        %2471 = vmatpush2.msra.mxu0 0.0
        %2472 = vmatprep.subr.mxu0 0.0
        %2473 = vmatpush2.msra.mxu0 0.0
        %2474 = vmatprep.subr.mxu0 0.0
        %2475 = vmatpush2.msra.mxu0 0.0
        %2476 = vmatprep.subr.mxu0 0.0
        %2477 = vmatpush2.msra.mxu0 0.0
        %2478 = vmatprep.subr.mxu0 0.0
        %2479 = vmatpush2.msra.mxu0 0.0
        %2480 = vmatprep.subr.mxu0 0.0
        %2481 = vmatpush2.msra.mxu0 0.0
        %2482 = vmatprep.subr.mxu0 0.0
        %2483 = vmatpush2.msra.mxu0 0.0
        %2484 = vmatprep.subr.mxu0 0.0
        %2485 = vmatpush2.msra.mxu0 0.0
        %2486 = vmatprep.subr.mxu0 0.0
        %2487 = vmatpush2.msra.mxu0 0.0
        %2488 = vmatprep.subr.mxu0 0.0
        %2489 = vmatpush2.msra.mxu0 0.0
        %2490 = vmatprep.subr.mxu0 0.0
        %2491 = vmatpush2.msra.mxu0 0.0
        %2492 = vmatprep.subr.mxu0 0.0
        %2493 = vmatpush2.msra.mxu0 0.0
        %2494 = vmatprep.subr.mxu0 0.0
        %2495 = vmatpush2.msra.mxu0 0.0
        %2496 = vmatprep.mubr.f32.mxu0 0.0
        %2497 = vmatmul.mubr.f32.gmra.mxu0 %v2427
        %v2498 = vpop.f32.mrf.mxu0
        %v2499 = vadd.f32 %v2419, %v2498
        %v2500 = vpop.f32.mrf.mxu0
        %v2501 = vadd.f32 %v2419, %v2500
        %2502 = vmatprep.mubr.f32.mxu0 0.0
        %2503 = vmatmul.mubr.f32.gmra.mxu0 %v2430
        %v2504 = vpop.f32.mrf.mxu0
        %v2505 = vadd.f32 %v2424, %v2504
        %v2506 = vpop.f32.mrf.mxu0
        %v2507 = vadd.f32 %v2424, %v2506
        %2508 = vdwg.mxu0
        %2509 = vmatprep.subr.mxu0 0.0
        %2510 = vmatpush1.msra.mxu0 0.0
        %2511 = vmatprep.subr.mxu0 0.0
        %2512 = vmatpush1.msra.mxu0 0.0
        %2513 = vmatprep.subr.mxu0 0.0
        %2514 = vmatpush1.msra.mxu0 0.0
        %2515 = vmatprep.subr.mxu0 0.0
        %2516 = vmatpush1.msra.mxu0 0.0
        %2517 = vmatprep.subr.mxu0 0.0
        %2518 = vmatpush1.msra.mxu0 0.0
        %2519 = vmatprep.subr.mxu0 0.0
        %2520 = vmatpush1.msra.mxu0 0.0
        %2521 = vmatprep.subr.mxu0 0.0
        %2522 = vmatpush1.msra.mxu0 0.0
        %2523 = vmatprep.subr.mxu0 0.0
        %2524 = vmatpush1.msra.mxu0 0.0
        %2525 = vmatprep.subr.mxu0 0.0
        %2526 = vmatpush1.msra.mxu0 0.0
        %2527 = vmatprep.subr.mxu0 0.0
        %2528 = vmatpush1.msra.mxu0 0.0
        %2529 = vmatprep.subr.mxu0 0.0
        %2530 = vmatpush1.msra.mxu0 0.0
        %2531 = vmatprep.subr.mxu0 0.0
        %2532 = vmatpush1.msra.mxu0 0.0
        %2533 = vmatprep.subr.mxu0 0.0
        %2534 = vmatpush1.msra.mxu0 0.0
        %2535 = vmatprep.subr.mxu0 0.0
        %2536 = vmatpush1.msra.mxu0 0.0
        %2537 = vmatprep.subr.mxu0 %v502
        %2538 = vmatpush1.msra.mxu0 %v501
        %2539 = vmatprep.subr.mxu0 %v502
        %2540 = vmatpush1.msra.mxu0 %v501
        %2541 = vmatprep.subr.mxu0 0.0
        %2542 = vmatpush2.msra.mxu0 0.0
        %2543 = vmatprep.subr.mxu0 0.0
        %2544 = vmatpush2.msra.mxu0 0.0
        %2545 = vmatprep.subr.mxu0 0.0
        %2546 = vmatpush2.msra.mxu0 0.0
        %2547 = vmatprep.subr.mxu0 0.0
        %2548 = vmatpush2.msra.mxu0 0.0
        %2549 = vmatprep.subr.mxu0 0.0
        %2550 = vmatpush2.msra.mxu0 0.0
        %2551 = vmatprep.subr.mxu0 0.0
        %2552 = vmatpush2.msra.mxu0 0.0
        %2553 = vmatprep.subr.mxu0 0.0
        %2554 = vmatpush2.msra.mxu0 0.0
        %2555 = vmatprep.subr.mxu0 0.0
        %2556 = vmatpush2.msra.mxu0 0.0
        %2557 = vmatprep.subr.mxu0 0.0
        %2558 = vmatpush2.msra.mxu0 0.0
        %2559 = vmatprep.subr.mxu0 0.0
        %2560 = vmatpush2.msra.mxu0 0.0
        %2561 = vmatprep.subr.mxu0 0.0
        %2562 = vmatpush2.msra.mxu0 0.0
        %2563 = vmatprep.subr.mxu0 0.0
        %2564 = vmatpush2.msra.mxu0 0.0
        %2565 = vmatprep.subr.mxu0 0.0
        %2566 = vmatpush2.msra.mxu0 0.0
        %2567 = vmatprep.subr.mxu0 0.0
        %2568 = vmatpush2.msra.mxu0 0.0
        %2569 = vmatprep.subr.mxu0 0.0
        %2570 = vmatpush2.msra.mxu0 0.0
        %2571 = vmatprep.subr.mxu0 0.0
        %2572 = vmatpush2.msra.mxu0 0.0
        %2573 = vmatprep.mubr.f32.mxu0 0.0
        %2574 = vmatmul.mubr.f32.gmra.mxu0 %v2427
        %v2575 = vpop.f32.mrf.mxu0
        %v2576 = vadd.f32 %v2419, %v2575
        %v2577 = vpop.f32.mrf.mxu0
        %v2578 = vadd.f32 %v2419, %v2577
        %2579 = vmatprep.mubr.f32.mxu0 0.0
        %2580 = vmatmul.mubr.f32.gmra.mxu0 %v2430
        %v2581 = vpop.f32.mrf.mxu0
        %v2582 = vadd.f32 %v2424, %v2581
        %v2583 = vpop.f32.mrf.mxu0
        %v2584 = vadd.f32 %v2424, %v2583
        %2585 = vdwg.mxu0
        %2586 = vmatprep.subr.mxu0 0.0
        %2587 = vmatpush1.msra.mxu0 0.0
        %2588 = vmatprep.subr.mxu0 0.0
        %2589 = vmatpush1.msra.mxu0 0.0
        %2590 = vmatprep.subr.mxu0 0.0
        %2591 = vmatpush1.msra.mxu0 0.0
        %2592 = vmatprep.subr.mxu0 0.0
        %2593 = vmatpush1.msra.mxu0 0.0
        %2594 = vmatprep.subr.mxu0 0.0
        %2595 = vmatpush1.msra.mxu0 0.0
        %2596 = vmatprep.subr.mxu0 0.0
        %2597 = vmatpush1.msra.mxu0 0.0
        %2598 = vmatprep.subr.mxu0 0.0
        %2599 = vmatpush1.msra.mxu0 0.0
        %2600 = vmatprep.subr.mxu0 0.0
        %2601 = vmatpush1.msra.mxu0 0.0
        %2602 = vmatprep.subr.mxu0 0.0
        %2603 = vmatpush1.msra.mxu0 0.0
        %2604 = vmatprep.subr.mxu0 0.0
        %2605 = vmatpush1.msra.mxu0 0.0
        %2606 = vmatprep.subr.mxu0 0.0
        %2607 = vmatpush1.msra.mxu0 0.0
        %2608 = vmatprep.subr.mxu0 0.0
        %2609 = vmatpush1.msra.mxu0 0.0
        %2610 = vmatprep.subr.mxu0 0.0
        %2611 = vmatpush1.msra.mxu0 0.0
        %2612 = vmatprep.subr.mxu0 0.0
        %2613 = vmatpush1.msra.mxu0 0.0
        %2614 = vmatprep.subr.mxu0 %v2411
        %2615 = vmatpush1.msra.mxu0 %v2410
        %2616 = vmatprep.subr.mxu0 %v2409
        %2617 = vmatpush1.msra.mxu0 %v2408
        %2618 = vmatprep.subr.mxu0 0.0
        %2619 = vmatpush2.msra.mxu0 0.0
        %2620 = vmatprep.subr.mxu0 0.0
        %2621 = vmatpush2.msra.mxu0 0.0
        %2622 = vmatprep.subr.mxu0 0.0
        %2623 = vmatpush2.msra.mxu0 0.0
        %2624 = vmatprep.subr.mxu0 0.0
        %2625 = vmatpush2.msra.mxu0 0.0
        %2626 = vmatprep.subr.mxu0 0.0
        %2627 = vmatpush2.msra.mxu0 0.0
        %2628 = vmatprep.subr.mxu0 0.0
        %2629 = vmatpush2.msra.mxu0 0.0
        %2630 = vmatprep.subr.mxu0 0.0
        %2631 = vmatpush2.msra.mxu0 0.0
        %2632 = vmatprep.subr.mxu0 0.0
        %2633 = vmatpush2.msra.mxu0 0.0
        %2634 = vmatprep.subr.mxu0 0.0
        %2635 = vmatpush2.msra.mxu0 0.0
        %2636 = vmatprep.subr.mxu0 0.0
        %2637 = vmatpush2.msra.mxu0 0.0
        %2638 = vmatprep.subr.mxu0 0.0
        %2639 = vmatpush2.msra.mxu0 0.0
        %2640 = vmatprep.subr.mxu0 0.0
        %2641 = vmatpush2.msra.mxu0 0.0
        %2642 = vmatprep.subr.mxu0 0.0
        %2643 = vmatpush2.msra.mxu0 0.0
        %2644 = vmatprep.subr.mxu0 0.0
        %2645 = vmatpush2.msra.mxu0 0.0
        %2646 = vmatprep.subr.mxu0 0.0
        %2647 = vmatpush2.msra.mxu0 0.0
        %2648 = vmatprep.subr.mxu0 0.0
        %2649 = vmatpush2.msra.mxu0 0.0
        %2650 = vmatprep.mubr.f32.mxu0 0.0
        %2651 = vmatmul.mubr.f32.gmra.mxu0 %v1551
        %v2652 = vpop.f32.mrf.mxu0
        %v2653 = vadd.f32 %v1543, %v2652
        %v2654 = vpop.f32.mrf.mxu0
        %v2655 = vadd.f32 %v1543, %v2654
        %2656 = vmatprep.mubr.f32.mxu0 0.0
        %2657 = vmatmul.mubr.f32.gmra.mxu0 %v1554
        %v2658 = vpop.f32.mrf.mxu0
        %v2659 = vadd.f32 %v1548, %v2658
        %v2660 = vpop.f32.mrf.mxu0
        %v2661 = vadd.f32 %v1548, %v2660
        %2662 = vdwg.mxu0
        %v2663 = vld [vmem:[#allocation2] sm:$0xff]
        %v2664 = vld [vmem:[#allocation2 + $0x8] sm:$0xff]
        %v2665 = vld [vmem:[#allocation2 + $0x10] sm:$0xff]
        %v2666 = vld [vmem:[#allocation2 + $0x18] sm:$0xff]
        %v2667 = vld [vmem:[#allocation2 + $0x20] sm:$0xff]
        %v2668 = vld [vmem:[#allocation2 + $0x28] sm:$0xff]
        %v2669 = vld [vmem:[#allocation2 + $0x30] sm:$0xff]
        %v2670 = vld [vmem:[#allocation2 + $0x38] sm:$0xff]
        %v2671 = vld [vmem:[#allocation2 + $0x40] sm:$0xff]
        %v2672 = vld [vmem:[#allocation2 + $0x48] sm:$0xff]
        %v2673 = vld [vmem:[#allocation2 + $0x50] sm:$0xff]
        %v2674 = vld [vmem:[#allocation2 + $0x58] sm:$0xff]
        %v2675 = vld [vmem:[#allocation2 + $0x60] sm:$0xff]
        %v2676 = vld [vmem:[#allocation2 + $0x68] sm:$0xff]
        %v2677 = vld [vmem:[#allocation2 + $0x70] sm:$0xff]
        %v2678 = vld [vmem:[#allocation2 + $0x78] sm:$0xff]
        %v2679 = vld [vmem:[#allocation2 + $0x80] sm:$0xff]
        %v2680 = vld [vmem:[#allocation2 + $0x88] sm:$0xff]
        %v2681 = vld [vmem:[#allocation2 + $0x90] sm:$0xff]
        %v2682 = vld [vmem:[#allocation2 + $0x98] sm:$0xff]
        %v2683 = vld [vmem:[#allocation2 + $0xa0] sm:$0xff]
        %v2684 = vld [vmem:[#allocation2 + $0xa8] sm:$0xff]
        %v2685 = vld [vmem:[#allocation2 + $0xb0] sm:$0xff]
        %v2686 = vld [vmem:[#allocation2 + $0xb8] sm:$0xff]
        %v2687 = vld [vmem:[#allocation2 + $0xc0] sm:$0xff]
        %v2688 = vld [vmem:[#allocation2 + $0xc8] sm:$0xff]
        %v2689 = vld [vmem:[#allocation2 + $0xd0] sm:$0xff]
        %v2690 = vld [vmem:[#allocation2 + $0xd8] sm:$0xff]
        %v2691 = vld [vmem:[#allocation2 + $0xe0] sm:$0xff]
        %v2692 = vld [vmem:[#allocation2 + $0xe8] sm:$0xff]
        %v2693 = vld [vmem:[#allocation2 + $0xf0] sm:$0xff]
        %v2694 = vld [vmem:[#allocation2 + $0xf8] sm:$0xff]
        %v2695 = vld [vmem:[#allocation2 + $0x100] sm:$0xff]
        %v2696 = vld [vmem:[#allocation2 + $0x108] sm:$0xff]
        %v2697 = vld [vmem:[#allocation2 + $0x110] sm:$0xff]
        %v2698 = vld [vmem:[#allocation2 + $0x118] sm:$0xff]
        %v2699 = vld [vmem:[#allocation2 + $0x120] sm:$0xff]
        %v2700 = vld [vmem:[#allocation2 + $0x128] sm:$0xff]
        %v2701 = vld [vmem:[#allocation2 + $0x130] sm:$0xff]
        %v2702 = vld [vmem:[#allocation2 + $0x138] sm:$0xff]
        %v2703 = vld [vmem:[#allocation2 + $0x140] sm:$0xff]
        %v2704 = vld [vmem:[#allocation2 + $0x148] sm:$0xff]
        %v2705 = vld [vmem:[#allocation2 + $0x150] sm:$0xff]
        %v2706 = vld [vmem:[#allocation2 + $0x158] sm:$0xff]
        %v2707 = vld [vmem:[#allocation2 + $0x160] sm:$0xff]
        %v2708 = vld [vmem:[#allocation2 + $0x168] sm:$0xff]
        %v2709 = vld [vmem:[#allocation2 + $0x170] sm:$0xff]
        %v2710 = vld [vmem:[#allocation2 + $0x178] sm:$0xff]
        %v2711 = vld [vmem:[#allocation2 + $0x180] sm:$0xff]
        %v2712 = vld [vmem:[#allocation2 + $0x188] sm:$0xff]
        %v2713 = vld [vmem:[#allocation2 + $0x190] sm:$0xff]
        %v2714 = vld [vmem:[#allocation2 + $0x198] sm:$0xff]
        %v2715 = vld [vmem:[#allocation2 + $0x1a0] sm:$0xff]
        %v2716 = vld [vmem:[#allocation2 + $0x1a8] sm:$0xff]
        %v2717 = vld [vmem:[#allocation2 + $0x1b0] sm:$0xff]
        %v2718 = vld [vmem:[#allocation2 + $0x1b8] sm:$0xff]
        %v2719 = vld [vmem:[#allocation2 + $0x1c0] sm:$0xff]
        %v2720 = vld [vmem:[#allocation2 + $0x1c8] sm:$0xff]
        %v2721 = vld [vmem:[#allocation2 + $0x1d0] sm:$0xff]
        %v2722 = vld [vmem:[#allocation2 + $0x1d8] sm:$0xff]
        %v2723 = vld [vmem:[#allocation2 + $0x1e0] sm:$0xff]
        %v2724 = vld [vmem:[#allocation2 + $0x1e8] sm:$0xff]
        %v2725 = vld [vmem:[#allocation2 + $0x1f0] sm:$0xff]
        %v2726 = vld [vmem:[#allocation2 + $0x1f8] sm:$0xff]
        %v2727 = vld [vmem:[#allocation2 + $0x200] sm:$0xff]
        %v2728 = vld [vmem:[#allocation2 + $0x208] sm:$0xff]
        %v2729 = vld [vmem:[#allocation2 + $0x210] sm:$0xff]
        %v2730 = vld [vmem:[#allocation2 + $0x218] sm:$0xff]
        %v2731 = vld [vmem:[#allocation2 + $0x220] sm:$0xff]
        %v2732 = vld [vmem:[#allocation2 + $0x228] sm:$0xff]
        %v2733 = vld [vmem:[#allocation2 + $0x230] sm:$0xff]
        %v2734 = vld [vmem:[#allocation2 + $0x238] sm:$0xff]
        %v2735 = vld [vmem:[#allocation2 + $0x240] sm:$0xff]
        %v2736 = vld [vmem:[#allocation2 + $0x248] sm:$0xff]
        %v2737 = vld [vmem:[#allocation2 + $0x250] sm:$0xff]
        %v2738 = vld [vmem:[#allocation2 + $0x258] sm:$0xff]
        %v2739 = vld [vmem:[#allocation2 + $0x260] sm:$0xff]
        %v2740 = vld [vmem:[#allocation2 + $0x268] sm:$0xff]
        %v2741 = vld [vmem:[#allocation2 + $0x270] sm:$0xff]
        %v2742 = vld [vmem:[#allocation2 + $0x278] sm:$0xff]
        %v2743 = vld [vmem:[#allocation2 + $0x280] sm:$0xff]
        %v2744 = vld [vmem:[#allocation2 + $0x288] sm:$0xff]
        %v2745 = vld [vmem:[#allocation2 + $0x290] sm:$0xff]
        %v2746 = vld [vmem:[#allocation2 + $0x298] sm:$0xff]
        %v2747 = vld [vmem:[#allocation2 + $0x2a0] sm:$0xff]
        %v2748 = vld [vmem:[#allocation2 + $0x2a8] sm:$0xff]
        %v2749 = vld [vmem:[#allocation2 + $0x2b0] sm:$0xff]
        %v2750 = vld [vmem:[#allocation2 + $0x2b8] sm:$0xff]
        %v2751 = vld [vmem:[#allocation2 + $0x2c0] sm:$0xff]
        %v2752 = vld [vmem:[#allocation2 + $0x2c8] sm:$0xff]
        %v2753 = vld [vmem:[#allocation2 + $0x2d0] sm:$0xff]
        %v2754 = vld [vmem:[#allocation2 + $0x2d8] sm:$0xff]
        %v2755 = vld [vmem:[#allocation2 + $0x2e0] sm:$0xff]
        %v2756 = vld [vmem:[#allocation2 + $0x2e8] sm:$0xff]
        %v2757 = vld [vmem:[#allocation2 + $0x2f0] sm:$0xff]
        %v2758 = vld [vmem:[#allocation2 + $0x2f8] sm:$0xff]
        %v2759 = vld [vmem:[#allocation2 + $0x300] sm:$0xff]
        %v2760 = vld [vmem:[#allocation2 + $0x308] sm:$0xff]
        %v2761 = vld [vmem:[#allocation2 + $0x310] sm:$0xff]
        %v2762 = vld [vmem:[#allocation2 + $0x318] sm:$0xff]
        %v2763 = vld [vmem:[#allocation2 + $0x320] sm:$0xff]
        %v2764 = vld [vmem:[#allocation2 + $0x328] sm:$0xff]
        %v2765 = vld [vmem:[#allocation2 + $0x330] sm:$0xff]
        %v2766 = vld [vmem:[#allocation2 + $0x338] sm:$0xff]
        %v2767 = vld [vmem:[#allocation2 + $0x340] sm:$0xff]
        %v2768 = vld [vmem:[#allocation2 + $0x348] sm:$0xff]
        %v2769 = vld [vmem:[#allocation2 + $0x350] sm:$0xff]
        %v2770 = vld [vmem:[#allocation2 + $0x358] sm:$0xff]
        %v2771 = vld [vmem:[#allocation2 + $0x360] sm:$0xff]
        %v2772 = vld [vmem:[#allocation2 + $0x368] sm:$0xff]
        %v2773 = vld [vmem:[#allocation2 + $0x370] sm:$0xff]
        %v2774 = vld [vmem:[#allocation2 + $0x378] sm:$0xff]
        %v2775 = vld [vmem:[#allocation2 + $0x380] sm:$0xff]
        %v2776 = vld [vmem:[#allocation2 + $0x388] sm:$0xff]
        %v2777 = vld [vmem:[#allocation2 + $0x390] sm:$0xff]
        %v2778 = vld [vmem:[#allocation2 + $0x398] sm:$0xff]
        %v2779 = vld [vmem:[#allocation2 + $0x3a0] sm:$0xff]
        %v2780 = vld [vmem:[#allocation2 + $0x3a8] sm:$0xff]
        %v2781 = vld [vmem:[#allocation2 + $0x3b0] sm:$0xff]
        %v2782 = vld [vmem:[#allocation2 + $0x3b8] sm:$0xff]
        %v2783 = vld [vmem:[#allocation2 + $0x3c0] sm:$0xff]
        %v2784 = vld [vmem:[#allocation2 + $0x3c8] sm:$0xff]
        %v2785 = vld [vmem:[#allocation2 + $0x3d0] sm:$0xff]
        %v2786 = vld [vmem:[#allocation2 + $0x3d8] sm:$0xff]
        %v2787 = vld [vmem:[#allocation2 + $0x3e0] sm:$0xff]
        %v2788 = vld [vmem:[#allocation2 + $0x3e8] sm:$0xff]
        %v2789 = vld [vmem:[#allocation2 + $0x3f0] sm:$0xff]
        %v2790 = vld [vmem:[#allocation2 + $0x3f8] sm:$0xff]
        %v2791 = vpack.c.bf16 %v2505, %v2499
        %v2792 = vpack.c.bf16 %v2507, %v2501
        %v2793 = vpack.c.bf16 %v2582, %v2576
        %v2794 = vpack.c.bf16 %v2584, %v2578
        %v2795 = vpack.c.bf16 %v2659, %v2653
        %v2796 = vpack.c.bf16 %v2661, %v2655
        %v2925 = vunpack.c.l.b16 %v2663
        %v2926 = vunpack.c.h.b16 %v2663
        %v2927 = vunpack.c.l.b16 %v2664
        %v2928 = vunpack.c.h.b16 %v2664
        %v2929 = vunpack.c.l.b16 %v2665
        %v2930 = vunpack.c.h.b16 %v2665
        %v2931 = vunpack.c.l.b16 %v2666
        %v2932 = vunpack.c.h.b16 %v2666
        %v2933 = vunpack.c.l.b16 %v2667
        %v2934 = vunpack.c.h.b16 %v2667
        %v2935 = vunpack.c.l.b16 %v2668
        %v2936 = vunpack.c.h.b16 %v2668
        %v2937 = vunpack.c.l.b16 %v2669
        %v2938 = vunpack.c.h.b16 %v2669
        %v2939 = vunpack.c.l.b16 %v2670
        %v2940 = vunpack.c.h.b16 %v2670
        %v2941 = vunpack.c.l.b16 %v2671
        %v2942 = vunpack.c.h.b16 %v2671
        %v2943 = vunpack.c.l.b16 %v2672
        %v2944 = vunpack.c.h.b16 %v2672
        %v2945 = vunpack.c.l.b16 %v2673
        %v2946 = vunpack.c.h.b16 %v2673
        %v2947 = vunpack.c.l.b16 %v2674
        %v2948 = vunpack.c.h.b16 %v2674
        %v2949 = vunpack.c.l.b16 %v2675
        %v2950 = vunpack.c.h.b16 %v2675
        %v2951 = vunpack.c.l.b16 %v2676
        %v2952 = vunpack.c.h.b16 %v2676
        %v2953 = vunpack.c.l.b16 %v2677
        %v2954 = vunpack.c.h.b16 %v2677
        %v2955 = vunpack.c.l.b16 %v2678
        %v2956 = vunpack.c.h.b16 %v2678
        %v2957 = vunpack.c.l.b16 %v2679
        %v2958 = vunpack.c.h.b16 %v2679
        %v2959 = vunpack.c.l.b16 %v2680
        %v2960 = vunpack.c.h.b16 %v2680
        %v2961 = vunpack.c.l.b16 %v2681
        %v2962 = vunpack.c.h.b16 %v2681
        %v2963 = vunpack.c.l.b16 %v2682
        %v2964 = vunpack.c.h.b16 %v2682
        %v2965 = vunpack.c.l.b16 %v2683
        %v2966 = vunpack.c.h.b16 %v2683
        %v2967 = vunpack.c.l.b16 %v2684
        %v2968 = vunpack.c.h.b16 %v2684
        %v2969 = vunpack.c.l.b16 %v2685
        %v2970 = vunpack.c.h.b16 %v2685
        %v2971 = vunpack.c.l.b16 %v2686
        %v2972 = vunpack.c.h.b16 %v2686
        %v2973 = vunpack.c.l.b16 %v2687
        %v2974 = vunpack.c.h.b16 %v2687
        %v2975 = vunpack.c.l.b16 %v2688
        %v2976 = vunpack.c.h.b16 %v2688
        %v2977 = vunpack.c.l.b16 %v2689
        %v2978 = vunpack.c.h.b16 %v2689
        %v2979 = vunpack.c.l.b16 %v2690
        %v2980 = vunpack.c.h.b16 %v2690
        %v2981 = vunpack.c.l.b16 %v2691
        %v2982 = vunpack.c.h.b16 %v2691
        %v2983 = vunpack.c.l.b16 %v2692
        %v2984 = vunpack.c.h.b16 %v2692
        %v2985 = vunpack.c.l.b16 %v2693
        %v2986 = vunpack.c.h.b16 %v2693
        %v2987 = vunpack.c.l.b16 %v2694
        %v2988 = vunpack.c.h.b16 %v2694
        %v2989 = vunpack.c.l.b16 %v2695
        %v2990 = vunpack.c.h.b16 %v2695
        %v2991 = vunpack.c.l.b16 %v2696
        %v2992 = vunpack.c.h.b16 %v2696
        %v2993 = vunpack.c.l.b16 %v2697
        %v2994 = vunpack.c.h.b16 %v2697
        %v2995 = vunpack.c.l.b16 %v2698
        %v2996 = vunpack.c.h.b16 %v2698
        %v2997 = vunpack.c.l.b16 %v2699
        %v2998 = vunpack.c.h.b16 %v2699
        %v2999 = vunpack.c.l.b16 %v2700
        %v3000 = vunpack.c.h.b16 %v2700
        %v3001 = vunpack.c.l.b16 %v2701
        %v3002 = vunpack.c.h.b16 %v2701
        %v3003 = vunpack.c.l.b16 %v2702
        %v3004 = vunpack.c.h.b16 %v2702
        %v3005 = vunpack.c.l.b16 %v2703
        %v3006 = vunpack.c.h.b16 %v2703
        %v3007 = vunpack.c.l.b16 %v2704
        %v3008 = vunpack.c.h.b16 %v2704
        %v3009 = vunpack.c.l.b16 %v2705
        %v3010 = vunpack.c.h.b16 %v2705
        %v3011 = vunpack.c.l.b16 %v2706
        %v3012 = vunpack.c.h.b16 %v2706
        %v3013 = vunpack.c.l.b16 %v2707
        %v3014 = vunpack.c.h.b16 %v2707
        %v3015 = vunpack.c.l.b16 %v2708
        %v3016 = vunpack.c.h.b16 %v2708
        %v3017 = vunpack.c.l.b16 %v2709
        %v3018 = vunpack.c.h.b16 %v2709
        %v3019 = vunpack.c.l.b16 %v2710
        %v3020 = vunpack.c.h.b16 %v2710
        %v3021 = vunpack.c.l.b16 %v2711
        %v3022 = vunpack.c.h.b16 %v2711
        %v3023 = vunpack.c.l.b16 %v2712
        %v3024 = vunpack.c.h.b16 %v2712
        %v3025 = vunpack.c.l.b16 %v2713
        %v3026 = vunpack.c.h.b16 %v2713
        %v3027 = vunpack.c.l.b16 %v2714
        %v3028 = vunpack.c.h.b16 %v2714
        %v3029 = vunpack.c.l.b16 %v2715
        %v3030 = vunpack.c.h.b16 %v2715
        %v3031 = vunpack.c.l.b16 %v2716
        %v3032 = vunpack.c.h.b16 %v2716
        %v3033 = vunpack.c.l.b16 %v2717
        %v3034 = vunpack.c.h.b16 %v2717
        %v3035 = vunpack.c.l.b16 %v2718
        %v3036 = vunpack.c.h.b16 %v2718
        %v3037 = vunpack.c.l.b16 %v2719
        %v3038 = vunpack.c.h.b16 %v2719
        %v3039 = vunpack.c.l.b16 %v2720
        %v3040 = vunpack.c.h.b16 %v2720
        %v3041 = vunpack.c.l.b16 %v2721
        %v3042 = vunpack.c.h.b16 %v2721
        %v3043 = vunpack.c.l.b16 %v2722
        %v3044 = vunpack.c.h.b16 %v2722
        %v3045 = vunpack.c.l.b16 %v2723
        %v3046 = vunpack.c.h.b16 %v2723
        %v3047 = vunpack.c.l.b16 %v2724
        %v3048 = vunpack.c.h.b16 %v2724
        %v3049 = vunpack.c.l.b16 %v2725
        %v3050 = vunpack.c.h.b16 %v2725
        %v3051 = vunpack.c.l.b16 %v2726
        %v3052 = vunpack.c.h.b16 %v2726
        %v3053 = vunpack.c.l.b16 %v2727
        %v3054 = vunpack.c.h.b16 %v2727
        %v3055 = vunpack.c.l.b16 %v2728
        %v3056 = vunpack.c.h.b16 %v2728
        %v3057 = vunpack.c.l.b16 %v2729
        %v3058 = vunpack.c.h.b16 %v2729
        %v3059 = vunpack.c.l.b16 %v2730
        %v3060 = vunpack.c.h.b16 %v2730
        %v3061 = vunpack.c.l.b16 %v2731
        %v3062 = vunpack.c.h.b16 %v2731
        %v3063 = vunpack.c.l.b16 %v2732
        %v3064 = vunpack.c.h.b16 %v2732
        %v3065 = vunpack.c.l.b16 %v2733
        %v3066 = vunpack.c.h.b16 %v2733
        %v3067 = vunpack.c.l.b16 %v2734
        %v3068 = vunpack.c.h.b16 %v2734
        %v3069 = vunpack.c.l.b16 %v2735
        %v3070 = vunpack.c.h.b16 %v2735
        %v3071 = vunpack.c.l.b16 %v2736
        %v3072 = vunpack.c.h.b16 %v2736
        %v3073 = vunpack.c.l.b16 %v2737
        %v3074 = vunpack.c.h.b16 %v2737
        %v3075 = vunpack.c.l.b16 %v2738
        %v3076 = vunpack.c.h.b16 %v2738
        %v3077 = vunpack.c.l.b16 %v2739
        %v3078 = vunpack.c.h.b16 %v2739
        %v3079 = vunpack.c.l.b16 %v2740
        %v3080 = vunpack.c.h.b16 %v2740
        %v3081 = vunpack.c.l.b16 %v2741
        %v3082 = vunpack.c.h.b16 %v2741
        %v3083 = vunpack.c.l.b16 %v2742
        %v3084 = vunpack.c.h.b16 %v2742
        %v3085 = vunpack.c.l.b16 %v2743
        %v3086 = vunpack.c.h.b16 %v2743
        %v3087 = vunpack.c.l.b16 %v2744
        %v3088 = vunpack.c.h.b16 %v2744
        %v3089 = vunpack.c.l.b16 %v2745
        %v3090 = vunpack.c.h.b16 %v2745
        %v3091 = vunpack.c.l.b16 %v2746
        %v3092 = vunpack.c.h.b16 %v2746
        %v3093 = vunpack.c.l.b16 %v2747
        %v3094 = vunpack.c.h.b16 %v2747
        %v3095 = vunpack.c.l.b16 %v2748
        %v3096 = vunpack.c.h.b16 %v2748
        %v3097 = vunpack.c.l.b16 %v2749
        %v3098 = vunpack.c.h.b16 %v2749
        %v3099 = vunpack.c.l.b16 %v2750
        %v3100 = vunpack.c.h.b16 %v2750
        %v3101 = vunpack.c.l.b16 %v2751
        %v3102 = vunpack.c.h.b16 %v2751
        %v3103 = vunpack.c.l.b16 %v2752
        %v3104 = vunpack.c.h.b16 %v2752
        %v3105 = vunpack.c.l.b16 %v2753
        %v3106 = vunpack.c.h.b16 %v2753
        %v3107 = vunpack.c.l.b16 %v2754
        %v3108 = vunpack.c.h.b16 %v2754
        %v3109 = vunpack.c.l.b16 %v2755
        %v3110 = vunpack.c.h.b16 %v2755
        %v3111 = vunpack.c.l.b16 %v2756
        %v3112 = vunpack.c.h.b16 %v2756
        %v3113 = vunpack.c.l.b16 %v2757
        %v3114 = vunpack.c.h.b16 %v2757
        %v3115 = vunpack.c.l.b16 %v2758
        %v3116 = vunpack.c.h.b16 %v2758
        %v3117 = vunpack.c.l.b16 %v2759
        %v3118 = vunpack.c.h.b16 %v2759
        %v3119 = vunpack.c.l.b16 %v2760
        %v3120 = vunpack.c.h.b16 %v2760
        %v3121 = vunpack.c.l.b16 %v2761
        %v3122 = vunpack.c.h.b16 %v2761
        %v3123 = vunpack.c.l.b16 %v2762
        %v3124 = vunpack.c.h.b16 %v2762
        %v3125 = vunpack.c.l.b16 %v2763
        %v3126 = vunpack.c.h.b16 %v2763
        %v3127 = vunpack.c.l.b16 %v2764
        %v3128 = vunpack.c.h.b16 %v2764
        %v3129 = vunpack.c.l.b16 %v2765
        %v3130 = vunpack.c.h.b16 %v2765
        %v3131 = vunpack.c.l.b16 %v2766
        %v3132 = vunpack.c.h.b16 %v2766
        %v3133 = vunpack.c.l.b16 %v2767
        %v3134 = vunpack.c.h.b16 %v2767
        %v3135 = vunpack.c.l.b16 %v2768
        %v3136 = vunpack.c.h.b16 %v2768
        %v3137 = vunpack.c.l.b16 %v2769
        %v3138 = vunpack.c.h.b16 %v2769
        %v3139 = vunpack.c.l.b16 %v2770
        %v3140 = vunpack.c.h.b16 %v2770
        %v3141 = vunpack.c.l.b16 %v2771
        %v3142 = vunpack.c.h.b16 %v2771
        %v3143 = vunpack.c.l.b16 %v2772
        %v3144 = vunpack.c.h.b16 %v2772
        %v3145 = vunpack.c.l.b16 %v2773
        %v3146 = vunpack.c.h.b16 %v2773
        %v3147 = vunpack.c.l.b16 %v2774
        %v3148 = vunpack.c.h.b16 %v2774
        %v3149 = vunpack.c.l.b16 %v2775
        %v3150 = vunpack.c.h.b16 %v2775
        %v3151 = vunpack.c.l.b16 %v2776
        %v3152 = vunpack.c.h.b16 %v2776
        %v3153 = vunpack.c.l.b16 %v2777
        %v3154 = vunpack.c.h.b16 %v2777
        %v3155 = vunpack.c.l.b16 %v2778
        %v3156 = vunpack.c.h.b16 %v2778
        %v3157 = vunpack.c.l.b16 %v2779
        %v3158 = vunpack.c.h.b16 %v2779
        %v3159 = vunpack.c.l.b16 %v2780
        %v3160 = vunpack.c.h.b16 %v2780
        %v3161 = vunpack.c.l.b16 %v2781
        %v3162 = vunpack.c.h.b16 %v2781
        %v3163 = vunpack.c.l.b16 %v2782
        %v3164 = vunpack.c.h.b16 %v2782
        %v3165 = vunpack.c.l.b16 %v2783
        %v3166 = vunpack.c.h.b16 %v2783
        %v3167 = vunpack.c.l.b16 %v2784
        %v3168 = vunpack.c.h.b16 %v2784
        %v3169 = vunpack.c.l.b16 %v2785
        %v3170 = vunpack.c.h.b16 %v2785
        %v3171 = vunpack.c.l.b16 %v2786
        %v3172 = vunpack.c.h.b16 %v2786
        %v3173 = vunpack.c.l.b16 %v2787
        %v3174 = vunpack.c.h.b16 %v2787
        %v3175 = vunpack.c.l.b16 %v2788
        %v3176 = vunpack.c.h.b16 %v2788
        %v3177 = vunpack.c.l.b16 %v2789
        %v3178 = vunpack.c.h.b16 %v2789
        %v3179 = vunpack.c.l.b16 %v2790
        %v3180 = vunpack.c.h.b16 %v2790
        %v3181 = vpack.c.b16 %v2933, %v2925
        %v3182 = vpack.c.b16 %v2934, %v2926
        %v3183 = vpack.c.b16 %v2935, %v2927
        %v3184 = vpack.c.b16 %v2936, %v2928
        %v3185 = vpack.c.b16 %v2937, %v2929
        %v3186 = vpack.c.b16 %v2938, %v2930
        %v3187 = vpack.c.b16 %v2939, %v2931
        %v3188 = vpack.c.b16 %v2940, %v2932
        %v3189 = vpack.c.b16 %v2949, %v2941
        %v3190 = vpack.c.b16 %v2950, %v2942
        %v3191 = vpack.c.b16 %v2951, %v2943
        %v3192 = vpack.c.b16 %v2952, %v2944
        %v3193 = vpack.c.b16 %v2953, %v2945
        %v3194 = vpack.c.b16 %v2954, %v2946
        %v3195 = vpack.c.b16 %v2955, %v2947
        %v3196 = vpack.c.b16 %v2956, %v2948
        %v3197 = vpack.c.b16 %v2965, %v2957
        %v3198 = vpack.c.b16 %v2966, %v2958
        %v3199 = vpack.c.b16 %v2967, %v2959
        %v3200 = vpack.c.b16 %v2968, %v2960
        %v3201 = vpack.c.b16 %v2969, %v2961
        %v3202 = vpack.c.b16 %v2970, %v2962
        %v3203 = vpack.c.b16 %v2971, %v2963
        %v3204 = vpack.c.b16 %v2972, %v2964
        %v3205 = vpack.c.b16 %v2981, %v2973
        %v3206 = vpack.c.b16 %v2982, %v2974
        %v3207 = vpack.c.b16 %v2983, %v2975
        %v3208 = vpack.c.b16 %v2984, %v2976
        %v3209 = vpack.c.b16 %v2985, %v2977
        %v3210 = vpack.c.b16 %v2986, %v2978
        %v3211 = vpack.c.b16 %v2987, %v2979
        %v3212 = vpack.c.b16 %v2988, %v2980
        %v3213 = vpack.c.b16 %v2997, %v2989
        %v3214 = vpack.c.b16 %v2998, %v2990
        %v3215 = vpack.c.b16 %v2999, %v2991
        %v3216 = vpack.c.b16 %v3000, %v2992
        %v3217 = vpack.c.b16 %v3001, %v2993
        %v3218 = vpack.c.b16 %v3002, %v2994
        %v3219 = vpack.c.b16 %v3003, %v2995
        %v3220 = vpack.c.b16 %v3004, %v2996
        %v3221 = vpack.c.b16 %v3013, %v3005
        %v3222 = vpack.c.b16 %v3014, %v3006
        %v3223 = vpack.c.b16 %v3015, %v3007
        %v3224 = vpack.c.b16 %v3016, %v3008
        %v3225 = vpack.c.b16 %v3017, %v3009
        %v3226 = vpack.c.b16 %v3018, %v3010
        %v3227 = vpack.c.b16 %v3019, %v3011
        %v3228 = vpack.c.b16 %v3020, %v3012
        %v3229 = vpack.c.b16 %v3029, %v3021
        %v3230 = vpack.c.b16 %v3030, %v3022
        %v3231 = vpack.c.b16 %v3031, %v3023
        %v3232 = vpack.c.b16 %v3032, %v3024
        %v3233 = vpack.c.b16 %v3033, %v3025
        %v3234 = vpack.c.b16 %v3034, %v3026
        %v3235 = vpack.c.b16 %v3035, %v3027
        %v3236 = vpack.c.b16 %v3036, %v3028
        %v3237 = vpack.c.b16 %v3045, %v3037
        %v3238 = vpack.c.b16 %v3046, %v3038
        %v3239 = vpack.c.b16 %v3047, %v3039
        %v3240 = vpack.c.b16 %v3048, %v3040
        %v3241 = vpack.c.b16 %v3049, %v3041
        %v3242 = vpack.c.b16 %v3050, %v3042
        %v3243 = vpack.c.b16 %v3051, %v3043
        %v3244 = vpack.c.b16 %v3052, %v3044
        %v3245 = vpack.c.b16 %v3061, %v3053
        %v3246 = vpack.c.b16 %v3062, %v3054
        %v3247 = vpack.c.b16 %v3063, %v3055
        %v3248 = vpack.c.b16 %v3064, %v3056
        %v3249 = vpack.c.b16 %v3065, %v3057
        %v3250 = vpack.c.b16 %v3066, %v3058
        %v3251 = vpack.c.b16 %v3067, %v3059
        %v3252 = vpack.c.b16 %v3068, %v3060
        %v3253 = vpack.c.b16 %v3077, %v3069
        %v3254 = vpack.c.b16 %v3078, %v3070
        %v3255 = vpack.c.b16 %v3079, %v3071
        %v3256 = vpack.c.b16 %v3080, %v3072
        %v3257 = vpack.c.b16 %v3081, %v3073
        %v3258 = vpack.c.b16 %v3082, %v3074
        %v3259 = vpack.c.b16 %v3083, %v3075
        %v3260 = vpack.c.b16 %v3084, %v3076
        %v3261 = vpack.c.b16 %v3093, %v3085
        %v3262 = vpack.c.b16 %v3094, %v3086
        %v3263 = vpack.c.b16 %v3095, %v3087
        %v3264 = vpack.c.b16 %v3096, %v3088
        %v3265 = vpack.c.b16 %v3097, %v3089
        %v3266 = vpack.c.b16 %v3098, %v3090
        %v3267 = vpack.c.b16 %v3099, %v3091
        %v3268 = vpack.c.b16 %v3100, %v3092
        %v3269 = vpack.c.b16 %v3109, %v3101
        %v3270 = vpack.c.b16 %v3110, %v3102
        %v3271 = vpack.c.b16 %v3111, %v3103
        %v3272 = vpack.c.b16 %v3112, %v3104
        %v3273 = vpack.c.b16 %v3113, %v3105
        %v3274 = vpack.c.b16 %v3114, %v3106
        %v3275 = vpack.c.b16 %v3115, %v3107
        %v3276 = vpack.c.b16 %v3116, %v3108
        %v3277 = vpack.c.b16 %v3125, %v3117
        %v3278 = vpack.c.b16 %v3126, %v3118
        %v3279 = vpack.c.b16 %v3127, %v3119
        %v3280 = vpack.c.b16 %v3128, %v3120
        %v3281 = vpack.c.b16 %v3129, %v3121
        %v3282 = vpack.c.b16 %v3130, %v3122
        %v3283 = vpack.c.b16 %v3131, %v3123
        %v3284 = vpack.c.b16 %v3132, %v3124
        %v3285 = vpack.c.b16 %v3141, %v3133
        %v3286 = vpack.c.b16 %v3142, %v3134
        %v3287 = vpack.c.b16 %v3143, %v3135
        %v3288 = vpack.c.b16 %v3144, %v3136
        %v3289 = vpack.c.b16 %v3145, %v3137
        %v3290 = vpack.c.b16 %v3146, %v3138
        %v3291 = vpack.c.b16 %v3147, %v3139
        %v3292 = vpack.c.b16 %v3148, %v3140
        %v3293 = vpack.c.b16 %v3157, %v3149
        %v3294 = vpack.c.b16 %v3158, %v3150
        %v3295 = vpack.c.b16 %v3159, %v3151
        %v3296 = vpack.c.b16 %v3160, %v3152
        %v3297 = vpack.c.b16 %v3161, %v3153
        %v3298 = vpack.c.b16 %v3162, %v3154
        %v3299 = vpack.c.b16 %v3163, %v3155
        %v3300 = vpack.c.b16 %v3164, %v3156
        %v3301 = vpack.c.b16 %v3173, %v3165
        %v3302 = vpack.c.b16 %v3174, %v3166
        %v3303 = vpack.c.b16 %v3175, %v3167
        %v3304 = vpack.c.b16 %v3176, %v3168
        %v3305 = vpack.c.b16 %v3177, %v3169
        %v3306 = vpack.c.b16 %v3178, %v3170
        %v3307 = vpack.c.b16 %v3179, %v3171
        %v3308 = vpack.c.b16 %v3180, %v3172
        %3437 = vmatprep.subr.bf16.mxu0 %v3238
        %3438 = vmatpush1.bf16.msra.mxu0 %v3237
        %3439 = vmatprep.subr.bf16.mxu0 %v3230
        %3440 = vmatpush1.bf16.msra.mxu0 %v3229
        %3441 = vmatprep.subr.bf16.mxu0 %v3222
        %3442 = vmatpush1.bf16.msra.mxu0 %v3221
        %3443 = vmatprep.subr.bf16.mxu0 %v3214
        %3444 = vmatpush1.bf16.msra.mxu0 %v3213
        %3445 = vmatprep.subr.bf16.mxu0 %v3206
        %3446 = vmatpush1.bf16.msra.mxu0 %v3205
        %3447 = vmatprep.subr.bf16.mxu0 %v3198
        %3448 = vmatpush1.bf16.msra.mxu0 %v3197
        %3449 = vmatprep.subr.bf16.mxu0 %v3190
        %3450 = vmatpush1.bf16.msra.mxu0 %v3189
        %3451 = vmatprep.subr.bf16.mxu0 %v3182
        %3452 = vmatpush1.bf16.msra.mxu0 %v3181
        %3453 = vmatprep.subr.bf16.mxu0 %v3302
        %3454 = vmatpush2.bf16.msra.mxu0 %v3301
        %3455 = vmatprep.subr.bf16.mxu0 %v3294
        %3456 = vmatpush2.bf16.msra.mxu0 %v3293
        %3457 = vmatprep.subr.bf16.mxu0 %v3286
        %3458 = vmatpush2.bf16.msra.mxu0 %v3285
        %3459 = vmatprep.subr.bf16.mxu0 %v3278
        %3460 = vmatpush2.bf16.msra.mxu0 %v3277
        %3461 = vmatprep.subr.bf16.mxu0 %v3270
        %3462 = vmatpush2.bf16.msra.mxu0 %v3269
        %3463 = vmatprep.subr.bf16.mxu0 %v3262
        %3464 = vmatpush2.bf16.msra.mxu0 %v3261
        %3465 = vmatprep.subr.bf16.mxu0 %v3254
        %3466 = vmatpush2.bf16.msra.mxu0 %v3253
        %3467 = vmatprep.subr.bf16.mxu0 %v3246
        %3468 = vmatpush2.bf16.msra.mxu0 %v3245
        %3469 = vmatprep.mubr.bf16.mxu0 %v2792
        %3470 = vmatmul.mubr.bf16.gmra.mxu0 %v2791
        %v3471 = vpop.f32.mrf.mxu0
        %v3472 = vadd.f32 0.0, %v3471
        %v3473 = vpop.f32.mrf.mxu0
        %v3474 = vadd.f32 0.0, %v3473
        %v3475 = vpop.f32.mrf.mxu0
        %v3476 = vadd.f32 0.0, %v3475
        %v3477 = vpop.f32.mrf.mxu0
        %v3478 = vadd.f32 0.0, %v3477
        %3479 = vmatprep.mubr.bf16.mxu0 %v2794
        %3480 = vmatmul.mubr.bf16.gmra.mxu0 %v2793
        %v3481 = vpop.f32.mrf.mxu0
        %v3482 = vadd.f32 0.0, %v3481
        %v3483 = vpop.f32.mrf.mxu0
        %v3484 = vadd.f32 0.0, %v3483
        %v3485 = vpop.f32.mrf.mxu0
        %v3486 = vadd.f32 0.0, %v3485
        %v3487 = vpop.f32.mrf.mxu0
        %v3488 = vadd.f32 0.0, %v3487
        %3489 = vmatprep.mubr.bf16.mxu0 %v2796
        %3490 = vmatmul.mubr.bf16.gmra.mxu0 %v2795
        %v3491 = vpop.f32.mrf.mxu0
        %v3492 = vadd.f32 0.0, %v3491
        %v3493 = vpop.f32.mrf.mxu0
        %v3494 = vadd.f32 0.0, %v3493
        %v3495 = vpop.f32.mrf.mxu0
        %v3496 = vadd.f32 0.0, %v3495
        %v3497 = vpop.f32.mrf.mxu0
        %v3498 = vadd.f32 0.0, %v3497
        %3499 = vdwg.mxu0
        %3500 = vmatprep.subr.bf16.mxu0 %v3240
        %3501 = vmatpush1.bf16.msra.mxu0 %v3239
        %3502 = vmatprep.subr.bf16.mxu0 %v3232
        %3503 = vmatpush1.bf16.msra.mxu0 %v3231
        %3504 = vmatprep.subr.bf16.mxu0 %v3224
        %3505 = vmatpush1.bf16.msra.mxu0 %v3223
        %3506 = vmatprep.subr.bf16.mxu0 %v3216
        %3507 = vmatpush1.bf16.msra.mxu0 %v3215
        %3508 = vmatprep.subr.bf16.mxu0 %v3208
        %3509 = vmatpush1.bf16.msra.mxu0 %v3207
        %3510 = vmatprep.subr.bf16.mxu0 %v3200
        %3511 = vmatpush1.bf16.msra.mxu0 %v3199
        %3512 = vmatprep.subr.bf16.mxu0 %v3192
        %3513 = vmatpush1.bf16.msra.mxu0 %v3191
        %3514 = vmatprep.subr.bf16.mxu0 %v3184
        %3515 = vmatpush1.bf16.msra.mxu0 %v3183
        %3516 = vmatprep.subr.bf16.mxu0 %v3304
        %3517 = vmatpush2.bf16.msra.mxu0 %v3303
        %3518 = vmatprep.subr.bf16.mxu0 %v3296
        %3519 = vmatpush2.bf16.msra.mxu0 %v3295
        %3520 = vmatprep.subr.bf16.mxu0 %v3288
        %3521 = vmatpush2.bf16.msra.mxu0 %v3287
        %3522 = vmatprep.subr.bf16.mxu0 %v3280
        %3523 = vmatpush2.bf16.msra.mxu0 %v3279
        %3524 = vmatprep.subr.bf16.mxu0 %v3272
        %3525 = vmatpush2.bf16.msra.mxu0 %v3271
        %3526 = vmatprep.subr.bf16.mxu0 %v3264
        %3527 = vmatpush2.bf16.msra.mxu0 %v3263
        %3528 = vmatprep.subr.bf16.mxu0 %v3256
        %3529 = vmatpush2.bf16.msra.mxu0 %v3255
        %3530 = vmatprep.subr.bf16.mxu0 %v3248
        %3531 = vmatpush2.bf16.msra.mxu0 %v3247
        %3532 = vmatprep.mubr.bf16.mxu0 %v2792
        %3533 = vmatmul.mubr.bf16.gmra.mxu0 %v2791
        %v3534 = vpop.f32.mrf.mxu0
        %v3535 = vadd.f32 0.0, %v3534
        %v3536 = vpop.f32.mrf.mxu0
        %v3537 = vadd.f32 0.0, %v3536
        %v3538 = vpop.f32.mrf.mxu0
        %v3539 = vadd.f32 0.0, %v3538
        %v3540 = vpop.f32.mrf.mxu0
        %v3541 = vadd.f32 0.0, %v3540
        %3542 = vmatprep.mubr.bf16.mxu0 %v2794
        %3543 = vmatmul.mubr.bf16.gmra.mxu0 %v2793
        %v3544 = vpop.f32.mrf.mxu0
        %v3545 = vadd.f32 0.0, %v3544
        %v3546 = vpop.f32.mrf.mxu0
        %v3547 = vadd.f32 0.0, %v3546
        %v3548 = vpop.f32.mrf.mxu0
        %v3549 = vadd.f32 0.0, %v3548
        %v3550 = vpop.f32.mrf.mxu0
        %v3551 = vadd.f32 0.0, %v3550
        %3552 = vmatprep.mubr.bf16.mxu0 %v2796
        %3553 = vmatmul.mubr.bf16.gmra.mxu0 %v2795
        %v3554 = vpop.f32.mrf.mxu0
        %v3555 = vadd.f32 0.0, %v3554
        %v3556 = vpop.f32.mrf.mxu0
        %v3557 = vadd.f32 0.0, %v3556
        %v3558 = vpop.f32.mrf.mxu0
        %v3559 = vadd.f32 0.0, %v3558
        %v3560 = vpop.f32.mrf.mxu0
        %v3561 = vadd.f32 0.0, %v3560
        %3562 = vdwg.mxu0
        %3563 = vmatprep.subr.bf16.mxu0 %v3242
        %3564 = vmatpush1.bf16.msra.mxu0 %v3241
        %3565 = vmatprep.subr.bf16.mxu0 %v3234
        %3566 = vmatpush1.bf16.msra.mxu0 %v3233
        %3567 = vmatprep.subr.bf16.mxu0 %v3226
        %3568 = vmatpush1.bf16.msra.mxu0 %v3225
        %3569 = vmatprep.subr.bf16.mxu0 %v3218
        %3570 = vmatpush1.bf16.msra.mxu0 %v3217
        %3571 = vmatprep.subr.bf16.mxu0 %v3210
        %3572 = vmatpush1.bf16.msra.mxu0 %v3209
        %3573 = vmatprep.subr.bf16.mxu0 %v3202
        %3574 = vmatpush1.bf16.msra.mxu0 %v3201
        %3575 = vmatprep.subr.bf16.mxu0 %v3194
        %3576 = vmatpush1.bf16.msra.mxu0 %v3193
        %3577 = vmatprep.subr.bf16.mxu0 %v3186
        %3578 = vmatpush1.bf16.msra.mxu0 %v3185
        %3579 = vmatprep.subr.bf16.mxu0 %v3306
        %3580 = vmatpush2.bf16.msra.mxu0 %v3305
        %3581 = vmatprep.subr.bf16.mxu0 %v3298
        %3582 = vmatpush2.bf16.msra.mxu0 %v3297
        %3583 = vmatprep.subr.bf16.mxu0 %v3290
        %3584 = vmatpush2.bf16.msra.mxu0 %v3289
        %3585 = vmatprep.subr.bf16.mxu0 %v3282
        %3586 = vmatpush2.bf16.msra.mxu0 %v3281
        %3587 = vmatprep.subr.bf16.mxu0 %v3274
        %3588 = vmatpush2.bf16.msra.mxu0 %v3273
        %3589 = vmatprep.subr.bf16.mxu0 %v3266
        %3590 = vmatpush2.bf16.msra.mxu0 %v3265
        %3591 = vmatprep.subr.bf16.mxu0 %v3258
        %3592 = vmatpush2.bf16.msra.mxu0 %v3257
        %3593 = vmatprep.subr.bf16.mxu0 %v3250
        %3594 = vmatpush2.bf16.msra.mxu0 %v3249
        %3595 = vmatprep.mubr.bf16.mxu0 %v2792
        %3596 = vmatmul.mubr.bf16.gmra.mxu0 %v2791
        %v3597 = vpop.f32.mrf.mxu0
        %v3598 = vadd.f32 0.0, %v3597
        %v3599 = vpop.f32.mrf.mxu0
        %v3600 = vadd.f32 0.0, %v3599
        %v3601 = vpop.f32.mrf.mxu0
        %v3602 = vadd.f32 0.0, %v3601
        %v3603 = vpop.f32.mrf.mxu0
        %v3604 = vadd.f32 0.0, %v3603
        %3605 = vmatprep.mubr.bf16.mxu0 %v2794
        %3606 = vmatmul.mubr.bf16.gmra.mxu0 %v2793
        %v3607 = vpop.f32.mrf.mxu0
        %v3608 = vadd.f32 0.0, %v3607
        %v3609 = vpop.f32.mrf.mxu0
        %v3610 = vadd.f32 0.0, %v3609
        %v3611 = vpop.f32.mrf.mxu0
        %v3612 = vadd.f32 0.0, %v3611
        %v3613 = vpop.f32.mrf.mxu0
        %v3614 = vadd.f32 0.0, %v3613
        %3615 = vmatprep.mubr.bf16.mxu0 %v2796
        %3616 = vmatmul.mubr.bf16.gmra.mxu0 %v2795
        %v3617 = vpop.f32.mrf.mxu0
        %v3618 = vadd.f32 0.0, %v3617
        %v3619 = vpop.f32.mrf.mxu0
        %v3620 = vadd.f32 0.0, %v3619
        %v3621 = vpop.f32.mrf.mxu0
        %v3622 = vadd.f32 0.0, %v3621
        %v3623 = vpop.f32.mrf.mxu0
        %v3624 = vadd.f32 0.0, %v3623
        %3625 = vdwg.mxu0
        %3626 = vmatprep.subr.bf16.mxu0 %v3244
        %3627 = vmatpush1.bf16.msra.mxu0 %v3243
        %3628 = vmatprep.subr.bf16.mxu0 %v3236
        %3629 = vmatpush1.bf16.msra.mxu0 %v3235
        %3630 = vmatprep.subr.bf16.mxu0 %v3228
        %3631 = vmatpush1.bf16.msra.mxu0 %v3227
        %3632 = vmatprep.subr.bf16.mxu0 %v3220
        %3633 = vmatpush1.bf16.msra.mxu0 %v3219
        %3634 = vmatprep.subr.bf16.mxu0 %v3212
        %3635 = vmatpush1.bf16.msra.mxu0 %v3211
        %3636 = vmatprep.subr.bf16.mxu0 %v3204
        %3637 = vmatpush1.bf16.msra.mxu0 %v3203
        %3638 = vmatprep.subr.bf16.mxu0 %v3196
        %3639 = vmatpush1.bf16.msra.mxu0 %v3195
        %3640 = vmatprep.subr.bf16.mxu0 %v3188
        %3641 = vmatpush1.bf16.msra.mxu0 %v3187
        %3642 = vmatprep.subr.bf16.mxu0 %v3308
        %3643 = vmatpush2.bf16.msra.mxu0 %v3307
        %3644 = vmatprep.subr.bf16.mxu0 %v3300
        %3645 = vmatpush2.bf16.msra.mxu0 %v3299
        %3646 = vmatprep.subr.bf16.mxu0 %v3292
        %3647 = vmatpush2.bf16.msra.mxu0 %v3291
        %3648 = vmatprep.subr.bf16.mxu0 %v3284
        %3649 = vmatpush2.bf16.msra.mxu0 %v3283
        %3650 = vmatprep.subr.bf16.mxu0 %v3276
        %3651 = vmatpush2.bf16.msra.mxu0 %v3275
        %3652 = vmatprep.subr.bf16.mxu0 %v3268
        %3653 = vmatpush2.bf16.msra.mxu0 %v3267
        %3654 = vmatprep.subr.bf16.mxu0 %v3260
        %3655 = vmatpush2.bf16.msra.mxu0 %v3259
        %3656 = vmatprep.subr.bf16.mxu0 %v3252
        %3657 = vmatpush2.bf16.msra.mxu0 %v3251
        %3658 = vmatprep.mubr.bf16.mxu0 %v2792
        %3659 = vmatmul.mubr.bf16.gmra.mxu0 %v2791
        %v3660 = vpop.f32.mrf.mxu0
        %v3661 = vadd.f32 0.0, %v3660
        %v3662 = vpop.f32.mrf.mxu0
        %v3663 = vadd.f32 0.0, %v3662
        %v3664 = vpop.f32.mrf.mxu0
        %v3665 = vadd.f32 0.0, %v3664
        %v3666 = vpop.f32.mrf.mxu0
        %v3667 = vadd.f32 0.0, %v3666
        %3668 = vmatprep.mubr.bf16.mxu0 %v2794
        %3669 = vmatmul.mubr.bf16.gmra.mxu0 %v2793
        %v3670 = vpop.f32.mrf.mxu0
        %v3671 = vadd.f32 0.0, %v3670
        %v3672 = vpop.f32.mrf.mxu0
        %v3673 = vadd.f32 0.0, %v3672
        %v3674 = vpop.f32.mrf.mxu0
        %v3675 = vadd.f32 0.0, %v3674
        %v3676 = vpop.f32.mrf.mxu0
        %v3677 = vadd.f32 0.0, %v3676
        %3678 = vmatprep.mubr.bf16.mxu0 %v2796
        %3679 = vmatmul.mubr.bf16.gmra.mxu0 %v2795
        %v3680 = vpop.f32.mrf.mxu0
        %v3681 = vadd.f32 0.0, %v3680
        %v3682 = vpop.f32.mrf.mxu0
        %v3683 = vadd.f32 0.0, %v3682
        %v3684 = vpop.f32.mrf.mxu0
        %v3685 = vadd.f32 0.0, %v3684
        %v3686 = vpop.f32.mrf.mxu0
        %v3687 = vadd.f32 0.0, %v3686
        %3688 = vdwg.mxu0
        %v3689 = vmul.f32 %v3472, %v3482
        %v3690 = vmul.f32 %v3474, %v3484
        %v3691 = vmul.f32 %v3535, %v3545
        %v3692 = vmul.f32 %v3537, %v3547
        %v3693 = vmul.f32 %v3598, %v3608
        %v3694 = vmul.f32 %v3600, %v3610
        %v3695 = vmul.f32 %v3661, %v3671
        %v3696 = vmul.f32 %v3663, %v3673
        %v3697 = vmul.f32 %v3476, %v3486
        %v3698 = vmul.f32 %v3478, %v3488
        %v3699 = vmul.f32 %v3539, %v3549
        %v3700 = vmul.f32 %v3541, %v3551
        %v3701 = vmul.f32 %v3602, %v3612
        %v3702 = vmul.f32 %v3604, %v3614
        %v3703 = vmul.f32 %v3665, %v3675
        %v3704 = vmul.f32 %v3667, %v3677
        %v3705 = vadd.f32 %v3689, %v493
        %v3706 = vadd.f32 %v3690, %v494
        %v3707 = vadd.f32 %v3691, %v495
        %v3708 = vadd.f32 %v3692, %v496
        %v3709 = vadd.f32 %v3693, %v497
        %v3710 = vadd.f32 %v3694, %v498
        %v3711 = vadd.f32 %v3695, %v499
        %v3712 = vadd.f32 %v3696, %v500
        %v3713 = vadd.f32 %v3697, %v493
        %v3714 = vadd.f32 %v3698, %v494
        %v3715 = vadd.f32 %v3699, %v495
        %v3716 = vadd.f32 %v3700, %v496
        %v3717 = vadd.f32 %v3701, %v497
        %v3718 = vadd.f32 %v3702, %v498
        %v3719 = vadd.f32 %v3703, %v499
        %v3720 = vadd.f32 %v3704, %v500
        %v3721 = vadd.f32 %v3705, %v3706
        %v3722 = vadd.f32 %v3721, %v3707
        %v3723 = vadd.f32 %v3722, %v3708
        %v3724 = vadd.f32 %v3723, %v3709
        %v3725 = vadd.f32 %v3724, %v3710
        %v3726 = vadd.f32 %v3725, %v3711
        %v3727 = vadd.f32 %v3726, %v3712
        %3728 = vadd.xlane.f32.xlu0 %v3727
        %v3729 = vpop.xlane.xlu0 %3728
        %v3730 = vadd.f32 %v3713, %v3714
        %v3731 = vadd.f32 %v3730, %v3715
        %v3732 = vadd.f32 %v3731, %v3716
        %v3733 = vadd.f32 %v3732, %v3717
        %v3734 = vadd.f32 %v3733, %v3718
        %v3735 = vadd.f32 %v3734, %v3719
        %v3736 = vadd.f32 %v3735, %v3720
        %3737 = vadd.xlane.f32.xlu0 %v3736
        %v3738 = vpop.xlane.xlu0 %3737
        %v3739 = vrcp.pop 1024.0
        %v3740 = vmul.f32 %v3729, %v3739
        %v3741 = vmul.f32 %v3738, %v3739
        %v3742 = vld [vmem:[%s4 + $0xf0] sm:$0xff]
        %v3743 = vld [vmem:[%s4 + $0xf8] sm:$0xff]
        %v3744 = vld [vmem:[%s7 + $0xb0] sm:$0xff]
        %v3745 = vld [vmem:[%s7 + $0xb8] sm:$0xff]
        %v3747 = vsel %vm505, %v3742, 0
        %v3750 = vsel %vm505, %v3743, 0
        %3752 = vmatprep.subr.mxu0 0.0
        %3753 = vmatpush1.msra.mxu0 0.0
        %3754 = vmatprep.subr.mxu0 0.0
        %3755 = vmatpush1.msra.mxu0 0.0
        %3756 = vmatprep.subr.mxu0 0.0
        %3757 = vmatpush1.msra.mxu0 0.0
        %3758 = vmatprep.subr.mxu0 0.0
        %3759 = vmatpush1.msra.mxu0 0.0
        %3760 = vmatprep.subr.mxu0 0.0
        %3761 = vmatpush1.msra.mxu0 0.0
        %3762 = vmatprep.subr.mxu0 0.0
        %3763 = vmatpush1.msra.mxu0 0.0
        %3764 = vmatprep.subr.mxu0 0.0
        %3765 = vmatpush1.msra.mxu0 0.0
        %3766 = vmatprep.subr.mxu0 0.0
        %3767 = vmatpush1.msra.mxu0 0.0
        %3768 = vmatprep.subr.mxu0 0.0
        %3769 = vmatpush1.msra.mxu0 0.0
        %3770 = vmatprep.subr.mxu0 0.0
        %3771 = vmatpush1.msra.mxu0 0.0
        %3772 = vmatprep.subr.mxu0 0.0
        %3773 = vmatpush1.msra.mxu0 0.0
        %3774 = vmatprep.subr.mxu0 0.0
        %3775 = vmatpush1.msra.mxu0 0.0
        %3776 = vmatprep.subr.mxu0 0.0
        %3777 = vmatpush1.msra.mxu0 0.0
        %3778 = vmatprep.subr.mxu0 0.0
        %3779 = vmatpush1.msra.mxu0 0.0
        %3780 = vmatprep.subr.mxu0 0.0
        %3781 = vmatpush1.msra.mxu0 %v3741
        %3782 = vmatprep.subr.mxu0 0.0
        %3783 = vmatpush1.msra.mxu0 %v3740
        %3784 = vmatprep.subr.mxu0 0.0
        %3785 = vmatpush2.msra.mxu0 0.0
        %3786 = vmatprep.subr.mxu0 0.0
        %3787 = vmatpush2.msra.mxu0 0.0
        %3788 = vmatprep.subr.mxu0 0.0
        %3789 = vmatpush2.msra.mxu0 0.0
        %3790 = vmatprep.subr.mxu0 0.0
        %3791 = vmatpush2.msra.mxu0 0.0
        %3792 = vmatprep.subr.mxu0 0.0
        %3793 = vmatpush2.msra.mxu0 0.0
        %3794 = vmatprep.subr.mxu0 0.0
        %3795 = vmatpush2.msra.mxu0 0.0
        %3796 = vmatprep.subr.mxu0 0.0
        %3797 = vmatpush2.msra.mxu0 0.0
        %3798 = vmatprep.subr.mxu0 0.0
        %3799 = vmatpush2.msra.mxu0 0.0
        %3800 = vmatprep.subr.mxu0 0.0
        %3801 = vmatpush2.msra.mxu0 0.0
        %3802 = vmatprep.subr.mxu0 0.0
        %3803 = vmatpush2.msra.mxu0 0.0
        %3804 = vmatprep.subr.mxu0 0.0
        %3805 = vmatpush2.msra.mxu0 0.0
        %3806 = vmatprep.subr.mxu0 0.0
        %3807 = vmatpush2.msra.mxu0 0.0
        %3808 = vmatprep.subr.mxu0 0.0
        %3809 = vmatpush2.msra.mxu0 0.0
        %3810 = vmatprep.subr.mxu0 0.0
        %3811 = vmatpush2.msra.mxu0 0.0
        %3812 = vmatprep.subr.mxu0 0.0
        %3813 = vmatpush2.msra.mxu0 0.0
        %3814 = vmatprep.subr.mxu0 0.0
        %3815 = vmatpush2.msra.mxu0 0.0
        %3816 = vmatprep.mubr.f32.mxu0 0.0
        %3817 = vmatmul.mubr.f32.gmra.mxu0 %v3747
        %v3818 = vpop.f32.mrf.mxu0
        %v3819 = vadd.f32 %v3744, %v3818
        %v3820 = vpop.f32.mrf.mxu0
        %3821 = vmatprep.mubr.f32.mxu0 0.0
        %3822 = vmatmul.mubr.f32.gmra.mxu0 %v3750
        %v3823 = vpop.f32.mrf.mxu0
        %v3824 = vadd.f32 %v3745, %v3823
        %v3825 = vpop.f32.mrf.mxu0
        %3826 = vdwg.mxu0
        %v3827 = vmax.f32 %v3819, 0.0
        %v3828 = vmax.f32 %v3824, 0.0
        %v3829 = vld [vmem:[%s5 + $0x30] sm:$0xff]
        %v3830 = vld [vmem:[%s5 + $0x38] sm:$0xff]
        %v3831 = vld [vmem:[%s7 + $0x100] sm:$0xff]
        %v3832 = vld [vmem:[%s7 + $0x108] sm:$0xff]
        %v3834 = vsel %vm505, %v3829, 0
        %v3837 = vsel %vm505, %v3830, 0
        %3839 = vmatprep.subr.mxu0 0.0
        %3840 = vmatpush1.msra.mxu0 0.0
        %3841 = vmatprep.subr.mxu0 0.0
        %3842 = vmatpush1.msra.mxu0 0.0
        %3843 = vmatprep.subr.mxu0 0.0
        %3844 = vmatpush1.msra.mxu0 0.0
        %3845 = vmatprep.subr.mxu0 0.0
        %3846 = vmatpush1.msra.mxu0 0.0
        %3847 = vmatprep.subr.mxu0 0.0
        %3848 = vmatpush1.msra.mxu0 0.0
        %3849 = vmatprep.subr.mxu0 0.0
        %3850 = vmatpush1.msra.mxu0 0.0
        %3851 = vmatprep.subr.mxu0 0.0
        %3852 = vmatpush1.msra.mxu0 0.0
        %3853 = vmatprep.subr.mxu0 0.0
        %3854 = vmatpush1.msra.mxu0 0.0
        %3855 = vmatprep.subr.mxu0 0.0
        %3856 = vmatpush1.msra.mxu0 0.0
        %3857 = vmatprep.subr.mxu0 0.0
        %3858 = vmatpush1.msra.mxu0 0.0
        %3859 = vmatprep.subr.mxu0 0.0
        %3860 = vmatpush1.msra.mxu0 0.0
        %3861 = vmatprep.subr.mxu0 0.0
        %3862 = vmatpush1.msra.mxu0 0.0
        %3863 = vmatprep.subr.mxu0 0.0
        %3864 = vmatpush1.msra.mxu0 0.0
        %3865 = vmatprep.subr.mxu0 0.0
        %3866 = vmatpush1.msra.mxu0 0.0
        %3867 = vmatprep.subr.mxu0 0.0
        %3868 = vmatpush1.msra.mxu0 %v3828
        %3869 = vmatprep.subr.mxu0 0.0
        %3870 = vmatpush1.msra.mxu0 %v3827
        %3871 = vmatprep.subr.mxu0 0.0
        %3872 = vmatpush2.msra.mxu0 0.0
        %3873 = vmatprep.subr.mxu0 0.0
        %3874 = vmatpush2.msra.mxu0 0.0
        %3875 = vmatprep.subr.mxu0 0.0
        %3876 = vmatpush2.msra.mxu0 0.0
        %3877 = vmatprep.subr.mxu0 0.0
        %3878 = vmatpush2.msra.mxu0 0.0
        %3879 = vmatprep.subr.mxu0 0.0
        %3880 = vmatpush2.msra.mxu0 0.0
        %3881 = vmatprep.subr.mxu0 0.0
        %3882 = vmatpush2.msra.mxu0 0.0
        %3883 = vmatprep.subr.mxu0 0.0
        %3884 = vmatpush2.msra.mxu0 0.0
        %3885 = vmatprep.subr.mxu0 0.0
        %3886 = vmatpush2.msra.mxu0 0.0
        %3887 = vmatprep.subr.mxu0 0.0
        %3888 = vmatpush2.msra.mxu0 0.0
        %3889 = vmatprep.subr.mxu0 0.0
        %3890 = vmatpush2.msra.mxu0 0.0
        %3891 = vmatprep.subr.mxu0 0.0
        %3892 = vmatpush2.msra.mxu0 0.0
        %3893 = vmatprep.subr.mxu0 0.0
        %3894 = vmatpush2.msra.mxu0 0.0
        %3895 = vmatprep.subr.mxu0 0.0
        %3896 = vmatpush2.msra.mxu0 0.0
        %3897 = vmatprep.subr.mxu0 0.0
        %3898 = vmatpush2.msra.mxu0 0.0
        %3899 = vmatprep.subr.mxu0 0.0
        %3900 = vmatpush2.msra.mxu0 0.0
        %3901 = vmatprep.subr.mxu0 0.0
        %3902 = vmatpush2.msra.mxu0 0.0
        %3903 = vmatprep.mubr.f32.mxu0 0.0
        %3904 = vmatmul.mubr.f32.gmra.mxu0 %v3834
        %v3905 = vpop.f32.mrf.mxu0
        %v3906 = vadd.f32 %v3831, %v3905
        %v3907 = vpop.f32.mrf.mxu0
        %3908 = vmatprep.mubr.f32.mxu0 0.0
        %3909 = vmatmul.mubr.f32.gmra.mxu0 %v3837
        %v3910 = vpop.f32.mrf.mxu0
        %v3911 = vadd.f32 %v3832, %v3910
        %v3912 = vpop.f32.mrf.mxu0
        %3913 = vdwg.mxu0
        %v3914 = vsub.f32 0.0, %v3906
        %v3915 = vsub.f32 0.0, %v3911
        %v3916 = vmul.f32 %v3914, 1.442695
        %v3917 = vpow.pop %v3916
        %v3918 = vmul.f32 %v3915, 1.442695
        %v3919 = vpow.pop %v3918
        %v3920 = vadd.f32 %v3917, 1.0
        %v3921 = vadd.f32 %v3919, 1.0
        %v3922 = vrcp.pop %v3920
        %v3923 = vrcp.pop %v3921
        %3925 = vset.pattern.permute.xlu0 0
        %3926 = vperm.xlu0 %3925, %v3922
        %v3927 = vpop.permute.xlu0 %3926
        %3930 = vset.pattern.permute.xlu0 0
        %3931 = vperm.xlu0 %3930, %v3923
        %v3932 = vpop.permute.xlu0 %3931
        %v3934 = vmul.f32 %v3705, %v3927
        %v3935 = vmul.f32 %v3706, %v3927
        %v3936 = vmul.f32 %v3707, %v3927
        %v3937 = vmul.f32 %v3708, %v3927
        %v3938 = vmul.f32 %v3709, %v3927
        %v3939 = vmul.f32 %v3710, %v3927
        %v3940 = vmul.f32 %v3711, %v3927
        %v3941 = vmul.f32 %v3712, %v3927
        %v3942 = vmul.f32 %v3713, %v3932
        %v3943 = vmul.f32 %v3714, %v3932
        %v3944 = vmul.f32 %v3715, %v3932
        %v3945 = vmul.f32 %v3716, %v3932
        %v3946 = vmul.f32 %v3717, %v3932
        %v3947 = vmul.f32 %v3718, %v3932
        %v3948 = vmul.f32 %v3719, %v3932
        %v3949 = vmul.f32 %v3720, %v3932
        %v3950 = vld [vmem:[%s4 + $0x80] sm:$0xff]
        %v3951 = vld [vmem:[%s4 + $0x88] sm:$0xff]
        %v3952 = vld [vmem:[%s4 + $0x90] sm:$0xff]
        %v3953 = vld [vmem:[%s4 + $0x98] sm:$0xff]
        %v3954 = vld [vmem:[%s4 + $0xa0] sm:$0xff]
        %v3955 = vld [vmem:[%s4 + $0xa8] sm:$0xff]
        %v3956 = vld [vmem:[%s4 + $0xb0] sm:$0xff]
        %v3957 = vld [vmem:[%s4 + $0xb8] sm:$0xff]
        %v3959 = vsel %vm505, %v3954, 0
        %v3962 = vsel %vm505, %v3955, 0
        %v3965 = vsel %vm505, %v3956, 0
        %v3968 = vsel %vm505, %v3957, 0
        %3970 = vmatprep.subr.mxu0 0.0
        %3971 = vmatpush1.msra.mxu0 0.0
        %3972 = vmatprep.subr.mxu0 0.0
        %3973 = vmatpush1.msra.mxu0 0.0
        %3974 = vmatprep.subr.mxu0 0.0
        %3975 = vmatpush1.msra.mxu0 0.0
        %3976 = vmatprep.subr.mxu0 0.0
        %3977 = vmatpush1.msra.mxu0 0.0
        %3978 = vmatprep.subr.mxu0 0.0
        %3979 = vmatpush1.msra.mxu0 0.0
        %3980 = vmatprep.subr.mxu0 0.0
        %3981 = vmatpush1.msra.mxu0 0.0
        %3982 = vmatprep.subr.mxu0 0.0
        %3983 = vmatpush1.msra.mxu0 0.0
        %3984 = vmatprep.subr.mxu0 0.0
        %3985 = vmatpush1.msra.mxu0 0.0
        %3986 = vmatprep.subr.mxu0 0.0
        %3987 = vmatpush1.msra.mxu0 0.0
        %3988 = vmatprep.subr.mxu0 0.0
        %3989 = vmatpush1.msra.mxu0 0.0
        %3990 = vmatprep.subr.mxu0 0.0
        %3991 = vmatpush1.msra.mxu0 0.0
        %3992 = vmatprep.subr.mxu0 0.0
        %3993 = vmatpush1.msra.mxu0 0.0
        %3994 = vmatprep.subr.mxu0 0.0
        %3995 = vmatpush1.msra.mxu0 0.0
        %3996 = vmatprep.subr.mxu0 0.0
        %3997 = vmatpush1.msra.mxu0 0.0
        %3998 = vmatprep.subr.mxu0 %v3498
        %3999 = vmatpush1.msra.mxu0 %v3496
        %4000 = vmatprep.subr.mxu0 %v3494
        %4001 = vmatpush1.msra.mxu0 %v3492
        %4002 = vmatprep.subr.mxu0 0.0
        %4003 = vmatpush2.msra.mxu0 0.0
        %4004 = vmatprep.subr.mxu0 0.0
        %4005 = vmatpush2.msra.mxu0 0.0
        %4006 = vmatprep.subr.mxu0 0.0
        %4007 = vmatpush2.msra.mxu0 0.0
        %4008 = vmatprep.subr.mxu0 0.0
        %4009 = vmatpush2.msra.mxu0 0.0
        %4010 = vmatprep.subr.mxu0 0.0
        %4011 = vmatpush2.msra.mxu0 0.0
        %4012 = vmatprep.subr.mxu0 0.0
        %4013 = vmatpush2.msra.mxu0 0.0
        %4014 = vmatprep.subr.mxu0 0.0
        %4015 = vmatpush2.msra.mxu0 0.0
        %4016 = vmatprep.subr.mxu0 0.0
        %4017 = vmatpush2.msra.mxu0 0.0
        %4018 = vmatprep.subr.mxu0 0.0
        %4019 = vmatpush2.msra.mxu0 0.0
        %4020 = vmatprep.subr.mxu0 0.0
        %4021 = vmatpush2.msra.mxu0 0.0
        %4022 = vmatprep.subr.mxu0 0.0
        %4023 = vmatpush2.msra.mxu0 0.0
        %4024 = vmatprep.subr.mxu0 0.0
        %4025 = vmatpush2.msra.mxu0 0.0
        %4026 = vmatprep.subr.mxu0 0.0
        %4027 = vmatpush2.msra.mxu0 0.0
        %4028 = vmatprep.subr.mxu0 0.0
        %4029 = vmatpush2.msra.mxu0 0.0
        %4030 = vmatprep.subr.mxu0 0.0
        %4031 = vmatpush2.msra.mxu0 0.0
        %4032 = vmatprep.subr.mxu0 0.0
        %4033 = vmatpush2.msra.mxu0 0.0
        %4034 = vmatprep.mubr.f32.mxu0 0.0
        %4035 = vmatmul.mubr.f32.gmra.mxu0 %v3959
        %v4036 = vpop.f32.mrf.mxu0
        %v4037 = vadd.f32 0.0, %v4036
        %v4038 = vpop.f32.mrf.mxu0
        %v4039 = vadd.f32 0.0, %v4038
        %4040 = vmatprep.mubr.f32.mxu0 0.0
        %4041 = vmatmul.mubr.f32.gmra.mxu0 %v3962
        %v4042 = vpop.f32.mrf.mxu0
        %v4043 = vadd.f32 0.0, %v4042
        %v4044 = vpop.f32.mrf.mxu0
        %v4045 = vadd.f32 0.0, %v4044
        %4046 = vmatprep.mubr.f32.mxu0 0.0
        %4047 = vmatmul.mubr.f32.gmra.mxu0 %v3965
        %v4048 = vpop.f32.mrf.mxu0
        %v4049 = vadd.f32 0.0, %v4048
        %v4050 = vpop.f32.mrf.mxu0
        %v4051 = vadd.f32 0.0, %v4050
        %4052 = vmatprep.mubr.f32.mxu0 0.0
        %4053 = vmatmul.mubr.f32.gmra.mxu0 %v3968
        %v4054 = vpop.f32.mrf.mxu0
        %v4055 = vadd.f32 0.0, %v4054
        %v4056 = vpop.f32.mrf.mxu0
        %v4057 = vadd.f32 0.0, %v4056
        %4058 = vdwg.mxu0
        %4059 = vmatprep.subr.mxu0 0.0
        %4060 = vmatpush1.msra.mxu0 0.0
        %4061 = vmatprep.subr.mxu0 0.0
        %4062 = vmatpush1.msra.mxu0 0.0
        %4063 = vmatprep.subr.mxu0 0.0
        %4064 = vmatpush1.msra.mxu0 0.0
        %4065 = vmatprep.subr.mxu0 0.0
        %4066 = vmatpush1.msra.mxu0 0.0
        %4067 = vmatprep.subr.mxu0 0.0
        %4068 = vmatpush1.msra.mxu0 0.0
        %4069 = vmatprep.subr.mxu0 0.0
        %4070 = vmatpush1.msra.mxu0 0.0
        %4071 = vmatprep.subr.mxu0 0.0
        %4072 = vmatpush1.msra.mxu0 0.0
        %4073 = vmatprep.subr.mxu0 0.0
        %4074 = vmatpush1.msra.mxu0 0.0
        %4075 = vmatprep.subr.mxu0 0.0
        %4076 = vmatpush1.msra.mxu0 0.0
        %4077 = vmatprep.subr.mxu0 0.0
        %4078 = vmatpush1.msra.mxu0 0.0
        %4079 = vmatprep.subr.mxu0 0.0
        %4080 = vmatpush1.msra.mxu0 0.0
        %4081 = vmatprep.subr.mxu0 0.0
        %4082 = vmatpush1.msra.mxu0 0.0
        %4083 = vmatprep.subr.mxu0 0.0
        %4084 = vmatpush1.msra.mxu0 0.0
        %4085 = vmatprep.subr.mxu0 0.0
        %4086 = vmatpush1.msra.mxu0 0.0
        %4087 = vmatprep.subr.mxu0 %v3561
        %4088 = vmatpush1.msra.mxu0 %v3559
        %4089 = vmatprep.subr.mxu0 %v3557
        %4090 = vmatpush1.msra.mxu0 %v3555
        %4091 = vmatprep.subr.mxu0 0.0
        %4092 = vmatpush2.msra.mxu0 0.0
        %4093 = vmatprep.subr.mxu0 0.0
        %4094 = vmatpush2.msra.mxu0 0.0
        %4095 = vmatprep.subr.mxu0 0.0
        %4096 = vmatpush2.msra.mxu0 0.0
        %4097 = vmatprep.subr.mxu0 0.0
        %4098 = vmatpush2.msra.mxu0 0.0
        %4099 = vmatprep.subr.mxu0 0.0
        %4100 = vmatpush2.msra.mxu0 0.0
        %4101 = vmatprep.subr.mxu0 0.0
        %4102 = vmatpush2.msra.mxu0 0.0
        %4103 = vmatprep.subr.mxu0 0.0
        %4104 = vmatpush2.msra.mxu0 0.0
        %4105 = vmatprep.subr.mxu0 0.0
        %4106 = vmatpush2.msra.mxu0 0.0
        %4107 = vmatprep.subr.mxu0 0.0
        %4108 = vmatpush2.msra.mxu0 0.0
        %4109 = vmatprep.subr.mxu0 0.0
        %4110 = vmatpush2.msra.mxu0 0.0
        %4111 = vmatprep.subr.mxu0 0.0
        %4112 = vmatpush2.msra.mxu0 0.0
        %4113 = vmatprep.subr.mxu0 0.0
        %4114 = vmatpush2.msra.mxu0 0.0
        %4115 = vmatprep.subr.mxu0 0.0
        %4116 = vmatpush2.msra.mxu0 0.0
        %4117 = vmatprep.subr.mxu0 0.0
        %4118 = vmatpush2.msra.mxu0 0.0
        %4119 = vmatprep.subr.mxu0 0.0
        %4120 = vmatpush2.msra.mxu0 0.0
        %4121 = vmatprep.subr.mxu0 0.0
        %4122 = vmatpush2.msra.mxu0 0.0
        %4123 = vmatprep.mubr.f32.mxu0 0.0
        %4124 = vmatmul.mubr.f32.gmra.mxu0 %v3959
        %v4125 = vpop.f32.mrf.mxu0
        %v4126 = vadd.f32 0.0, %v4125
        %v4127 = vpop.f32.mrf.mxu0
        %v4128 = vadd.f32 0.0, %v4127
        %4129 = vmatprep.mubr.f32.mxu0 0.0
        %4130 = vmatmul.mubr.f32.gmra.mxu0 %v3962
        %v4131 = vpop.f32.mrf.mxu0
        %v4132 = vadd.f32 0.0, %v4131
        %v4133 = vpop.f32.mrf.mxu0
        %v4134 = vadd.f32 0.0, %v4133
        %4135 = vmatprep.mubr.f32.mxu0 0.0
        %4136 = vmatmul.mubr.f32.gmra.mxu0 %v3965
        %v4137 = vpop.f32.mrf.mxu0
        %v4138 = vadd.f32 0.0, %v4137
        %v4139 = vpop.f32.mrf.mxu0
        %v4140 = vadd.f32 0.0, %v4139
        %4141 = vmatprep.mubr.f32.mxu0 0.0
        %4142 = vmatmul.mubr.f32.gmra.mxu0 %v3968
        %v4143 = vpop.f32.mrf.mxu0
        %v4144 = vadd.f32 0.0, %v4143
        %v4145 = vpop.f32.mrf.mxu0
        %v4146 = vadd.f32 0.0, %v4145
        %4147 = vdwg.mxu0
        %4148 = vmatprep.subr.mxu0 0.0
        %4149 = vmatpush1.msra.mxu0 0.0
        %4150 = vmatprep.subr.mxu0 0.0
        %4151 = vmatpush1.msra.mxu0 0.0
        %4152 = vmatprep.subr.mxu0 0.0
        %4153 = vmatpush1.msra.mxu0 0.0
        %4154 = vmatprep.subr.mxu0 0.0
        %4155 = vmatpush1.msra.mxu0 0.0
        %4156 = vmatprep.subr.mxu0 0.0
        %4157 = vmatpush1.msra.mxu0 0.0
        %4158 = vmatprep.subr.mxu0 0.0
        %4159 = vmatpush1.msra.mxu0 0.0
        %4160 = vmatprep.subr.mxu0 0.0
        %4161 = vmatpush1.msra.mxu0 0.0
        %4162 = vmatprep.subr.mxu0 0.0
        %4163 = vmatpush1.msra.mxu0 0.0
        %4164 = vmatprep.subr.mxu0 0.0
        %4165 = vmatpush1.msra.mxu0 0.0
        %4166 = vmatprep.subr.mxu0 0.0
        %4167 = vmatpush1.msra.mxu0 0.0
        %4168 = vmatprep.subr.mxu0 0.0
        %4169 = vmatpush1.msra.mxu0 0.0
        %4170 = vmatprep.subr.mxu0 0.0
        %4171 = vmatpush1.msra.mxu0 0.0
        %4172 = vmatprep.subr.mxu0 0.0
        %4173 = vmatpush1.msra.mxu0 0.0
        %4174 = vmatprep.subr.mxu0 0.0
        %4175 = vmatpush1.msra.mxu0 0.0
        %4176 = vmatprep.subr.mxu0 %v3624
        %4177 = vmatpush1.msra.mxu0 %v3622
        %4178 = vmatprep.subr.mxu0 %v3620
        %4179 = vmatpush1.msra.mxu0 %v3618
        %4180 = vmatprep.subr.mxu0 0.0
        %4181 = vmatpush2.msra.mxu0 0.0
        %4182 = vmatprep.subr.mxu0 0.0
        %4183 = vmatpush2.msra.mxu0 0.0
        %4184 = vmatprep.subr.mxu0 0.0
        %4185 = vmatpush2.msra.mxu0 0.0
        %4186 = vmatprep.subr.mxu0 0.0
        %4187 = vmatpush2.msra.mxu0 0.0
        %4188 = vmatprep.subr.mxu0 0.0
        %4189 = vmatpush2.msra.mxu0 0.0
        %4190 = vmatprep.subr.mxu0 0.0
        %4191 = vmatpush2.msra.mxu0 0.0
        %4192 = vmatprep.subr.mxu0 0.0
        %4193 = vmatpush2.msra.mxu0 0.0
        %4194 = vmatprep.subr.mxu0 0.0
        %4195 = vmatpush2.msra.mxu0 0.0
        %4196 = vmatprep.subr.mxu0 0.0
        %4197 = vmatpush2.msra.mxu0 0.0
        %4198 = vmatprep.subr.mxu0 0.0
        %4199 = vmatpush2.msra.mxu0 0.0
        %4200 = vmatprep.subr.mxu0 0.0
        %4201 = vmatpush2.msra.mxu0 0.0
        %4202 = vmatprep.subr.mxu0 0.0
        %4203 = vmatpush2.msra.mxu0 0.0
        %4204 = vmatprep.subr.mxu0 0.0
        %4205 = vmatpush2.msra.mxu0 0.0
        %4206 = vmatprep.subr.mxu0 0.0
        %4207 = vmatpush2.msra.mxu0 0.0
        %4208 = vmatprep.subr.mxu0 0.0
        %4209 = vmatpush2.msra.mxu0 0.0
        %4210 = vmatprep.subr.mxu0 0.0
        %4211 = vmatpush2.msra.mxu0 0.0
        %4212 = vmatprep.mubr.f32.mxu0 0.0
        %4213 = vmatmul.mubr.f32.gmra.mxu0 %v3959
        %v4214 = vpop.f32.mrf.mxu0
        %v4215 = vadd.f32 0.0, %v4214
        %v4216 = vpop.f32.mrf.mxu0
        %v4217 = vadd.f32 0.0, %v4216
        %4218 = vmatprep.mubr.f32.mxu0 0.0
        %4219 = vmatmul.mubr.f32.gmra.mxu0 %v3962
        %v4220 = vpop.f32.mrf.mxu0
        %v4221 = vadd.f32 0.0, %v4220
        %v4222 = vpop.f32.mrf.mxu0
        %v4223 = vadd.f32 0.0, %v4222
        %4224 = vmatprep.mubr.f32.mxu0 0.0
        %4225 = vmatmul.mubr.f32.gmra.mxu0 %v3965
        %v4226 = vpop.f32.mrf.mxu0
        %v4227 = vadd.f32 0.0, %v4226
        %v4228 = vpop.f32.mrf.mxu0
        %v4229 = vadd.f32 0.0, %v4228
        %4230 = vmatprep.mubr.f32.mxu0 0.0
        %4231 = vmatmul.mubr.f32.gmra.mxu0 %v3968
        %v4232 = vpop.f32.mrf.mxu0
        %v4233 = vadd.f32 0.0, %v4232
        %v4234 = vpop.f32.mrf.mxu0
        %v4235 = vadd.f32 0.0, %v4234
        %4236 = vdwg.mxu0
        %4237 = vmatprep.subr.mxu0 0.0
        %4238 = vmatpush1.msra.mxu0 0.0
        %4239 = vmatprep.subr.mxu0 0.0
        %4240 = vmatpush1.msra.mxu0 0.0
        %4241 = vmatprep.subr.mxu0 0.0
        %4242 = vmatpush1.msra.mxu0 0.0
        %4243 = vmatprep.subr.mxu0 0.0
        %4244 = vmatpush1.msra.mxu0 0.0
        %4245 = vmatprep.subr.mxu0 0.0
        %4246 = vmatpush1.msra.mxu0 0.0
        %4247 = vmatprep.subr.mxu0 0.0
        %4248 = vmatpush1.msra.mxu0 0.0
        %4249 = vmatprep.subr.mxu0 0.0
        %4250 = vmatpush1.msra.mxu0 0.0
        %4251 = vmatprep.subr.mxu0 0.0
        %4252 = vmatpush1.msra.mxu0 0.0
        %4253 = vmatprep.subr.mxu0 0.0
        %4254 = vmatpush1.msra.mxu0 0.0
        %4255 = vmatprep.subr.mxu0 0.0
        %4256 = vmatpush1.msra.mxu0 0.0
        %4257 = vmatprep.subr.mxu0 0.0
        %4258 = vmatpush1.msra.mxu0 0.0
        %4259 = vmatprep.subr.mxu0 0.0
        %4260 = vmatpush1.msra.mxu0 0.0
        %4261 = vmatprep.subr.mxu0 0.0
        %4262 = vmatpush1.msra.mxu0 0.0
        %4263 = vmatprep.subr.mxu0 0.0
        %4264 = vmatpush1.msra.mxu0 0.0
        %4265 = vmatprep.subr.mxu0 %v3687
        %4266 = vmatpush1.msra.mxu0 %v3685
        %4267 = vmatprep.subr.mxu0 %v3683
        %4268 = vmatpush1.msra.mxu0 %v3681
        %4269 = vmatprep.subr.mxu0 0.0
        %4270 = vmatpush2.msra.mxu0 0.0
        %4271 = vmatprep.subr.mxu0 0.0
        %4272 = vmatpush2.msra.mxu0 0.0
        %4273 = vmatprep.subr.mxu0 0.0
        %4274 = vmatpush2.msra.mxu0 0.0
        %4275 = vmatprep.subr.mxu0 0.0
        %4276 = vmatpush2.msra.mxu0 0.0
        %4277 = vmatprep.subr.mxu0 0.0
        %4278 = vmatpush2.msra.mxu0 0.0
        %4279 = vmatprep.subr.mxu0 0.0
        %4280 = vmatpush2.msra.mxu0 0.0
        %4281 = vmatprep.subr.mxu0 0.0
        %4282 = vmatpush2.msra.mxu0 0.0
        %4283 = vmatprep.subr.mxu0 0.0
        %4284 = vmatpush2.msra.mxu0 0.0
        %4285 = vmatprep.subr.mxu0 0.0
        %4286 = vmatpush2.msra.mxu0 0.0
        %4287 = vmatprep.subr.mxu0 0.0
        %4288 = vmatpush2.msra.mxu0 0.0
        %4289 = vmatprep.subr.mxu0 0.0
        %4290 = vmatpush2.msra.mxu0 0.0
        %4291 = vmatprep.subr.mxu0 0.0
        %4292 = vmatpush2.msra.mxu0 0.0
        %4293 = vmatprep.subr.mxu0 0.0
        %4294 = vmatpush2.msra.mxu0 0.0
        %4295 = vmatprep.subr.mxu0 0.0
        %4296 = vmatpush2.msra.mxu0 0.0
        %4297 = vmatprep.subr.mxu0 0.0
        %4298 = vmatpush2.msra.mxu0 0.0
        %4299 = vmatprep.subr.mxu0 0.0
        %4300 = vmatpush2.msra.mxu0 0.0
        %4301 = vmatprep.mubr.f32.mxu0 0.0
        %4302 = vmatmul.mubr.f32.gmra.mxu0 %v3959
        %v4303 = vpop.f32.mrf.mxu0
        %v4304 = vadd.f32 0.0, %v4303
        %v4305 = vpop.f32.mrf.mxu0
        %v4306 = vadd.f32 0.0, %v4305
        %4307 = vmatprep.mubr.f32.mxu0 0.0
        %4308 = vmatmul.mubr.f32.gmra.mxu0 %v3962
        %v4309 = vpop.f32.mrf.mxu0
        %v4310 = vadd.f32 0.0, %v4309
        %v4311 = vpop.f32.mrf.mxu0
        %v4312 = vadd.f32 0.0, %v4311
        %4313 = vmatprep.mubr.f32.mxu0 0.0
        %4314 = vmatmul.mubr.f32.gmra.mxu0 %v3965
        %v4315 = vpop.f32.mrf.mxu0
        %v4316 = vadd.f32 0.0, %v4315
        %v4317 = vpop.f32.mrf.mxu0
        %v4318 = vadd.f32 0.0, %v4317
        %4319 = vmatprep.mubr.f32.mxu0 0.0
        %4320 = vmatmul.mubr.f32.gmra.mxu0 %v3968
        %v4321 = vpop.f32.mrf.mxu0
        %v4322 = vadd.f32 0.0, %v4321
        %v4323 = vpop.f32.mrf.mxu0
        %v4324 = vadd.f32 0.0, %v4323
        %4325 = vdwg.mxu0
        %v4327 = vsel %vm505, %v3950, 0
        %v4330 = vsel %vm505, %v3951, 0
        %v4333 = vsel %vm505, %v3952, 0
        %v4336 = vsel %vm505, %v3953, 0
        %4338 = vmatprep.subr.mxu0 0.0
        %4339 = vmatpush1.msra.mxu0 0.0
        %4340 = vmatprep.subr.mxu0 0.0
        %4341 = vmatpush1.msra.mxu0 0.0
        %4342 = vmatprep.subr.mxu0 0.0
        %4343 = vmatpush1.msra.mxu0 0.0
        %4344 = vmatprep.subr.mxu0 0.0
        %4345 = vmatpush1.msra.mxu0 0.0
        %4346 = vmatprep.subr.mxu0 0.0
        %4347 = vmatpush1.msra.mxu0 0.0
        %4348 = vmatprep.subr.mxu0 0.0
        %4349 = vmatpush1.msra.mxu0 0.0
        %4350 = vmatprep.subr.mxu0 0.0
        %4351 = vmatpush1.msra.mxu0 0.0
        %4352 = vmatprep.subr.mxu0 0.0
        %4353 = vmatpush1.msra.mxu0 0.0
        %4354 = vmatprep.subr.mxu0 0.0
        %4355 = vmatpush1.msra.mxu0 0.0
        %4356 = vmatprep.subr.mxu0 0.0
        %4357 = vmatpush1.msra.mxu0 0.0
        %4358 = vmatprep.subr.mxu0 0.0
        %4359 = vmatpush1.msra.mxu0 0.0
        %4360 = vmatprep.subr.mxu0 0.0
        %4361 = vmatpush1.msra.mxu0 0.0
        %4362 = vmatprep.subr.mxu0 0.0
        %4363 = vmatpush1.msra.mxu0 0.0
        %4364 = vmatprep.subr.mxu0 0.0
        %4365 = vmatpush1.msra.mxu0 0.0
        %4366 = vmatprep.subr.mxu0 %v3943
        %4367 = vmatpush1.msra.mxu0 %v3942
        %4368 = vmatprep.subr.mxu0 %v3935
        %4369 = vmatpush1.msra.mxu0 %v3934
        %4370 = vmatprep.subr.mxu0 0.0
        %4371 = vmatpush2.msra.mxu0 0.0
        %4372 = vmatprep.subr.mxu0 0.0
        %4373 = vmatpush2.msra.mxu0 0.0
        %4374 = vmatprep.subr.mxu0 0.0
        %4375 = vmatpush2.msra.mxu0 0.0
        %4376 = vmatprep.subr.mxu0 0.0
        %4377 = vmatpush2.msra.mxu0 0.0
        %4378 = vmatprep.subr.mxu0 0.0
        %4379 = vmatpush2.msra.mxu0 0.0
        %4380 = vmatprep.subr.mxu0 0.0
        %4381 = vmatpush2.msra.mxu0 0.0
        %4382 = vmatprep.subr.mxu0 0.0
        %4383 = vmatpush2.msra.mxu0 0.0
        %4384 = vmatprep.subr.mxu0 0.0
        %4385 = vmatpush2.msra.mxu0 0.0
        %4386 = vmatprep.subr.mxu0 0.0
        %4387 = vmatpush2.msra.mxu0 0.0
        %4388 = vmatprep.subr.mxu0 0.0
        %4389 = vmatpush2.msra.mxu0 0.0
        %4390 = vmatprep.subr.mxu0 0.0
        %4391 = vmatpush2.msra.mxu0 0.0
        %4392 = vmatprep.subr.mxu0 0.0
        %4393 = vmatpush2.msra.mxu0 0.0
        %4394 = vmatprep.subr.mxu0 0.0
        %4395 = vmatpush2.msra.mxu0 0.0
        %4396 = vmatprep.subr.mxu0 0.0
        %4397 = vmatpush2.msra.mxu0 0.0
        %4398 = vmatprep.subr.mxu0 0.0
        %4399 = vmatpush2.msra.mxu0 0.0
        %4400 = vmatprep.subr.mxu0 0.0
        %4401 = vmatpush2.msra.mxu0 0.0
        %4402 = vmatprep.mubr.f32.mxu0 0.0
        %4403 = vmatmul.mubr.f32.gmra.mxu0 %v4327
        %v4404 = vpop.f32.mrf.mxu0
        %v4405 = vadd.f32 %v4037, %v4404
        %v4406 = vpop.f32.mrf.mxu0
        %v4407 = vadd.f32 %v4039, %v4406
        %4408 = vmatprep.mubr.f32.mxu0 0.0
        %4409 = vmatmul.mubr.f32.gmra.mxu0 %v4330
        %v4410 = vpop.f32.mrf.mxu0
        %v4411 = vadd.f32 %v4043, %v4410
        %v4412 = vpop.f32.mrf.mxu0
        %v4413 = vadd.f32 %v4045, %v4412
        %4414 = vmatprep.mubr.f32.mxu0 0.0
        %4415 = vmatmul.mubr.f32.gmra.mxu0 %v4333
        %v4416 = vpop.f32.mrf.mxu0
        %v4417 = vadd.f32 %v4049, %v4416
        %v4418 = vpop.f32.mrf.mxu0
        %v4419 = vadd.f32 %v4051, %v4418
        %4420 = vmatprep.mubr.f32.mxu0 0.0
        %4421 = vmatmul.mubr.f32.gmra.mxu0 %v4336
        %v4422 = vpop.f32.mrf.mxu0
        %v4423 = vadd.f32 %v4055, %v4422
        %v4424 = vpop.f32.mrf.mxu0
        %v4425 = vadd.f32 %v4057, %v4424
        %4426 = vdwg.mxu0
        %4427 = vmatprep.subr.mxu0 0.0
        %4428 = vmatpush1.msra.mxu0 0.0
        %4429 = vmatprep.subr.mxu0 0.0
        %4430 = vmatpush1.msra.mxu0 0.0
        %4431 = vmatprep.subr.mxu0 0.0
        %4432 = vmatpush1.msra.mxu0 0.0
        %4433 = vmatprep.subr.mxu0 0.0
        %4434 = vmatpush1.msra.mxu0 0.0
        %4435 = vmatprep.subr.mxu0 0.0
        %4436 = vmatpush1.msra.mxu0 0.0
        %4437 = vmatprep.subr.mxu0 0.0
        %4438 = vmatpush1.msra.mxu0 0.0
        %4439 = vmatprep.subr.mxu0 0.0
        %4440 = vmatpush1.msra.mxu0 0.0
        %4441 = vmatprep.subr.mxu0 0.0
        %4442 = vmatpush1.msra.mxu0 0.0
        %4443 = vmatprep.subr.mxu0 0.0
        %4444 = vmatpush1.msra.mxu0 0.0
        %4445 = vmatprep.subr.mxu0 0.0
        %4446 = vmatpush1.msra.mxu0 0.0
        %4447 = vmatprep.subr.mxu0 0.0
        %4448 = vmatpush1.msra.mxu0 0.0
        %4449 = vmatprep.subr.mxu0 0.0
        %4450 = vmatpush1.msra.mxu0 0.0
        %4451 = vmatprep.subr.mxu0 0.0
        %4452 = vmatpush1.msra.mxu0 0.0
        %4453 = vmatprep.subr.mxu0 0.0
        %4454 = vmatpush1.msra.mxu0 0.0
        %4455 = vmatprep.subr.mxu0 %v3945
        %4456 = vmatpush1.msra.mxu0 %v3944
        %4457 = vmatprep.subr.mxu0 %v3937
        %4458 = vmatpush1.msra.mxu0 %v3936
        %4459 = vmatprep.subr.mxu0 0.0
        %4460 = vmatpush2.msra.mxu0 0.0
        %4461 = vmatprep.subr.mxu0 0.0
        %4462 = vmatpush2.msra.mxu0 0.0
        %4463 = vmatprep.subr.mxu0 0.0
        %4464 = vmatpush2.msra.mxu0 0.0
        %4465 = vmatprep.subr.mxu0 0.0
        %4466 = vmatpush2.msra.mxu0 0.0
        %4467 = vmatprep.subr.mxu0 0.0
        %4468 = vmatpush2.msra.mxu0 0.0
        %4469 = vmatprep.subr.mxu0 0.0
        %4470 = vmatpush2.msra.mxu0 0.0
        %4471 = vmatprep.subr.mxu0 0.0
        %4472 = vmatpush2.msra.mxu0 0.0
        %4473 = vmatprep.subr.mxu0 0.0
        %4474 = vmatpush2.msra.mxu0 0.0
        %4475 = vmatprep.subr.mxu0 0.0
        %4476 = vmatpush2.msra.mxu0 0.0
        %4477 = vmatprep.subr.mxu0 0.0
        %4478 = vmatpush2.msra.mxu0 0.0
        %4479 = vmatprep.subr.mxu0 0.0
        %4480 = vmatpush2.msra.mxu0 0.0
        %4481 = vmatprep.subr.mxu0 0.0
        %4482 = vmatpush2.msra.mxu0 0.0
        %4483 = vmatprep.subr.mxu0 0.0
        %4484 = vmatpush2.msra.mxu0 0.0
        %4485 = vmatprep.subr.mxu0 0.0
        %4486 = vmatpush2.msra.mxu0 0.0
        %4487 = vmatprep.subr.mxu0 0.0
        %4488 = vmatpush2.msra.mxu0 0.0
        %4489 = vmatprep.subr.mxu0 0.0
        %4490 = vmatpush2.msra.mxu0 0.0
        %4491 = vmatprep.mubr.f32.mxu0 0.0
        %4492 = vmatmul.mubr.f32.gmra.mxu0 %v4327
        %v4493 = vpop.f32.mrf.mxu0
        %v4494 = vadd.f32 %v4126, %v4493
        %v4495 = vpop.f32.mrf.mxu0
        %v4496 = vadd.f32 %v4128, %v4495
        %4497 = vmatprep.mubr.f32.mxu0 0.0
        %4498 = vmatmul.mubr.f32.gmra.mxu0 %v4330
        %v4499 = vpop.f32.mrf.mxu0
        %v4500 = vadd.f32 %v4132, %v4499
        %v4501 = vpop.f32.mrf.mxu0
        %v4502 = vadd.f32 %v4134, %v4501
        %4503 = vmatprep.mubr.f32.mxu0 0.0
        %4504 = vmatmul.mubr.f32.gmra.mxu0 %v4333
        %v4505 = vpop.f32.mrf.mxu0
        %v4506 = vadd.f32 %v4138, %v4505
        %v4507 = vpop.f32.mrf.mxu0
        %v4508 = vadd.f32 %v4140, %v4507
        %4509 = vmatprep.mubr.f32.mxu0 0.0
        %4510 = vmatmul.mubr.f32.gmra.mxu0 %v4336
        %v4511 = vpop.f32.mrf.mxu0
        %v4512 = vadd.f32 %v4144, %v4511
        %v4513 = vpop.f32.mrf.mxu0
        %v4514 = vadd.f32 %v4146, %v4513
        %4515 = vdwg.mxu0
        %4516 = vmatprep.subr.mxu0 0.0
        %4517 = vmatpush1.msra.mxu0 0.0
        %4518 = vmatprep.subr.mxu0 0.0
        %4519 = vmatpush1.msra.mxu0 0.0
        %4520 = vmatprep.subr.mxu0 0.0
        %4521 = vmatpush1.msra.mxu0 0.0
        %4522 = vmatprep.subr.mxu0 0.0
        %4523 = vmatpush1.msra.mxu0 0.0
        %4524 = vmatprep.subr.mxu0 0.0
        %4525 = vmatpush1.msra.mxu0 0.0
        %4526 = vmatprep.subr.mxu0 0.0
        %4527 = vmatpush1.msra.mxu0 0.0
        %4528 = vmatprep.subr.mxu0 0.0
        %4529 = vmatpush1.msra.mxu0 0.0
        %4530 = vmatprep.subr.mxu0 0.0
        %4531 = vmatpush1.msra.mxu0 0.0
        %4532 = vmatprep.subr.mxu0 0.0
        %4533 = vmatpush1.msra.mxu0 0.0
        %4534 = vmatprep.subr.mxu0 0.0
        %4535 = vmatpush1.msra.mxu0 0.0
        %4536 = vmatprep.subr.mxu0 0.0
        %4537 = vmatpush1.msra.mxu0 0.0
        %4538 = vmatprep.subr.mxu0 0.0
        %4539 = vmatpush1.msra.mxu0 0.0
        %4540 = vmatprep.subr.mxu0 0.0
        %4541 = vmatpush1.msra.mxu0 0.0
        %4542 = vmatprep.subr.mxu0 0.0
        %4543 = vmatpush1.msra.mxu0 0.0
        %4544 = vmatprep.subr.mxu0 %v3947
        %4545 = vmatpush1.msra.mxu0 %v3946
        %4546 = vmatprep.subr.mxu0 %v3939
        %4547 = vmatpush1.msra.mxu0 %v3938
        %4548 = vmatprep.subr.mxu0 0.0
        %4549 = vmatpush2.msra.mxu0 0.0
        %4550 = vmatprep.subr.mxu0 0.0
        %4551 = vmatpush2.msra.mxu0 0.0
        %4552 = vmatprep.subr.mxu0 0.0
        %4553 = vmatpush2.msra.mxu0 0.0
        %4554 = vmatprep.subr.mxu0 0.0
        %4555 = vmatpush2.msra.mxu0 0.0
        %4556 = vmatprep.subr.mxu0 0.0
        %4557 = vmatpush2.msra.mxu0 0.0
        %4558 = vmatprep.subr.mxu0 0.0
        %4559 = vmatpush2.msra.mxu0 0.0
        %4560 = vmatprep.subr.mxu0 0.0
        %4561 = vmatpush2.msra.mxu0 0.0
        %4562 = vmatprep.subr.mxu0 0.0
        %4563 = vmatpush2.msra.mxu0 0.0
        %4564 = vmatprep.subr.mxu0 0.0
        %4565 = vmatpush2.msra.mxu0 0.0
        %4566 = vmatprep.subr.mxu0 0.0
        %4567 = vmatpush2.msra.mxu0 0.0
        %4568 = vmatprep.subr.mxu0 0.0
        %4569 = vmatpush2.msra.mxu0 0.0
        %4570 = vmatprep.subr.mxu0 0.0
        %4571 = vmatpush2.msra.mxu0 0.0
        %4572 = vmatprep.subr.mxu0 0.0
        %4573 = vmatpush2.msra.mxu0 0.0
        %4574 = vmatprep.subr.mxu0 0.0
        %4575 = vmatpush2.msra.mxu0 0.0
        %4576 = vmatprep.subr.mxu0 0.0
        %4577 = vmatpush2.msra.mxu0 0.0
        %4578 = vmatprep.subr.mxu0 0.0
        %4579 = vmatpush2.msra.mxu0 0.0
        %4580 = vmatprep.mubr.f32.mxu0 0.0
        %4581 = vmatmul.mubr.f32.gmra.mxu0 %v4327
        %v4582 = vpop.f32.mrf.mxu0
        %v4583 = vadd.f32 %v4215, %v4582
        %v4584 = vpop.f32.mrf.mxu0
        %v4585 = vadd.f32 %v4217, %v4584
        %4586 = vmatprep.mubr.f32.mxu0 0.0
        %4587 = vmatmul.mubr.f32.gmra.mxu0 %v4330
        %v4588 = vpop.f32.mrf.mxu0
        %v4589 = vadd.f32 %v4221, %v4588
        %v4590 = vpop.f32.mrf.mxu0
        %v4591 = vadd.f32 %v4223, %v4590
        %4592 = vmatprep.mubr.f32.mxu0 0.0
        %4593 = vmatmul.mubr.f32.gmra.mxu0 %v4333
        %v4594 = vpop.f32.mrf.mxu0
        %v4595 = vadd.f32 %v4227, %v4594
        %v4596 = vpop.f32.mrf.mxu0
        %v4597 = vadd.f32 %v4229, %v4596
        %4598 = vmatprep.mubr.f32.mxu0 0.0
        %4599 = vmatmul.mubr.f32.gmra.mxu0 %v4336
        %v4600 = vpop.f32.mrf.mxu0
        %v4601 = vadd.f32 %v4233, %v4600
        %v4602 = vpop.f32.mrf.mxu0
        %v4603 = vadd.f32 %v4235, %v4602
        %4604 = vdwg.mxu0
        %4605 = vmatprep.subr.mxu0 0.0
        %4606 = vmatpush1.msra.mxu0 0.0
        %4607 = vmatprep.subr.mxu0 0.0
        %4608 = vmatpush1.msra.mxu0 0.0
        %4609 = vmatprep.subr.mxu0 0.0
        %4610 = vmatpush1.msra.mxu0 0.0
        %4611 = vmatprep.subr.mxu0 0.0
        %4612 = vmatpush1.msra.mxu0 0.0
        %4613 = vmatprep.subr.mxu0 0.0
        %4614 = vmatpush1.msra.mxu0 0.0
        %4615 = vmatprep.subr.mxu0 0.0
        %4616 = vmatpush1.msra.mxu0 0.0
        %4617 = vmatprep.subr.mxu0 0.0
        %4618 = vmatpush1.msra.mxu0 0.0
        %4619 = vmatprep.subr.mxu0 0.0
        %4620 = vmatpush1.msra.mxu0 0.0
        %4621 = vmatprep.subr.mxu0 0.0
        %4622 = vmatpush1.msra.mxu0 0.0
        %4623 = vmatprep.subr.mxu0 0.0
        %4624 = vmatpush1.msra.mxu0 0.0
        %4625 = vmatprep.subr.mxu0 0.0
        %4626 = vmatpush1.msra.mxu0 0.0
        %4627 = vmatprep.subr.mxu0 0.0
        %4628 = vmatpush1.msra.mxu0 0.0
        %4629 = vmatprep.subr.mxu0 0.0
        %4630 = vmatpush1.msra.mxu0 0.0
        %4631 = vmatprep.subr.mxu0 0.0
        %4632 = vmatpush1.msra.mxu0 0.0
        %4633 = vmatprep.subr.mxu0 %v3949
        %4634 = vmatpush1.msra.mxu0 %v3948
        %4635 = vmatprep.subr.mxu0 %v3941
        %4636 = vmatpush1.msra.mxu0 %v3940
        %4637 = vmatprep.subr.mxu0 0.0
        %4638 = vmatpush2.msra.mxu0 0.0
        %4639 = vmatprep.subr.mxu0 0.0
        %4640 = vmatpush2.msra.mxu0 0.0
        %4641 = vmatprep.subr.mxu0 0.0
        %4642 = vmatpush2.msra.mxu0 0.0
        %4643 = vmatprep.subr.mxu0 0.0
        %4644 = vmatpush2.msra.mxu0 0.0
        %4645 = vmatprep.subr.mxu0 0.0
        %4646 = vmatpush2.msra.mxu0 0.0
        %4647 = vmatprep.subr.mxu0 0.0
        %4648 = vmatpush2.msra.mxu0 0.0
        %4649 = vmatprep.subr.mxu0 0.0
        %4650 = vmatpush2.msra.mxu0 0.0
        %4651 = vmatprep.subr.mxu0 0.0
        %4652 = vmatpush2.msra.mxu0 0.0
        %4653 = vmatprep.subr.mxu0 0.0
        %4654 = vmatpush2.msra.mxu0 0.0
        %4655 = vmatprep.subr.mxu0 0.0
        %4656 = vmatpush2.msra.mxu0 0.0
        %4657 = vmatprep.subr.mxu0 0.0
        %4658 = vmatpush2.msra.mxu0 0.0
        %4659 = vmatprep.subr.mxu0 0.0
        %4660 = vmatpush2.msra.mxu0 0.0
        %4661 = vmatprep.subr.mxu0 0.0
        %4662 = vmatpush2.msra.mxu0 0.0
        %4663 = vmatprep.subr.mxu0 0.0
        %4664 = vmatpush2.msra.mxu0 0.0
        %4665 = vmatprep.subr.mxu0 0.0
        %4666 = vmatpush2.msra.mxu0 0.0
        %4667 = vmatprep.subr.mxu0 0.0
        %4668 = vmatpush2.msra.mxu0 0.0
        %4669 = vmatprep.mubr.f32.mxu0 0.0
        %4670 = vmatmul.mubr.f32.gmra.mxu0 %v4327
        %v4671 = vpop.f32.mrf.mxu0
        %v4672 = vadd.f32 %v4304, %v4671
        %v4673 = vpop.f32.mrf.mxu0
        %v4674 = vadd.f32 %v4306, %v4673
        %4675 = vmatprep.mubr.f32.mxu0 0.0
        %4676 = vmatmul.mubr.f32.gmra.mxu0 %v4330
        %v4677 = vpop.f32.mrf.mxu0
        %v4678 = vadd.f32 %v4310, %v4677
        %v4679 = vpop.f32.mrf.mxu0
        %v4680 = vadd.f32 %v4312, %v4679
        %4681 = vmatprep.mubr.f32.mxu0 0.0
        %4682 = vmatmul.mubr.f32.gmra.mxu0 %v4333
        %v4683 = vpop.f32.mrf.mxu0
        %v4684 = vadd.f32 %v4316, %v4683
        %v4685 = vpop.f32.mrf.mxu0
        %v4686 = vadd.f32 %v4318, %v4685
        %4687 = vmatprep.mubr.f32.mxu0 0.0
        %4688 = vmatmul.mubr.f32.gmra.mxu0 %v4336
        %v4689 = vpop.f32.mrf.mxu0
        %v4690 = vadd.f32 %v4322, %v4689
        %v4691 = vpop.f32.mrf.mxu0
        %v4692 = vadd.f32 %v4324, %v4691
        %4693 = vdwg.mxu0
        %v4694 = vld [vmem:[%s7 + $0x60] sm:$0xff]
        %v4695 = vld [vmem:[%s7 + $0x68] sm:$0xff]
        %v4696 = vld [vmem:[%s7 + $0x70] sm:$0xff]
        %v4697 = vld [vmem:[%s7 + $0x78] sm:$0xff]
        %4699 = vset.pattern.permute.xlu0 0
        %4700 = vperm.xlu0 %4699, %v4694
        %v4701 = vpop.permute.xlu0 %4700
        %4704 = vset.pattern.permute.xlu0 0
        %4705 = vperm.xlu0 %4704, %v4695
        %v4706 = vpop.permute.xlu0 %4705
        %4709 = vset.pattern.permute.xlu0 0
        %4710 = vperm.xlu0 %4709, %v4696
        %v4711 = vpop.permute.xlu0 %4710
        %4714 = vset.pattern.permute.xlu0 0
        %4715 = vperm.xlu0 %4714, %v4697
        %v4716 = vpop.permute.xlu0 %4715
        %v4718 = vadd.f32 %v4405, %v4701
        %v4719 = vadd.f32 %v4407, %v4701
        %v4720 = vadd.f32 %v4494, %v4701
        %v4721 = vadd.f32 %v4496, %v4701
        %v4722 = vadd.f32 %v4583, %v4701
        %v4723 = vadd.f32 %v4585, %v4701
        %v4724 = vadd.f32 %v4672, %v4701
        %v4725 = vadd.f32 %v4674, %v4701
        %v4726 = vadd.f32 %v4411, %v4706
        %v4727 = vadd.f32 %v4413, %v4706
        %v4728 = vadd.f32 %v4500, %v4706
        %v4729 = vadd.f32 %v4502, %v4706
        %v4730 = vadd.f32 %v4589, %v4706
        %v4731 = vadd.f32 %v4591, %v4706
        %v4732 = vadd.f32 %v4678, %v4706
        %v4733 = vadd.f32 %v4680, %v4706
        %v4734 = vadd.f32 %v4417, %v4711
        %v4735 = vadd.f32 %v4419, %v4711
        %v4736 = vadd.f32 %v4506, %v4711
        %v4737 = vadd.f32 %v4508, %v4711
        %v4738 = vadd.f32 %v4595, %v4711
        %v4739 = vadd.f32 %v4597, %v4711
        %v4740 = vadd.f32 %v4684, %v4711
        %v4741 = vadd.f32 %v4686, %v4711
        %v4742 = vadd.f32 %v4423, %v4716
        %v4743 = vadd.f32 %v4425, %v4716
        %v4744 = vadd.f32 %v4512, %v4716
        %v4745 = vadd.f32 %v4514, %v4716
        %v4746 = vadd.f32 %v4601, %v4716
        %v4747 = vadd.f32 %v4603, %v4716
        %v4748 = vadd.f32 %v4690, %v4716
        %v4749 = vadd.f32 %v4692, %v4716
        %v4750 = vld [vmem:[%s6] sm:$0xff]
        %v4751 = vld [vmem:[%s6 + $0x8] sm:$0x1]
        %v4752 = vld [vmem:[%s7 + $0x120] sm:$0xff]
        %v4753 = vld [vmem:[%s7 + $0x128] sm:$0x1]
        %4755 = vset.pattern.permute.xlu0 0
        %4756 = vperm.xlu0 %4755, %v4752
        %v4757 = vpop.permute.xlu0 %4756
        %4760 = vset.pattern.permute.xlu0 0
        %4761 = vperm.xlu0 %4760, %v4753
        %v4762 = vpop.permute.xlu0 %4761
        %vm4764 = vcmask 261120
        %v4766 = vsel %vm4764, %v4750, 0
        %v4769 = vsel %vm4764, %v4751, 0
        %4771 = vmatprep.subr.mxu0 0.0
        %4772 = vmatpush1.msra.mxu0 0.0
        %4773 = vmatprep.subr.mxu0 0.0
        %4774 = vmatpush1.msra.mxu0 0.0
        %4775 = vmatprep.subr.mxu0 0.0
        %4776 = vmatpush1.msra.mxu0 0.0
        %4777 = vmatprep.subr.mxu0 0.0
        %4778 = vmatpush1.msra.mxu0 0.0
        %4779 = vmatprep.subr.mxu0 0.0
        %4780 = vmatpush1.msra.mxu0 0.0
        %4781 = vmatprep.subr.mxu0 0.0
        %4782 = vmatpush1.msra.mxu0 0.0
        %4783 = vmatprep.subr.mxu0 0.0
        %4784 = vmatpush1.msra.mxu0 0.0
        %4785 = vmatprep.subr.mxu0 0.0
        %4786 = vmatpush1.msra.mxu0 0.0
        %4787 = vmatprep.subr.mxu0 0.0
        %4788 = vmatpush1.msra.mxu0 0.0
        %4789 = vmatprep.subr.mxu0 0.0
        %4790 = vmatpush1.msra.mxu0 0.0
        %4791 = vmatprep.subr.mxu0 0.0
        %4792 = vmatpush1.msra.mxu0 0.0
        %4793 = vmatprep.subr.mxu0 0.0
        %4794 = vmatpush1.msra.mxu0 0.0
        %4795 = vmatprep.subr.mxu0 %v4743
        %4796 = vmatpush1.msra.mxu0 %v4742
        %4797 = vmatprep.subr.mxu0 %v4735
        %4798 = vmatpush1.msra.mxu0 %v4734
        %4799 = vmatprep.subr.mxu0 %v4727
        %4800 = vmatpush1.msra.mxu0 %v4726
        %4801 = vmatprep.subr.mxu0 %v4719
        %4802 = vmatpush1.msra.mxu0 %v4718
        %4803 = vmatprep.subr.mxu0 0.0
        %4804 = vmatpush2.msra.mxu0 0.0
        %4805 = vmatprep.subr.mxu0 0.0
        %4806 = vmatpush2.msra.mxu0 0.0
        %4807 = vmatprep.subr.mxu0 0.0
        %4808 = vmatpush2.msra.mxu0 0.0
        %4809 = vmatprep.subr.mxu0 0.0
        %4810 = vmatpush2.msra.mxu0 0.0
        %4811 = vmatprep.subr.mxu0 0.0
        %4812 = vmatpush2.msra.mxu0 0.0
        %4813 = vmatprep.subr.mxu0 0.0
        %4814 = vmatpush2.msra.mxu0 0.0
        %4815 = vmatprep.subr.mxu0 0.0
        %4816 = vmatpush2.msra.mxu0 0.0
        %4817 = vmatprep.subr.mxu0 0.0
        %4818 = vmatpush2.msra.mxu0 0.0
        %4819 = vmatprep.subr.mxu0 0.0
        %4820 = vmatpush2.msra.mxu0 0.0
        %4821 = vmatprep.subr.mxu0 0.0
        %4822 = vmatpush2.msra.mxu0 0.0
        %4823 = vmatprep.subr.mxu0 0.0
        %4824 = vmatpush2.msra.mxu0 0.0
        %4825 = vmatprep.subr.mxu0 0.0
        %4826 = vmatpush2.msra.mxu0 0.0
        %4827 = vmatprep.subr.mxu0 0.0
        %4828 = vmatpush2.msra.mxu0 0.0
        %4829 = vmatprep.subr.mxu0 0.0
        %4830 = vmatpush2.msra.mxu0 0.0
        %4831 = vmatprep.subr.mxu0 0.0
        %4832 = vmatpush2.msra.mxu0 0.0
        %4833 = vmatprep.subr.mxu0 0.0
        %4834 = vmatpush2.msra.mxu0 0.0
        %4835 = vmatprep.mubr.f32.mxu0 0.0
        %4836 = vmatmul.mubr.f32.gmra.mxu0 %v4766
        %v4837 = vpop.f32.mrf.mxu0
        %v4838 = vadd.f32 %v4757, %v4837
        %v4839 = vpop.f32.mrf.mxu0
        %v4840 = vadd.f32 %v4757, %v4839
        %4841 = vmatprep.mubr.f32.mxu0 0.0
        %4842 = vmatmul.mubr.f32.gmra.mxu0 %v4769
        %v4843 = vpop.f32.mrf.mxu0
        %v4844 = vadd.f32 %v4762, %v4843
        %v4845 = vpop.f32.mrf.mxu0
        %v4846 = vadd.f32 %v4762, %v4845
        %4847 = vdwg.mxu0
        %4848 = vmatprep.subr.mxu0 0.0
        %4849 = vmatpush1.msra.mxu0 0.0
        %4850 = vmatprep.subr.mxu0 0.0
        %4851 = vmatpush1.msra.mxu0 0.0
        %4852 = vmatprep.subr.mxu0 0.0
        %4853 = vmatpush1.msra.mxu0 0.0
        %4854 = vmatprep.subr.mxu0 0.0
        %4855 = vmatpush1.msra.mxu0 0.0
        %4856 = vmatprep.subr.mxu0 0.0
        %4857 = vmatpush1.msra.mxu0 0.0
        %4858 = vmatprep.subr.mxu0 0.0
        %4859 = vmatpush1.msra.mxu0 0.0
        %4860 = vmatprep.subr.mxu0 0.0
        %4861 = vmatpush1.msra.mxu0 0.0
        %4862 = vmatprep.subr.mxu0 0.0
        %4863 = vmatpush1.msra.mxu0 0.0
        %4864 = vmatprep.subr.mxu0 0.0
        %4865 = vmatpush1.msra.mxu0 0.0
        %4866 = vmatprep.subr.mxu0 0.0
        %4867 = vmatpush1.msra.mxu0 0.0
        %4868 = vmatprep.subr.mxu0 0.0
        %4869 = vmatpush1.msra.mxu0 0.0
        %4870 = vmatprep.subr.mxu0 0.0
        %4871 = vmatpush1.msra.mxu0 0.0
        %4872 = vmatprep.subr.mxu0 %v4745
        %4873 = vmatpush1.msra.mxu0 %v4744
        %4874 = vmatprep.subr.mxu0 %v4737
        %4875 = vmatpush1.msra.mxu0 %v4736
        %4876 = vmatprep.subr.mxu0 %v4729
        %4877 = vmatpush1.msra.mxu0 %v4728
        %4878 = vmatprep.subr.mxu0 %v4721
        %4879 = vmatpush1.msra.mxu0 %v4720
        %4880 = vmatprep.subr.mxu0 0.0
        %4881 = vmatpush2.msra.mxu0 0.0
        %4882 = vmatprep.subr.mxu0 0.0
        %4883 = vmatpush2.msra.mxu0 0.0
        %4884 = vmatprep.subr.mxu0 0.0
        %4885 = vmatpush2.msra.mxu0 0.0
        %4886 = vmatprep.subr.mxu0 0.0
        %4887 = vmatpush2.msra.mxu0 0.0
        %4888 = vmatprep.subr.mxu0 0.0
        %4889 = vmatpush2.msra.mxu0 0.0
        %4890 = vmatprep.subr.mxu0 0.0
        %4891 = vmatpush2.msra.mxu0 0.0
        %4892 = vmatprep.subr.mxu0 0.0
        %4893 = vmatpush2.msra.mxu0 0.0
        %4894 = vmatprep.subr.mxu0 0.0
        %4895 = vmatpush2.msra.mxu0 0.0
        %4896 = vmatprep.subr.mxu0 0.0
        %4897 = vmatpush2.msra.mxu0 0.0
        %4898 = vmatprep.subr.mxu0 0.0
        %4899 = vmatpush2.msra.mxu0 0.0
        %4900 = vmatprep.subr.mxu0 0.0
        %4901 = vmatpush2.msra.mxu0 0.0
        %4902 = vmatprep.subr.mxu0 0.0
        %4903 = vmatpush2.msra.mxu0 0.0
        %4904 = vmatprep.subr.mxu0 0.0
        %4905 = vmatpush2.msra.mxu0 0.0
        %4906 = vmatprep.subr.mxu0 0.0
        %4907 = vmatpush2.msra.mxu0 0.0
        %4908 = vmatprep.subr.mxu0 0.0
        %4909 = vmatpush2.msra.mxu0 0.0
        %4910 = vmatprep.subr.mxu0 0.0
        %4911 = vmatpush2.msra.mxu0 0.0
        %4912 = vmatprep.mubr.f32.mxu0 0.0
        %4913 = vmatmul.mubr.f32.gmra.mxu0 %v4766
        %v4914 = vpop.f32.mrf.mxu0
        %v4915 = vadd.f32 %v4757, %v4914
        %v4916 = vpop.f32.mrf.mxu0
        %v4917 = vadd.f32 %v4757, %v4916
        %4918 = vmatprep.mubr.f32.mxu0 0.0
        %4919 = vmatmul.mubr.f32.gmra.mxu0 %v4769
        %v4920 = vpop.f32.mrf.mxu0
        %v4921 = vadd.f32 %v4762, %v4920
        %v4922 = vpop.f32.mrf.mxu0
        %v4923 = vadd.f32 %v4762, %v4922
        %4924 = vdwg.mxu0
        %4925 = vmatprep.subr.mxu0 0.0
        %4926 = vmatpush1.msra.mxu0 0.0
        %4927 = vmatprep.subr.mxu0 0.0
        %4928 = vmatpush1.msra.mxu0 0.0
        %4929 = vmatprep.subr.mxu0 0.0
        %4930 = vmatpush1.msra.mxu0 0.0
        %4931 = vmatprep.subr.mxu0 0.0
        %4932 = vmatpush1.msra.mxu0 0.0
        %4933 = vmatprep.subr.mxu0 0.0
        %4934 = vmatpush1.msra.mxu0 0.0
        %4935 = vmatprep.subr.mxu0 0.0
        %4936 = vmatpush1.msra.mxu0 0.0
        %4937 = vmatprep.subr.mxu0 0.0
        %4938 = vmatpush1.msra.mxu0 0.0
        %4939 = vmatprep.subr.mxu0 0.0
        %4940 = vmatpush1.msra.mxu0 0.0
        %4941 = vmatprep.subr.mxu0 0.0
        %4942 = vmatpush1.msra.mxu0 0.0
        %4943 = vmatprep.subr.mxu0 0.0
        %4944 = vmatpush1.msra.mxu0 0.0
        %4945 = vmatprep.subr.mxu0 0.0
        %4946 = vmatpush1.msra.mxu0 0.0
        %4947 = vmatprep.subr.mxu0 0.0
        %4948 = vmatpush1.msra.mxu0 0.0
        %4949 = vmatprep.subr.mxu0 %v4747
        %4950 = vmatpush1.msra.mxu0 %v4746
        %4951 = vmatprep.subr.mxu0 %v4739
        %4952 = vmatpush1.msra.mxu0 %v4738
        %4953 = vmatprep.subr.mxu0 %v4731
        %4954 = vmatpush1.msra.mxu0 %v4730
        %4955 = vmatprep.subr.mxu0 %v4723
        %4956 = vmatpush1.msra.mxu0 %v4722
        %4957 = vmatprep.subr.mxu0 0.0
        %4958 = vmatpush2.msra.mxu0 0.0
        %4959 = vmatprep.subr.mxu0 0.0
        %4960 = vmatpush2.msra.mxu0 0.0
        %4961 = vmatprep.subr.mxu0 0.0
        %4962 = vmatpush2.msra.mxu0 0.0
        %4963 = vmatprep.subr.mxu0 0.0
        %4964 = vmatpush2.msra.mxu0 0.0
        %4965 = vmatprep.subr.mxu0 0.0
        %4966 = vmatpush2.msra.mxu0 0.0
        %4967 = vmatprep.subr.mxu0 0.0
        %4968 = vmatpush2.msra.mxu0 0.0
        %4969 = vmatprep.subr.mxu0 0.0
        %4970 = vmatpush2.msra.mxu0 0.0
        %4971 = vmatprep.subr.mxu0 0.0
        %4972 = vmatpush2.msra.mxu0 0.0
        %4973 = vmatprep.subr.mxu0 0.0
        %4974 = vmatpush2.msra.mxu0 0.0
        %4975 = vmatprep.subr.mxu0 0.0
        %4976 = vmatpush2.msra.mxu0 0.0
        %4977 = vmatprep.subr.mxu0 0.0
        %4978 = vmatpush2.msra.mxu0 0.0
        %4979 = vmatprep.subr.mxu0 0.0
        %4980 = vmatpush2.msra.mxu0 0.0
        %4981 = vmatprep.subr.mxu0 0.0
        %4982 = vmatpush2.msra.mxu0 0.0
        %4983 = vmatprep.subr.mxu0 0.0
        %4984 = vmatpush2.msra.mxu0 0.0
        %4985 = vmatprep.subr.mxu0 0.0
        %4986 = vmatpush2.msra.mxu0 0.0
        %4987 = vmatprep.subr.mxu0 0.0
        %4988 = vmatpush2.msra.mxu0 0.0
        %4989 = vmatprep.mubr.f32.mxu0 0.0
        %4990 = vmatmul.mubr.f32.gmra.mxu0 %v4766
        %v4991 = vpop.f32.mrf.mxu0
        %v4992 = vadd.f32 %v4757, %v4991
        %v4993 = vpop.f32.mrf.mxu0
        %v4994 = vadd.f32 %v4757, %v4993
        %4995 = vmatprep.mubr.f32.mxu0 0.0
        %4996 = vmatmul.mubr.f32.gmra.mxu0 %v4769
        %v4997 = vpop.f32.mrf.mxu0
        %v4998 = vadd.f32 %v4762, %v4997
        %v4999 = vpop.f32.mrf.mxu0
        %v5000 = vadd.f32 %v4762, %v4999
        %5001 = vdwg.mxu0
        %5002 = vmatprep.subr.mxu0 0.0
        %5003 = vmatpush1.msra.mxu0 0.0
        %5004 = vmatprep.subr.mxu0 0.0
        %5005 = vmatpush1.msra.mxu0 0.0
        %5006 = vmatprep.subr.mxu0 0.0
        %5007 = vmatpush1.msra.mxu0 0.0
        %5008 = vmatprep.subr.mxu0 0.0
        %5009 = vmatpush1.msra.mxu0 0.0
        %5010 = vmatprep.subr.mxu0 0.0
        %5011 = vmatpush1.msra.mxu0 0.0
        %5012 = vmatprep.subr.mxu0 0.0
        %5013 = vmatpush1.msra.mxu0 0.0
        %5014 = vmatprep.subr.mxu0 0.0
        %5015 = vmatpush1.msra.mxu0 0.0
        %5016 = vmatprep.subr.mxu0 0.0
        %5017 = vmatpush1.msra.mxu0 0.0
        %5018 = vmatprep.subr.mxu0 0.0
        %5019 = vmatpush1.msra.mxu0 0.0
        %5020 = vmatprep.subr.mxu0 0.0
        %5021 = vmatpush1.msra.mxu0 0.0
        %5022 = vmatprep.subr.mxu0 0.0
        %5023 = vmatpush1.msra.mxu0 0.0
        %5024 = vmatprep.subr.mxu0 0.0
        %5025 = vmatpush1.msra.mxu0 0.0
        %5026 = vmatprep.subr.mxu0 %v4749
        %5027 = vmatpush1.msra.mxu0 %v4748
        %5028 = vmatprep.subr.mxu0 %v4741
        %5029 = vmatpush1.msra.mxu0 %v4740
        %5030 = vmatprep.subr.mxu0 %v4733
        %5031 = vmatpush1.msra.mxu0 %v4732
        %5032 = vmatprep.subr.mxu0 %v4725
        %5033 = vmatpush1.msra.mxu0 %v4724
        %5034 = vmatprep.subr.mxu0 0.0
        %5035 = vmatpush2.msra.mxu0 0.0
        %5036 = vmatprep.subr.mxu0 0.0
        %5037 = vmatpush2.msra.mxu0 0.0
        %5038 = vmatprep.subr.mxu0 0.0
        %5039 = vmatpush2.msra.mxu0 0.0
        %5040 = vmatprep.subr.mxu0 0.0
        %5041 = vmatpush2.msra.mxu0 0.0
        %5042 = vmatprep.subr.mxu0 0.0
        %5043 = vmatpush2.msra.mxu0 0.0
        %5044 = vmatprep.subr.mxu0 0.0
        %5045 = vmatpush2.msra.mxu0 0.0
        %5046 = vmatprep.subr.mxu0 0.0
        %5047 = vmatpush2.msra.mxu0 0.0
        %5048 = vmatprep.subr.mxu0 0.0
        %5049 = vmatpush2.msra.mxu0 0.0
        %5050 = vmatprep.subr.mxu0 0.0
        %5051 = vmatpush2.msra.mxu0 0.0
        %5052 = vmatprep.subr.mxu0 0.0
        %5053 = vmatpush2.msra.mxu0 0.0
        %5054 = vmatprep.subr.mxu0 0.0
        %5055 = vmatpush2.msra.mxu0 0.0
        %5056 = vmatprep.subr.mxu0 0.0
        %5057 = vmatpush2.msra.mxu0 0.0
        %5058 = vmatprep.subr.mxu0 0.0
        %5059 = vmatpush2.msra.mxu0 0.0
        %5060 = vmatprep.subr.mxu0 0.0
        %5061 = vmatpush2.msra.mxu0 0.0
        %5062 = vmatprep.subr.mxu0 0.0
        %5063 = vmatpush2.msra.mxu0 0.0
        %5064 = vmatprep.subr.mxu0 0.0
        %5065 = vmatpush2.msra.mxu0 0.0
        %5066 = vmatprep.mubr.f32.mxu0 0.0
        %5067 = vmatmul.mubr.f32.gmra.mxu0 %v4766
        %v5068 = vpop.f32.mrf.mxu0
        %v5069 = vadd.f32 %v4757, %v5068
        %v5070 = vpop.f32.mrf.mxu0
        %v5071 = vadd.f32 %v4757, %v5070
        %5072 = vmatprep.mubr.f32.mxu0 0.0
        %5073 = vmatmul.mubr.f32.gmra.mxu0 %v4769
        %v5074 = vpop.f32.mrf.mxu0
        %v5075 = vadd.f32 %v4762, %v5074
        %v5076 = vpop.f32.mrf.mxu0
        %v5077 = vadd.f32 %v4762, %v5076
        %5078 = vdwg.mxu0
        %5079 = vst [vmem:[%s466] sm:$0xff] %v4838
        %5080 = vst [vmem:[%s466 + $0x8] sm:$0xff] %v4840
        %5081 = vst [vmem:[%s466 + $0x10] sm:$0xff] %v4915
        %5082 = vst [vmem:[%s466 + $0x18] sm:$0xff] %v4917
        %5083 = vst [vmem:[%s466 + $0x20] sm:$0xff] %v4992
        %5084 = vst [vmem:[%s466 + $0x28] sm:$0xff] %v4994
        %5085 = vst [vmem:[%s466 + $0x30] sm:$0xff] %v5069
        %5086 = vst [vmem:[%s466 + $0x38] sm:$0xff] %v5071
        %v5095 = vcombine.low %v4844, %v4846
        %v5096 = vcombine.low %v4921, %v4923
        %v5097 = vcombine.low %v4998, %v5000
        %v5098 = vcombine.low %v5075, %v5077
        %v5100 = vunpack.c.l.s4 1966171168
        %v5101 = vunpack.c.0.s8 %v5100
        %v5102 = vlaneseq
        %v5103 = vshrl.u32 %v5102, 7
        %v5104 = vsub.s32 %v5101, %v5103
        %v5105 = vrot.slane %v5095, %v5104
        %v5107 = vunpack.c.l.s4 1966171168
        %v5108 = vunpack.c.0.s8 %v5107
        %v5109 = vlaneseq
        %v5110 = vshrl.u32 %v5109, 7
        %v5111 = vsub.s32 %v5108, %v5110
        %v5112 = vrot.slane %v5096, %v5111
        %v5114 = vunpack.c.l.s4 1966171168
        %v5115 = vunpack.c.0.s8 %v5114
        %v5116 = vlaneseq
        %v5117 = vshrl.u32 %v5116, 7
        %v5118 = vsub.s32 %v5115, %v5117
        %v5119 = vrot.slane %v5097, %v5118
        %v5121 = vunpack.c.l.s4 1966171168
        %v5122 = vunpack.c.0.s8 %v5121
        %v5123 = vlaneseq
        %v5124 = vshrl.u32 %v5123, 7
        %v5125 = vsub.s32 %v5122, %v5124
        %v5126 = vrot.slane %v5098, %v5125
        %v5127 = vcombine.low %v5105, %v5112
        %v5128 = vcombine.low %v5119, %v5126
        %v5130 = vunpack.c.l.s4 1966171168
        %v5131 = vunpack.c.0.s8 %v5130
        %v5132 = vlaneseq
        %v5133 = vshrl.u32 %v5132, 7
        %v5134 = vsub.s32 %v5131, %v5133
        %v5135 = vrot.slane %v5127, %v5134
        %v5137 = vunpack.c.l.s4 1966171168
        %v5138 = vunpack.c.0.s8 %v5137
        %v5139 = vlaneseq
        %v5140 = vshrl.u32 %v5139, 7
        %v5141 = vsub.s32 %v5138, %v5140
        %v5142 = vrot.slane %v5128, %v5141
        %v5143 = vcombine.low %v5135, %v5142
        %5145 = vst [vmem:[%s473] sm:$0xff] %v5143
        %s5146 = sand.u32 %s290, 1
        %s5147 = scalar_lea.sflag [#allocation4], %s5146
        %s5148 = sand.u32 %s290, 1
        %s5149 = smul.addr %s5148, 64
        %s5150 = scalar_lea.vmem [#allocation5], %s5149
        %s5151 = sand.u32 %s316, 1
        %s5152 = scalar_lea.sflag [#allocation7], %s5151
        %s5153 = sand.u32 %s316, 1
        %s5154 = smul.addr %s5153, 8
        %s5155 = scalar_lea.vmem [#allocation6], %s5154
        // Predicated region
        $region69: #{tpu_custom_call.1} parent=63 // pred_check
          %p5156 = pneg %p300
        $region70: #{tpu_custom_call.1} parent=63 // pred_check_branch
          %5158 = sbr.rel (%p5156) target = $region72
        $region71: #{tpu_custom_call.1} parent=63 // pred_region
          %s5160 = ssub.s32 1024, 1024
          %5161 = vsyncadd %s5147, %s5160
          %s5162 = smul.addr %s31, 8
          %s5163 = smul.addr %s5162, 128
          %s5164 = scalar_lea.hbm %s11, %s5163
          %s5166 = sshll.u32 %s5150, 4
          %s5167 = int_to_ptr.vmem [resolvable:$true] %s5166
          %5169 = dma.vmem_to_hbm [thread:$0]  %s5167, 1024, %s5164, %s5147
        $region72: #{tpu_custom_call.1} parent=63 // pred_fallthru
          _
        // Predicated region
        $region73: #{tpu_custom_call.1} parent=63 // pred_check
          %p5170 = pneg %p326
        $region74: #{tpu_custom_call.1} parent=63 // pred_check_branch
          %5172 = sbr.rel (%p5170) target = $region76
        $region75: #{tpu_custom_call.1} parent=63 // pred_region
          %s5174 = ssub.s32 128, 128
          %5175 = vsyncadd %s5152, %s5174
          %s5176 = smul.addr %s31, 8
          %s5177 = smul.addr %s5176, 16
          %s5178 = scalar_lea.hbm %s12, %s5177
          %s5180 = sshll.u32 %s5155, 4
          %s5181 = int_to_ptr.vmem [resolvable:$true] %s5180
          %5183 = dma.vmem_to_hbm [thread:$0]  %s5181, 128, %s5178, %s5152
        $region76: #{tpu_custom_call.1} parent=63 // pred_fallthru
          _
      $region64: #{tpu_custom_call.1} parent=5 // pred_fallthru
        _
      %p5184 = scmp.le.s32.totalorder 2, %s26
      // Predicated region
      $region77: #{tpu_custom_call.1} parent=5 // pred_check
        %p5185 = pneg %p5184
      $region78: #{tpu_custom_call.1} parent=5 // pred_check_branch
        %5187 = sbr.rel (%p5185) target = $region80
      $region79: #{tpu_custom_call.1} parent=5 // pred_region
        %s5188 = ssub.s32 %s26, 2
        // Predicated region
        $region81: #{tpu_custom_call.1} parent=79 // pred_check
          %p5189 = pneg %p306
        $region82: #{tpu_custom_call.1} parent=79 // pred_check_branch
          %5191 = sbr.rel (%p5189) target = $region84
        $region83: #{tpu_custom_call.1} parent=79 // pred_region
          %s5192 = sand.u32 %s291, 1
          %s5193 = scalar_lea.sflag [#allocation4], %s5192
          %s5194 = sand.u32 %s291, 1
          %s5195 = smul.addr %s5194, 64
          %s5196 = scalar_lea.vmem [#allocation5], %s5195
          %5197 = dma.done %s5193, 1024
        $region84: #{tpu_custom_call.1} parent=79 // pred_fallthru
          _
        // Predicated region
        $region85: #{tpu_custom_call.1} parent=79 // pred_check
          %p5198 = pneg %p332
        $region86: #{tpu_custom_call.1} parent=79 // pred_check_branch
          %5200 = sbr.rel (%p5198) target = $region88
        $region87: #{tpu_custom_call.1} parent=79 // pred_region
          %s5201 = sand.u32 %s317, 1
          %s5202 = scalar_lea.sflag [#allocation7], %s5201
          %s5203 = sand.u32 %s317, 1
          %s5204 = smul.addr %s5203, 8
          %s5205 = scalar_lea.vmem [#allocation6], %s5204
          %5206 = dma.done %s5202, 128
        $region88: #{tpu_custom_call.1} parent=79 // pred_fallthru
          _
      $region80: #{tpu_custom_call.1} parent=5 // pred_fallthru
        _
    $region6: #{tpu_custom_call.1} parent=1 // loop_footer
      %s30 = sadd.s32 1, %s26
    $region7: #{tpu_custom_call.1} parent=1 // loop_footer_branch
      %25 = sbr.rel target = $region3
    $region8: #{tpu_custom_call.1} parent=1 // loop_exit
      _
    %5207 = vsyncpa [#allocation3], 1
    %s5208 = scalar_lea.sflag [#allocation3], 1
    %5209 = vsyncpa %s5208, 1
    %5210 = vsyncpa [#allocation4], 1
    %s5211 = scalar_lea.sflag [#allocation4], 1
    %5212 = vsyncpa %s5211, 1
    %5213 = vsyncpa [#allocation7], 1
    %s5214 = scalar_lea.sflag [#allocation7], 1
    %5215 = vsyncpa %s5214, 1

</llo_original>
